<compile_context>
chip_gen: v7x
topology: tpu7x:2x2x1
jax: 0.10.0
libtpu: 0.0.40
codegen_flags: <defaults>
</compile_context>

<pallas_src>
import functools

import jax
import jax.numpy as jnp
from jax.experimental import pallas as pl
from jax.experimental.pallas import tpu as pltpu

BN_EPS = 1e-5


# ----------------------------- in-kernel helpers ---------------------------

def _interior_mask(q_len, wp, h, w):
    # [q_len,1] bool: True on rows that are interior pixels of the (h+2)x(w+2)
    # zero-padded grid flattened row-major with row pitch wp.  Built from an
    # iota + a few static compares (no div/mod, no mask input DMA).
    q = jax.lax.broadcasted_iota(jnp.int32, (q_len, 1), 0)
    m = q < 0
    for r in range(1, h + 1):
        lo = r * wp + 1
        m = m | ((q >= lo) & (q < lo + w))
    return m


def _mm(x, w_ref, b_ref):
    # bf16 MXU matmul with f32 accumulation + f32 bias.
    return jnp.dot(x.astype(jnp.bfloat16), w_ref[...],
                   preferred_element_type=jnp.float32) + b_ref[...]


def _dw3x3(slab, wdw_ref, bdw_ref, wp, n_rows):
    # Depthwise 3x3 on a flattened zero-padded slab [Q, C] via 9 statically
    # shifted slices; returns relu6(acc + bias) over the first n_rows rows.
    c = slab.shape[-1]
    acc = jnp.zeros((n_rows, c), jnp.float32)
    for dy in range(3):
        for dx in range(3):
            off = dy * wp + dx
            acc = acc + slab[off:off + n_rows, :] * wdw_ref[dy * 3 + dx]
    return jnp.clip(acc + bdw_ref[...], 0.0, 6.0)


# ----------------------------- fused kernel --------------------------------

def _mbv2_fused_kernel(patch_ref,
                       w1_ref, b1_ref,
                       wdw2_ref, bdw2_ref, wpw2_ref, bpw2_ref,
                       we3_ref, be3_ref, wdw3_ref, bdw3_ref, wp3_ref, bp3_ref,
                       we4_ref, be4_ref, wdw4_ref, bdw4_ref, wp4w_ref, bp4_ref,
                       o_ref, *, h2, w2, h3, w3):
    f32 = jnp.float32
    wp2 = w2 + 2
    q1 = patch_ref.shape[1]              # (h2+2)*wp2 + extra
    s2 = h2 * wp2                        # dense stride-1 dw rows for l2

    # --- l1: ConvBNReLU 3x3/s2 (im2col'd wrapper-side) -> padded slab for l2 -
    slab1 = jnp.clip(_mm(patch_ref[0], w1_ref, b1_ref), 0.0, 6.0)
    slab1 = jnp.where(_interior_mask(q1, wp2, h2, w2), slab1, 0.0)   # [q1,32]

    # --- l2 (t=1): dw3x3/s1 + project 1x1 -----------------------------------
    dw2 = _dw3x3(slab1, wdw2_ref, bdw2_ref, wp2, s2)                 # [s2,32]
    y2 = _mm(dw2, wpw2_ref, bpw2_ref)                                # [s2,16]

    # --- l3 (t=6): expand + dw3x3/s2 (in-kernel decimation) + project -------
    c1 = y2.shape[-1]
    pad_lo = wp2 + 1
    pad_hi = q1 - pad_lo - s2
    slab2 = jnp.concatenate(
        [jnp.zeros((pad_lo, c1), f32), y2, jnp.zeros((pad_hi, c1), f32)],
        axis=0)                                                      # [q1,16]
    e3 = jnp.clip(_mm(slab2, we3_ref, be3_ref), 0.0, 6.0)
    e3 = jnp.where(_interior_mask(q1, wp2, h2, w2), e3, 0.0)         # [q1,96]
    s3d = (2 * (h3 - 1) + 1) * wp2                                   # dense rows
    dw3 = _dw3x3(e3, wdw3_ref, bdw3_ref, wp2, s3d)                   # [s3d,96]
    rows3 = [2 * oh * wp2 + 2 * ow for oh in range(h3) for ow in range(w3)]
    dw3 = jnp.concatenate([dw3[s:s + 1, :] for s in rows3], axis=0)  # [16,96]
    y3 = _mm(dw3, wp3_ref, bp3_ref)                                  # [16,24]

    # --- l4 (t=6): expand + dw3x3/s1 + project + residual -------------------
    wp4 = w3 + 2
    s4 = h3 * wp4
    q4 = (h3 + 2) * wp4 + max(0, s4 + 2 * wp4 + 2 - (h3 + 2) * wp4)
    c2 = y3.shape[-1]
    pieces = [jnp.zeros((wp4 + 1, c2), f32)]
    for r in range(h3):
        pieces.append(y3[r * w3:(r + 1) * w3, :])
        if r < h3 - 1:
            pieces.append(jnp.zeros((wp4 - w3, c2), f32))
    tail = q4 - (wp4 + 1) - h3 * w3 - (h3 - 1) * (wp4 - w3)
    pieces.append(jnp.zeros((tail, c2), f32))
    slab3 = jnp.concatenate(pieces, axis=0)                          # [q4,24]
    e4 = jnp.clip(_mm(slab3, we4_ref, be4_ref), 0.0, 6.0)
    e4 = jnp.where(_interior_mask(q4, wp4, h3, w3), e4, 0.0)         # [q4,144]
    dw4 = _dw3x3(e4, wdw4_ref, bdw4_ref, wp4, s4)                    # [s4,144]
    dw4 = jnp.concatenate(
        [dw4[oh * wp4:oh * wp4 + w3, :] for oh in range(h3)], axis=0)  # [16,144]
    o_ref[0] = _mm(dw4, wp4w_ref, bp4_ref) + y3                      # residual


# ----------------------------- wrapper --------------------------------------

def _full_spec(shape):
    zeros = (0,) * len(shape)
    return pl.BlockSpec(tuple(shape), lambda i, _z=zeros: _z)


def _l1_patches(x_nhwc, h2, w2, wp2, q1):
    # im2col for the 3x3/s2 first conv, laid out directly on the zero-padded
    # l2 slab grid (ring/extra rows get garbage that the kernel masks to 0).
    n, _, _, cin = x_nhwc.shape
    hp2 = h2 + 2
    xp = jnp.pad(x_nhwc, ((0, 0), (3, 3), (3, 3), (0, 0)))
    taps = [xp[:, dy:dy + 2 * hp2 - 1:2, dx:dx + 2 * wp2 - 1:2, :]
            for dy in range(3) for dx in range(3)]           # each [n,hp2,wp2,cin]
    patches = jnp.stack(taps, axis=3).reshape(n, hp2 * wp2, 9 * cin)
    return jnp.pad(patches, ((0, 0), (0, q1 - hp2 * wp2), (0, 0)))


@jax.jit
def mobilenetv2_client_forward(x_nchw, p):
    x = jnp.transpose(x_nchw, (0, 2, 3, 1)).astype(jnp.float32)  # NCHW -> NHWC
    n, h, w, _ = x.shape
    h2, w2 = (h - 1) // 2 + 1, (w - 1) // 2 + 1      # after l1 (stride 2)
    h3, w3 = (h2 - 1) // 2 + 1, (w2 - 1) // 2 + 1    # after l3 (stride 2)
    wp2 = w2 + 2
    q1 = (h2 + 2) * wp2 + max(0, h2 * wp2 + 2 * wp2 + 2 - (h2 + 2) * wp2)
    # static geometry sanity (all 9 shifted tap slices must stay in range)
    assert q1 >= h2 * wp2 + 2 * wp2 + 2
    assert q1 >= (2 * (h3 - 1) + 1) * wp2 + 2 * wp2 + 2

    patches = _l1_patches(x, h2, w2, wp2, q1)

    weights = (p['l1_w'], p['l1_b'],
               p['l2_dw_w'], p['l2_dw_b'], p['l2_pw_w'], p['l2_pw_b'],
               p['l3_e_w'], p['l3_e_b'], p['l3_dw_w'], p['l3_dw_b'],
               p['l3_p_w'], p['l3_p_b'],
               p['l4_e_w'], p['l4_e_b'], p['l4_dw_w'], p['l4_dw_b'],
               p['l4_p_w'], p['l4_p_b'])
    cout = p['l4_p_w'].shape[1]

    y = pl.pallas_call(
        functools.partial(_mbv2_fused_kernel, h2=h2, w2=w2, h3=h3, w3=w3),
        grid=(n,),
        in_specs=[pl.BlockSpec((1, q1, patches.shape[-1]), lambda i: (i, 0, 0))]
                 + [_full_spec(wt.shape) for wt in weights],
        out_specs=pl.BlockSpec((1, h3 * w3, cout), lambda i: (i, 0, 0)),
        out_shape=jax.ShapeDtypeStruct((n, h3 * w3, cout), jnp.float32),
        compiler_params=pltpu.CompilerParams(
            dimension_semantics=("parallel",)),   # v7x: one image per TC
    )(patches, *weights)

    y = y.reshape(n, h3, w3, cout)
    return jnp.transpose(y, (0, 3, 1, 2))         # NHWC -> NCHW


# ----------------------------- parameters -----------------------------------

def _make_divisible(ch, divisor=8, min_ch=None):
    if min_ch is None:
        min_ch = divisor
    new_ch = max(min_ch, int(ch + divisor / 2) // divisor * divisor)
    if new_ch < 0.9 * ch:
        new_ch += divisor
    return new_ch


def _bn_fold(key, c):
    k1, k2, k3, k4 = jax.random.split(key, 4)
    gamma = 1.0 + 0.1 * jax.random.normal(k1, (c,), jnp.float32)
    beta = 0.1 * jax.random.normal(k2, (c,), jnp.float32)
    mean = 0.1 * jax.random.normal(k3, (c,), jnp.float32)
    var = 1.0 + 0.1 * jnp.abs(jax.random.normal(k4, (c,), jnp.float32))
    scale = gamma / jnp.sqrt(var + BN_EPS)
    bias = beta - mean * scale
    return scale, bias


def init_params(key):
    alpha, rn = 1.0, 8
    c_in = 3
    c0 = _make_divisible(32 * alpha, rn)   # 32
    c1 = _make_divisible(16 * alpha, rn)   # 16
    c2 = _make_divisible(24 * alpha, rn)   # 24
    h3, h4 = c1 * 6, c2 * 6                # 96, 144

    keys = iter(jax.random.split(key, 32))
    p = {}

    def pw(k, cin, cout, scale):           # 1x1 conv, BN scale folded, bf16
        w = 0.2 * jax.random.normal(k, (cin, cout), jnp.float32)
        return (w * scale[None, :]).astype(jnp.bfloat16)

    def dw(k, c, scale):                   # depthwise 3x3, scale folded, f32
        w = 0.2 * jax.random.normal(k, (3, 3, c), jnp.float32)
        return (w * scale[None, None, :]).reshape(9, 1, c)

    # l1: ConvBNReLU 3->32, k3, s2
    s, b = _bn_fold(next(keys), c0)
    w1 = 0.2 * jax.random.normal(next(keys), (3, 3, c_in, c0), jnp.float32)
    p['l1_w'] = (w1 * s).reshape(9 * c_in, c0).astype(jnp.bfloat16)
    p['l1_b'] = b.reshape(1, c0)
    # l2: InvertedResidual 32->16, s1, t=1
    s, b = _bn_fold(next(keys), c0)
    p['l2_dw_w'], p['l2_dw_b'] = dw(next(keys), c0, s), b.reshape(1, c0)
    s, b = _bn_fold(next(keys), c1)
    p['l2_pw_w'], p['l2_pw_b'] = pw(next(keys), c0, c1, s), b.reshape(1, c1)
    # l3: InvertedResidual 16->24, s2, t=6
    s, b = _bn_fold(next(keys), h3)
    p['l3_e_w'], p['l3_e_b'] = pw(next(keys), c1, h3, s), b.reshape(1, h3)
    s, b = _bn_fold(next(keys), h3)
    p['l3_dw_w'], p['l3_dw_b'] = dw(next(keys), h3, s), b.reshape(1, h3)
    s, b = _bn_fold(next(keys), c2)
    p['l3_p_w'], p['l3_p_b'] = pw(next(keys), h3, c2, s), b.reshape(1, c2)
    # l4: InvertedResidual 24->24, s1, t=6 (shortcut)
    s, b = _bn_fold(next(keys), h4)
    p['l4_e_w'], p['l4_e_b'] = pw(next(keys), c2, h4, s), b.reshape(1, h4)
    s, b = _bn_fold(next(keys), h4)
    p['l4_dw_w'], p['l4_dw_b'] = dw(next(keys), h4, s), b.reshape(1, h4)
    s, b = _bn_fold(next(keys), c2)
    p['l4_p_w'], p['l4_p_b'] = pw(next(keys), h4, c2, s), b.reshape(1, c2)
    return p


if __name__ == "__main__":
    key = jax.random.PRNGKey(0)
    k_x, k_p = jax.random.split(key)
    x = jax.random.normal(k_x, (2, 3, 16, 16), jnp.float32)  # NCHW, like PyTorch
    params = init_params(k_p)
    out = mobilenetv2_client_forward(x, params)
    out = jax.block_until_ready(out)
    assert out.shape == (2, 24, 4, 4), out.shape
    assert bool(jnp.all(jnp.isfinite(out)))
    print("KERNEL_OK")
</pallas_src>

<mosaic_0001>
module attributes {stable_mosaic.version = 11 : i64} {
  func.func @_mbv2_fused_kernel(%arg0: i32, %arg1: memref<1x102x27xf32, #tpu.memory_space<vmem>>, %arg2: memref<27x32xbf16, #tpu.memory_space<vmem>>, %arg3: memref<1x32xf32, #tpu.memory_space<vmem>>, %arg4: memref<9x1x32xf32, #tpu.memory_space<vmem>>, %arg5: memref<1x32xf32, #tpu.memory_space<vmem>>, %arg6: memref<32x16xbf16, #tpu.memory_space<vmem>>, %arg7: memref<1x16xf32, #tpu.memory_space<vmem>>, %arg8: memref<16x96xbf16, #tpu.memory_space<vmem>>, %arg9: memref<1x96xf32, #tpu.memory_space<vmem>>, %arg10: memref<9x1x96xf32, #tpu.memory_space<vmem>>, %arg11: memref<1x96xf32, #tpu.memory_space<vmem>>, %arg12: memref<96x24xbf16, #tpu.memory_space<vmem>>, %arg13: memref<1x24xf32, #tpu.memory_space<vmem>>, %arg14: memref<24x144xbf16, #tpu.memory_space<vmem>>, %arg15: memref<1x144xf32, #tpu.memory_space<vmem>>, %arg16: memref<9x1x144xf32, #tpu.memory_space<vmem>>, %arg17: memref<1x144xf32, #tpu.memory_space<vmem>>, %arg18: memref<144x24xbf16, #tpu.memory_space<vmem>>, %arg19: memref<1x24xf32, #tpu.memory_space<vmem>>, %arg20: memref<1x16x24xf32, #tpu.memory_space<vmem>>) attributes {dimension_semantics = [#tpu.dimension_semantics<parallel>], iteration_bounds = array<i64: 2>, scalar_prefetch = 0 : i64, scratch_operands = 0 : i64, tpu.core_type = #tpu.core_type<tc>, window_params = [{transform_indices = @transform_0, window_bounds = array<i64: 1, 102, 27>}, {pipeline_mode = #tpu.pipeline_mode<synchronous>, transform_indices = @transform_1, window_bounds = array<i64: 27, 32>}, {pipeline_mode = #tpu.pipeline_mode<synchronous>, transform_indices = @transform_2, window_bounds = array<i64: 1, 32>}, {pipeline_mode = #tpu.pipeline_mode<synchronous>, transform_indices = @transform_3, window_bounds = array<i64: 9, 1, 32>}, {pipeline_mode = #tpu.pipeline_mode<synchronous>, transform_indices = @transform_4, window_bounds = array<i64: 1, 32>}, {pipeline_mode = #tpu.pipeline_mode<synchronous>, transform_indices = @transform_5, window_bounds = array<i64: 32, 16>}, {pipeline_mode = #tpu.pipeline_mode<synchronous>, transform_indices = @transform_6, window_bounds = array<i64: 1, 16>}, {pipeline_mode = #tpu.pipeline_mode<synchronous>, transform_indices = @transform_7, window_bounds = array<i64: 16, 96>}, {pipeline_mode = #tpu.pipeline_mode<synchronous>, transform_indices = @transform_8, window_bounds = array<i64: 1, 96>}, {pipeline_mode = #tpu.pipeline_mode<synchronous>, transform_indices = @transform_9, window_bounds = array<i64: 9, 1, 96>}, {pipeline_mode = #tpu.pipeline_mode<synchronous>, transform_indices = @transform_10, window_bounds = array<i64: 1, 96>}, {pipeline_mode = #tpu.pipeline_mode<synchronous>, transform_indices = @transform_11, window_bounds = array<i64: 96, 24>}, {pipeline_mode = #tpu.pipeline_mode<synchronous>, transform_indices = @transform_12, window_bounds = array<i64: 1, 24>}, {pipeline_mode = #tpu.pipeline_mode<synchronous>, transform_indices = @transform_13, window_bounds = array<i64: 24, 144>}, {pipeline_mode = #tpu.pipeline_mode<synchronous>, transform_indices = @transform_14, window_bounds = array<i64: 1, 144>}, {pipeline_mode = #tpu.pipeline_mode<synchronous>, transform_indices = @transform_15, window_bounds = array<i64: 9, 1, 144>}, {pipeline_mode = #tpu.pipeline_mode<synchronous>, transform_indices = @transform_16, window_bounds = array<i64: 1, 144>}, {pipeline_mode = #tpu.pipeline_mode<synchronous>, transform_indices = @transform_17, window_bounds = array<i64: 144, 24>}, {pipeline_mode = #tpu.pipeline_mode<synchronous>, transform_indices = @transform_18, window_bounds = array<i64: 1, 24>}, {transform_indices = @transform_19, window_bounds = array<i64: 1, 16, 24>}]} {
    %c0 = arith.constant 0 : index
    %c0_0 = arith.constant 0 : index
    %c0_1 = arith.constant 0 : index
    %0 = vector.load %arg1[%c0, %c0_0, %c0_1] : memref<1x102x27xf32, #tpu.memory_space<vmem>>, vector<1x102x27xf32>
    %1 = vector.shape_cast %0 : vector<1x102x27xf32> to vector<102x27xf32>
    %2 = arith.truncf %1 : vector<102x27xf32> to vector<102x27xbf16>
    %c0_2 = arith.constant 0 : index
    %c0_3 = arith.constant 0 : index
    %3 = vector.load %arg2[%c0_2, %c0_3] : memref<27x32xbf16, #tpu.memory_space<vmem>>, vector<27x32xbf16>
    %cst = arith.constant dense<0.000000e+00> : vector<102x32xf32>
    %4 = tpu.matmul %2, %3, %cst {dimension_numbers = #tpu.dot_dimension_numbers<[1], [0], [0], [1], [0, 0, 1, 1], [], []>} : vector<102x27xbf16>, vector<27x32xbf16>, vector<102x32xf32> -> vector<102x32xf32>
    %c0_4 = arith.constant 0 : index
    %c0_5 = arith.constant 0 : index
    %5 = vector.load %arg3[%c0_4, %c0_5] : memref<1x32xf32, #tpu.memory_space<vmem>>, vector<1x32xf32>
    %6 = vector.broadcast %5 : vector<1x32xf32> to vector<102x32xf32>
    %7 = arith.addf %4, %6 : vector<102x32xf32>
    %cst_6 = arith.constant 0.000000e+00 : f32
    %cst_7 = arith.constant 6.000000e+00 : f32
    %8 = vector.broadcast %cst_6 : f32 to vector<102x32xf32>
    %9 = arith.maximumf %8, %7 : vector<102x32xf32>
    %10 = vector.broadcast %cst_7 : f32 to vector<102x32xf32>
    %11 = arith.minimumf %10, %9 : vector<102x32xf32>
    %12 = tpu.iota {dimensions = array<i32: 0>} : vector<102x1xi32>
    %c0_i32 = arith.constant 0 : i32
    %13 = vector.broadcast %c0_i32 : i32 to vector<102x1xi32>
    %14 = arith.cmpi slt, %12, %13 : vector<102x1xi32>
    %c11_i32 = arith.constant 11 : i32
    %15 = vector.broadcast %c11_i32 : i32 to vector<102x1xi32>
    %16 = arith.cmpi sge, %12, %15 : vector<102x1xi32>
    %c19_i32 = arith.constant 19 : i32
    %17 = vector.broadcast %c19_i32 : i32 to vector<102x1xi32>
    %18 = arith.cmpi slt, %12, %17 : vector<102x1xi32>
    %19 = arith.andi %16, %18 : vector<102x1xi1>
    %20 = arith.ori %14, %19 : vector<102x1xi1>
    %c21_i32 = arith.constant 21 : i32
    %21 = vector.broadcast %c21_i32 : i32 to vector<102x1xi32>
    %22 = arith.cmpi sge, %12, %21 : vector<102x1xi32>
    %c29_i32 = arith.constant 29 : i32
    %23 = vector.broadcast %c29_i32 : i32 to vector<102x1xi32>
    %24 = arith.cmpi slt, %12, %23 : vector<102x1xi32>
    %25 = arith.andi %22, %24 : vector<102x1xi1>
    %26 = arith.ori %20, %25 : vector<102x1xi1>
    %c31_i32 = arith.constant 31 : i32
    %27 = vector.broadcast %c31_i32 : i32 to vector<102x1xi32>
    %28 = arith.cmpi sge, %12, %27 : vector<102x1xi32>
    %c39_i32 = arith.constant 39 : i32
    %29 = vector.broadcast %c39_i32 : i32 to vector<102x1xi32>
    %30 = arith.cmpi slt, %12, %29 : vector<102x1xi32>
    %31 = arith.andi %28, %30 : vector<102x1xi1>
    %32 = arith.ori %26, %31 : vector<102x1xi1>
    %c41_i32 = arith.constant 41 : i32
    %33 = vector.broadcast %c41_i32 : i32 to vector<102x1xi32>
    %34 = arith.cmpi sge, %12, %33 : vector<102x1xi32>
    %c49_i32 = arith.constant 49 : i32
    %35 = vector.broadcast %c49_i32 : i32 to vector<102x1xi32>
    %36 = arith.cmpi slt, %12, %35 : vector<102x1xi32>
    %37 = arith.andi %34, %36 : vector<102x1xi1>
    %38 = arith.ori %32, %37 : vector<102x1xi1>
    %c51_i32 = arith.constant 51 : i32
    %39 = vector.broadcast %c51_i32 : i32 to vector<102x1xi32>
    %40 = arith.cmpi sge, %12, %39 : vector<102x1xi32>
    %c59_i32 = arith.constant 59 : i32
    %41 = vector.broadcast %c59_i32 : i32 to vector<102x1xi32>
    %42 = arith.cmpi slt, %12, %41 : vector<102x1xi32>
    %43 = arith.andi %40, %42 : vector<102x1xi1>
    %44 = arith.ori %38, %43 : vector<102x1xi1>
    %c61_i32 = arith.constant 61 : i32
    %45 = vector.broadcast %c61_i32 : i32 to vector<102x1xi32>
    %46 = arith.cmpi sge, %12, %45 : vector<102x1xi32>
    %c69_i32 = arith.constant 69 : i32
    %47 = vector.broadcast %c69_i32 : i32 to vector<102x1xi32>
    %48 = arith.cmpi slt, %12, %47 : vector<102x1xi32>
    %49 = arith.andi %46, %48 : vector<102x1xi1>
    %50 = arith.ori %44, %49 : vector<102x1xi1>
    %c71_i32 = arith.constant 71 : i32
    %51 = vector.broadcast %c71_i32 : i32 to vector<102x1xi32>
    %52 = arith.cmpi sge, %12, %51 : vector<102x1xi32>
    %c79_i32 = arith.constant 79 : i32
    %53 = vector.broadcast %c79_i32 : i32 to vector<102x1xi32>
    %54 = arith.cmpi slt, %12, %53 : vector<102x1xi32>
    %55 = arith.andi %52, %54 : vector<102x1xi1>
    %56 = arith.ori %50, %55 : vector<102x1xi1>
    %c81_i32 = arith.constant 81 : i32
    %57 = vector.broadcast %c81_i32 : i32 to vector<102x1xi32>
    %58 = arith.cmpi sge, %12, %57 : vector<102x1xi32>
    %c89_i32 = arith.constant 89 : i32
    %59 = vector.broadcast %c89_i32 : i32 to vector<102x1xi32>
    %60 = arith.cmpi slt, %12, %59 : vector<102x1xi32>
    %61 = arith.andi %58, %60 : vector<102x1xi1>
    %62 = arith.ori %56, %61 : vector<102x1xi1>
    %cst_8 = arith.constant 0.000000e+00 : f32
    %63 = vector.shape_cast %62 : vector<102x1xi1> to vector<102x1xi1>
    %64 = vector.broadcast %63 : vector<102x1xi1> to vector<102x32xi1>
    %65 = vector.broadcast %cst_8 : f32 to vector<102x32xf32>
    %66 = arith.select %64, %11, %65 : vector<102x32xi1>, vector<102x32xf32>
    %cst_9 = arith.constant 0.000000e+00 : f32
    %67 = vector.broadcast %cst_9 : f32 to vector<80x32xf32>
    %68 = vector.extract_strided_slice %66 {offsets = [0, 0], sizes = [80, 32], strides = [1, 1]} : vector<102x32xf32> to vector<80x32xf32>
    %c0_10 = arith.constant 0 : index
    %c0_11 = arith.constant 0 : index
    %c0_12 = arith.constant 0 : index
    %69 = vector.load %arg4[%c0_10, %c0_11, %c0_12] : memref<9x1x32xf32, #tpu.memory_space<vmem>>, vector<1x1x32xf32>
    %70 = vector.shape_cast %69 : vector<1x1x32xf32> to vector<1x32xf32>
    %71 = vector.broadcast %70 : vector<1x32xf32> to vector<80x32xf32>
    %72 = arith.mulf %68, %71 : vector<80x32xf32>
    %73 = arith.addf %67, %72 : vector<80x32xf32>
    %74 = vector.extract_strided_slice %66 {offsets = [1, 0], sizes = [80, 32], strides = [1, 1]} : vector<102x32xf32> to vector<80x32xf32>
    %c1 = arith.constant 1 : index
    %c0_13 = arith.constant 0 : index
    %c0_14 = arith.constant 0 : index
    %75 = vector.load %arg4[%c1, %c0_13, %c0_14] : memref<9x1x32xf32, #tpu.memory_space<vmem>>, vector<1x1x32xf32>
    %76 = vector.shape_cast %75 : vector<1x1x32xf32> to vector<1x32xf32>
    %77 = vector.broadcast %76 : vector<1x32xf32> to vector<80x32xf32>
    %78 = arith.mulf %74, %77 : vector<80x32xf32>
    %79 = arith.addf %73, %78 : vector<80x32xf32>
    %80 = vector.extract_strided_slice %66 {offsets = [2, 0], sizes = [80, 32], strides = [1, 1]} : vector<102x32xf32> to vector<80x32xf32>
    %c2 = arith.constant 2 : index
    %c0_15 = arith.constant 0 : index
    %c0_16 = arith.constant 0 : index
    %81 = vector.load %arg4[%c2, %c0_15, %c0_16] : memref<9x1x32xf32, #tpu.memory_space<vmem>>, vector<1x1x32xf32>
    %82 = vector.shape_cast %81 : vector<1x1x32xf32> to vector<1x32xf32>
    %83 = vector.broadcast %82 : vector<1x32xf32> to vector<80x32xf32>
    %84 = arith.mulf %80, %83 : vector<80x32xf32>
    %85 = arith.addf %79, %84 : vector<80x32xf32>
    %86 = vector.extract_strided_slice %66 {offsets = [10, 0], sizes = [80, 32], strides = [1, 1]} : vector<102x32xf32> to vector<80x32xf32>
    %c3 = arith.constant 3 : index
    %c0_17 = arith.constant 0 : index
    %c0_18 = arith.constant 0 : index
    %87 = vector.load %arg4[%c3, %c0_17, %c0_18] : memref<9x1x32xf32, #tpu.memory_space<vmem>>, vector<1x1x32xf32>
    %88 = vector.shape_cast %87 : vector<1x1x32xf32> to vector<1x32xf32>
    %89 = vector.broadcast %88 : vector<1x32xf32> to vector<80x32xf32>
    %90 = arith.mulf %86, %89 : vector<80x32xf32>
    %91 = arith.addf %85, %90 : vector<80x32xf32>
    %92 = vector.extract_strided_slice %66 {offsets = [11, 0], sizes = [80, 32], strides = [1, 1]} : vector<102x32xf32> to vector<80x32xf32>
    %c4 = arith.constant 4 : index
    %c0_19 = arith.constant 0 : index
    %c0_20 = arith.constant 0 : index
    %93 = vector.load %arg4[%c4, %c0_19, %c0_20] : memref<9x1x32xf32, #tpu.memory_space<vmem>>, vector<1x1x32xf32>
    %94 = vector.shape_cast %93 : vector<1x1x32xf32> to vector<1x32xf32>
    %95 = vector.broadcast %94 : vector<1x32xf32> to vector<80x32xf32>
    %96 = arith.mulf %92, %95 : vector<80x32xf32>
    %97 = arith.addf %91, %96 : vector<80x32xf32>
    %98 = vector.extract_strided_slice %66 {offsets = [12, 0], sizes = [80, 32], strides = [1, 1]} : vector<102x32xf32> to vector<80x32xf32>
    %c5 = arith.constant 5 : index
    %c0_21 = arith.constant 0 : index
    %c0_22 = arith.constant 0 : index
    %99 = vector.load %arg4[%c5, %c0_21, %c0_22] : memref<9x1x32xf32, #tpu.memory_space<vmem>>, vector<1x1x32xf32>
    %100 = vector.shape_cast %99 : vector<1x1x32xf32> to vector<1x32xf32>
    %101 = vector.broadcast %100 : vector<1x32xf32> to vector<80x32xf32>
    %102 = arith.mulf %98, %101 : vector<80x32xf32>
    %103 = arith.addf %97, %102 : vector<80x32xf32>
    %104 = vector.extract_strided_slice %66 {offsets = [20, 0], sizes = [80, 32], strides = [1, 1]} : vector<102x32xf32> to vector<80x32xf32>
    %c6 = arith.constant 6 : index
    %c0_23 = arith.constant 0 : index
    %c0_24 = arith.constant 0 : index
    %105 = vector.load %arg4[%c6, %c0_23, %c0_24] : memref<9x1x32xf32, #tpu.memory_space<vmem>>, vector<1x1x32xf32>
    %106 = vector.shape_cast %105 : vector<1x1x32xf32> to vector<1x32xf32>
    %107 = vector.broadcast %106 : vector<1x32xf32> to vector<80x32xf32>
    %108 = arith.mulf %104, %107 : vector<80x32xf32>
    %109 = arith.addf %103, %108 : vector<80x32xf32>
    %110 = vector.extract_strided_slice %66 {offsets = [21, 0], sizes = [80, 32], strides = [1, 1]} : vector<102x32xf32> to vector<80x32xf32>
    %c7 = arith.constant 7 : index
    %c0_25 = arith.constant 0 : index
    %c0_26 = arith.constant 0 : index
    %111 = vector.load %arg4[%c7, %c0_25, %c0_26] : memref<9x1x32xf32, #tpu.memory_space<vmem>>, vector<1x1x32xf32>
    %112 = vector.shape_cast %111 : vector<1x1x32xf32> to vector<1x32xf32>
    %113 = vector.broadcast %112 : vector<1x32xf32> to vector<80x32xf32>
    %114 = arith.mulf %110, %113 : vector<80x32xf32>
    %115 = arith.addf %109, %114 : vector<80x32xf32>
    %116 = vector.extract_strided_slice %66 {offsets = [22, 0], sizes = [80, 32], strides = [1, 1]} : vector<102x32xf32> to vector<80x32xf32>
    %c8 = arith.constant 8 : index
    %c0_27 = arith.constant 0 : index
    %c0_28 = arith.constant 0 : index
    %117 = vector.load %arg4[%c8, %c0_27, %c0_28] : memref<9x1x32xf32, #tpu.memory_space<vmem>>, vector<1x1x32xf32>
    %118 = vector.shape_cast %117 : vector<1x1x32xf32> to vector<1x32xf32>
    %119 = vector.broadcast %118 : vector<1x32xf32> to vector<80x32xf32>
    %120 = arith.mulf %116, %119 : vector<80x32xf32>
    %121 = arith.addf %115, %120 : vector<80x32xf32>
    %c0_29 = arith.constant 0 : index
    %c0_30 = arith.constant 0 : index
    %122 = vector.load %arg5[%c0_29, %c0_30] : memref<1x32xf32, #tpu.memory_space<vmem>>, vector<1x32xf32>
    %123 = vector.broadcast %122 : vector<1x32xf32> to vector<80x32xf32>
    %124 = arith.addf %121, %123 : vector<80x32xf32>
    %cst_31 = arith.constant 0.000000e+00 : f32
    %cst_32 = arith.constant 6.000000e+00 : f32
    %125 = vector.broadcast %cst_31 : f32 to vector<80x32xf32>
    %126 = arith.maximumf %125, %124 : vector<80x32xf32>
    %127 = vector.broadcast %cst_32 : f32 to vector<80x32xf32>
    %128 = arith.minimumf %127, %126 : vector<80x32xf32>
    %129 = arith.truncf %128 : vector<80x32xf32> to vector<80x32xbf16>
    %c0_33 = arith.constant 0 : index
    %c0_34 = arith.constant 0 : index
    %130 = vector.load %arg6[%c0_33, %c0_34] : memref<32x16xbf16, #tpu.memory_space<vmem>>, vector<32x16xbf16>
    %cst_35 = arith.constant dense<0.000000e+00> : vector<80x16xf32>
    %131 = tpu.matmul %129, %130, %cst_35 {dimension_numbers = #tpu.dot_dimension_numbers<[1], [0], [0], [1], [0, 0, 1, 1], [], []>} : vector<80x32xbf16>, vector<32x16xbf16>, vector<80x16xf32> -> vector<80x16xf32>
    %c0_36 = arith.constant 0 : index
    %c0_37 = arith.constant 0 : index
    %132 = vector.load %arg7[%c0_36, %c0_37] : memref<1x16xf32, #tpu.memory_space<vmem>>, vector<1x16xf32>
    %133 = vector.broadcast %132 : vector<1x16xf32> to vector<80x16xf32>
    %134 = arith.addf %131, %133 : vector<80x16xf32>
    %cst_38 = arith.constant 0.000000e+00 : f32
    %135 = vector.broadcast %cst_38 : f32 to vector<11x16xf32>
    %cst_39 = arith.constant 0.000000e+00 : f32
    %136 = vector.broadcast %cst_39 : f32 to vector<11x16xf32>
    %137 = tpu.concatenate %135, %134, %136 in 0 : vector<11x16xf32>, vector<80x16xf32>, vector<11x16xf32> -> vector<102x16xf32>
    %138 = arith.truncf %137 : vector<102x16xf32> to vector<102x16xbf16>
    %c0_40 = arith.constant 0 : index
    %c0_41 = arith.constant 0 : index
    %139 = vector.load %arg8[%c0_40, %c0_41] : memref<16x96xbf16, #tpu.memory_space<vmem>>, vector<16x96xbf16>
    %cst_42 = arith.constant dense<0.000000e+00> : vector<102x96xf32>
    %140 = tpu.matmul %138, %139, %cst_42 {dimension_numbers = #tpu.dot_dimension_numbers<[1], [0], [0], [1], [0, 0, 1, 1], [], []>} : vector<102x16xbf16>, vector<16x96xbf16>, vector<102x96xf32> -> vector<102x96xf32>
    %c0_43 = arith.constant 0 : index
    %c0_44 = arith.constant 0 : index
    %141 = vector.load %arg9[%c0_43, %c0_44] : memref<1x96xf32, #tpu.memory_space<vmem>>, vector<1x96xf32>
    %142 = vector.broadcast %141 : vector<1x96xf32> to vector<102x96xf32>
    %143 = arith.addf %140, %142 : vector<102x96xf32>
    %cst_45 = arith.constant 0.000000e+00 : f32
    %cst_46 = arith.constant 6.000000e+00 : f32
    %144 = vector.broadcast %cst_45 : f32 to vector<102x96xf32>
    %145 = arith.maximumf %144, %143 : vector<102x96xf32>
    %146 = vector.broadcast %cst_46 : f32 to vector<102x96xf32>
    %147 = arith.minimumf %146, %145 : vector<102x96xf32>
    %148 = tpu.iota {dimensions = array<i32: 0>} : vector<102x1xi32>
    %c0_i32_47 = arith.constant 0 : i32
    %149 = vector.broadcast %c0_i32_47 : i32 to vector<102x1xi32>
    %150 = arith.cmpi slt, %148, %149 : vector<102x1xi32>
    %c11_i32_48 = arith.constant 11 : i32
    %151 = vector.broadcast %c11_i32_48 : i32 to vector<102x1xi32>
    %152 = arith.cmpi sge, %148, %151 : vector<102x1xi32>
    %c19_i32_49 = arith.constant 19 : i32
    %153 = vector.broadcast %c19_i32_49 : i32 to vector<102x1xi32>
    %154 = arith.cmpi slt, %148, %153 : vector<102x1xi32>
    %155 = arith.andi %152, %154 : vector<102x1xi1>
    %156 = arith.ori %150, %155 : vector<102x1xi1>
    %c21_i32_50 = arith.constant 21 : i32
    %157 = vector.broadcast %c21_i32_50 : i32 to vector<102x1xi32>
    %158 = arith.cmpi sge, %148, %157 : vector<102x1xi32>
    %c29_i32_51 = arith.constant 29 : i32
    %159 = vector.broadcast %c29_i32_51 : i32 to vector<102x1xi32>
    %160 = arith.cmpi slt, %148, %159 : vector<102x1xi32>
    %161 = arith.andi %158, %160 : vector<102x1xi1>
    %162 = arith.ori %156, %161 : vector<102x1xi1>
    %c31_i32_52 = arith.constant 31 : i32
    %163 = vector.broadcast %c31_i32_52 : i32 to vector<102x1xi32>
    %164 = arith.cmpi sge, %148, %163 : vector<102x1xi32>
    %c39_i32_53 = arith.constant 39 : i32
    %165 = vector.broadcast %c39_i32_53 : i32 to vector<102x1xi32>
    %166 = arith.cmpi slt, %148, %165 : vector<102x1xi32>
    %167 = arith.andi %164, %166 : vector<102x1xi1>
    %168 = arith.ori %162, %167 : vector<102x1xi1>
    %c41_i32_54 = arith.constant 41 : i32
    %169 = vector.broadcast %c41_i32_54 : i32 to vector<102x1xi32>
    %170 = arith.cmpi sge, %148, %169 : vector<102x1xi32>
    %c49_i32_55 = arith.constant 49 : i32
    %171 = vector.broadcast %c49_i32_55 : i32 to vector<102x1xi32>
    %172 = arith.cmpi slt, %148, %171 : vector<102x1xi32>
    %173 = arith.andi %170, %172 : vector<102x1xi1>
    %174 = arith.ori %168, %173 : vector<102x1xi1>
    %c51_i32_56 = arith.constant 51 : i32
    %175 = vector.broadcast %c51_i32_56 : i32 to vector<102x1xi32>
    %176 = arith.cmpi sge, %148, %175 : vector<102x1xi32>
    %c59_i32_57 = arith.constant 59 : i32
    %177 = vector.broadcast %c59_i32_57 : i32 to vector<102x1xi32>
    %178 = arith.cmpi slt, %148, %177 : vector<102x1xi32>
    %179 = arith.andi %176, %178 : vector<102x1xi1>
    %180 = arith.ori %174, %179 : vector<102x1xi1>
    %c61_i32_58 = arith.constant 61 : i32
    %181 = vector.broadcast %c61_i32_58 : i32 to vector<102x1xi32>
    %182 = arith.cmpi sge, %148, %181 : vector<102x1xi32>
    %c69_i32_59 = arith.constant 69 : i32
    %183 = vector.broadcast %c69_i32_59 : i32 to vector<102x1xi32>
    %184 = arith.cmpi slt, %148, %183 : vector<102x1xi32>
    %185 = arith.andi %182, %184 : vector<102x1xi1>
    %186 = arith.ori %180, %185 : vector<102x1xi1>
    %c71_i32_60 = arith.constant 71 : i32
    %187 = vector.broadcast %c71_i32_60 : i32 to vector<102x1xi32>
    %188 = arith.cmpi sge, %148, %187 : vector<102x1xi32>
    %c79_i32_61 = arith.constant 79 : i32
    %189 = vector.broadcast %c79_i32_61 : i32 to vector<102x1xi32>
    %190 = arith.cmpi slt, %148, %189 : vector<102x1xi32>
    %191 = arith.andi %188, %190 : vector<102x1xi1>
    %192 = arith.ori %186, %191 : vector<102x1xi1>
    %c81_i32_62 = arith.constant 81 : i32
    %193 = vector.broadcast %c81_i32_62 : i32 to vector<102x1xi32>
    %194 = arith.cmpi sge, %148, %193 : vector<102x1xi32>
    %c89_i32_63 = arith.constant 89 : i32
    %195 = vector.broadcast %c89_i32_63 : i32 to vector<102x1xi32>
    %196 = arith.cmpi slt, %148, %195 : vector<102x1xi32>
    %197 = arith.andi %194, %196 : vector<102x1xi1>
    %198 = arith.ori %192, %197 : vector<102x1xi1>
    %cst_64 = arith.constant 0.000000e+00 : f32
    %199 = vector.shape_cast %198 : vector<102x1xi1> to vector<102x1xi1>
    %200 = vector.broadcast %199 : vector<102x1xi1> to vector<102x96xi1>
    %201 = vector.broadcast %cst_64 : f32 to vector<102x96xf32>
    %202 = arith.select %200, %147, %201 : vector<102x96xi1>, vector<102x96xf32>
    %cst_65 = arith.constant 0.000000e+00 : f32
    %203 = vector.broadcast %cst_65 : f32 to vector<70x96xf32>
    %204 = vector.extract_strided_slice %202 {offsets = [0, 0], sizes = [70, 96], strides = [1, 1]} : vector<102x96xf32> to vector<70x96xf32>
    %c0_66 = arith.constant 0 : index
    %c0_67 = arith.constant 0 : index
    %c0_68 = arith.constant 0 : index
    %205 = vector.load %arg10[%c0_66, %c0_67, %c0_68] : memref<9x1x96xf32, #tpu.memory_space<vmem>>, vector<1x1x96xf32>
    %206 = vector.shape_cast %205 : vector<1x1x96xf32> to vector<1x96xf32>
    %207 = vector.broadcast %206 : vector<1x96xf32> to vector<70x96xf32>
    %208 = arith.mulf %204, %207 : vector<70x96xf32>
    %209 = arith.addf %203, %208 : vector<70x96xf32>
    %210 = vector.extract_strided_slice %202 {offsets = [1, 0], sizes = [70, 96], strides = [1, 1]} : vector<102x96xf32> to vector<70x96xf32>
    %c1_69 = arith.constant 1 : index
    %c0_70 = arith.constant 0 : index
    %c0_71 = arith.constant 0 : index
    %211 = vector.load %arg10[%c1_69, %c0_70, %c0_71] : memref<9x1x96xf32, #tpu.memory_space<vmem>>, vector<1x1x96xf32>
    %212 = vector.shape_cast %211 : vector<1x1x96xf32> to vector<1x96xf32>
    %213 = vector.broadcast %212 : vector<1x96xf32> to vector<70x96xf32>
    %214 = arith.mulf %210, %213 : vector<70x96xf32>
    %215 = arith.addf %209, %214 : vector<70x96xf32>
    %216 = vector.extract_strided_slice %202 {offsets = [2, 0], sizes = [70, 96], strides = [1, 1]} : vector<102x96xf32> to vector<70x96xf32>
    %c2_72 = arith.constant 2 : index
    %c0_73 = arith.constant 0 : index
    %c0_74 = arith.constant 0 : index
    %217 = vector.load %arg10[%c2_72, %c0_73, %c0_74] : memref<9x1x96xf32, #tpu.memory_space<vmem>>, vector<1x1x96xf32>
    %218 = vector.shape_cast %217 : vector<1x1x96xf32> to vector<1x96xf32>
    %219 = vector.broadcast %218 : vector<1x96xf32> to vector<70x96xf32>
    %220 = arith.mulf %216, %219 : vector<70x96xf32>
    %221 = arith.addf %215, %220 : vector<70x96xf32>
    %222 = vector.extract_strided_slice %202 {offsets = [10, 0], sizes = [70, 96], strides = [1, 1]} : vector<102x96xf32> to vector<70x96xf32>
    %c3_75 = arith.constant 3 : index
    %c0_76 = arith.constant 0 : index
    %c0_77 = arith.constant 0 : index
    %223 = vector.load %arg10[%c3_75, %c0_76, %c0_77] : memref<9x1x96xf32, #tpu.memory_space<vmem>>, vector<1x1x96xf32>
    %224 = vector.shape_cast %223 : vector<1x1x96xf32> to vector<1x96xf32>
    %225 = vector.broadcast %224 : vector<1x96xf32> to vector<70x96xf32>
    %226 = arith.mulf %222, %225 : vector<70x96xf32>
    %227 = arith.addf %221, %226 : vector<70x96xf32>
    %228 = vector.extract_strided_slice %202 {offsets = [11, 0], sizes = [70, 96], strides = [1, 1]} : vector<102x96xf32> to vector<70x96xf32>
    %c4_78 = arith.constant 4 : index
    %c0_79 = arith.constant 0 : index
    %c0_80 = arith.constant 0 : index
    %229 = vector.load %arg10[%c4_78, %c0_79, %c0_80] : memref<9x1x96xf32, #tpu.memory_space<vmem>>, vector<1x1x96xf32>
    %230 = vector.shape_cast %229 : vector<1x1x96xf32> to vector<1x96xf32>
    %231 = vector.broadcast %230 : vector<1x96xf32> to vector<70x96xf32>
    %232 = arith.mulf %228, %231 : vector<70x96xf32>
    %233 = arith.addf %227, %232 : vector<70x96xf32>
    %234 = vector.extract_strided_slice %202 {offsets = [12, 0], sizes = [70, 96], strides = [1, 1]} : vector<102x96xf32> to vector<70x96xf32>
    %c5_81 = arith.constant 5 : index
    %c0_82 = arith.constant 0 : index
    %c0_83 = arith.constant 0 : index
    %235 = vector.load %arg10[%c5_81, %c0_82, %c0_83] : memref<9x1x96xf32, #tpu.memory_space<vmem>>, vector<1x1x96xf32>
    %236 = vector.shape_cast %235 : vector<1x1x96xf32> to vector<1x96xf32>
    %237 = vector.broadcast %236 : vector<1x96xf32> to vector<70x96xf32>
    %238 = arith.mulf %234, %237 : vector<70x96xf32>
    %239 = arith.addf %233, %238 : vector<70x96xf32>
    %240 = vector.extract_strided_slice %202 {offsets = [20, 0], sizes = [70, 96], strides = [1, 1]} : vector<102x96xf32> to vector<70x96xf32>
    %c6_84 = arith.constant 6 : index
    %c0_85 = arith.constant 0 : index
    %c0_86 = arith.constant 0 : index
    %241 = vector.load %arg10[%c6_84, %c0_85, %c0_86] : memref<9x1x96xf32, #tpu.memory_space<vmem>>, vector<1x1x96xf32>
    %242 = vector.shape_cast %241 : vector<1x1x96xf32> to vector<1x96xf32>
    %243 = vector.broadcast %242 : vector<1x96xf32> to vector<70x96xf32>
    %244 = arith.mulf %240, %243 : vector<70x96xf32>
    %245 = arith.addf %239, %244 : vector<70x96xf32>
    %246 = vector.extract_strided_slice %202 {offsets = [21, 0], sizes = [70, 96], strides = [1, 1]} : vector<102x96xf32> to vector<70x96xf32>
    %c7_87 = arith.constant 7 : index
    %c0_88 = arith.constant 0 : index
    %c0_89 = arith.constant 0 : index
    %247 = vector.load %arg10[%c7_87, %c0_88, %c0_89] : memref<9x1x96xf32, #tpu.memory_space<vmem>>, vector<1x1x96xf32>
    %248 = vector.shape_cast %247 : vector<1x1x96xf32> to vector<1x96xf32>
    %249 = vector.broadcast %248 : vector<1x96xf32> to vector<70x96xf32>
    %250 = arith.mulf %246, %249 : vector<70x96xf32>
    %251 = arith.addf %245, %250 : vector<70x96xf32>
    %252 = vector.extract_strided_slice %202 {offsets = [22, 0], sizes = [70, 96], strides = [1, 1]} : vector<102x96xf32> to vector<70x96xf32>
    %c8_90 = arith.constant 8 : index
    %c0_91 = arith.constant 0 : index
    %c0_92 = arith.constant 0 : index
    %253 = vector.load %arg10[%c8_90, %c0_91, %c0_92] : memref<9x1x96xf32, #tpu.memory_space<vmem>>, vector<1x1x96xf32>
    %254 = vector.shape_cast %253 : vector<1x1x96xf32> to vector<1x96xf32>
    %255 = vector.broadcast %254 : vector<1x96xf32> to vector<70x96xf32>
    %256 = arith.mulf %252, %255 : vector<70x96xf32>
    %257 = arith.addf %251, %256 : vector<70x96xf32>
    %c0_93 = arith.constant 0 : index
    %c0_94 = arith.constant 0 : index
    %258 = vector.load %arg11[%c0_93, %c0_94] : memref<1x96xf32, #tpu.memory_space<vmem>>, vector<1x96xf32>
    %259 = vector.broadcast %258 : vector<1x96xf32> to vector<70x96xf32>
    %260 = arith.addf %257, %259 : vector<70x96xf32>
    %cst_95 = arith.constant 0.000000e+00 : f32
    %cst_96 = arith.constant 6.000000e+00 : f32
    %261 = vector.broadcast %cst_95 : f32 to vector<70x96xf32>
    %262 = arith.maximumf %261, %260 : vector<70x96xf32>
    %263 = vector.broadcast %cst_96 : f32 to vector<70x96xf32>
    %264 = arith.minimumf %263, %262 : vector<70x96xf32>
    %265 = vector.extract_strided_slice %264 {offsets = [0, 0], sizes = [1, 96], strides = [1, 1]} : vector<70x96xf32> to vector<1x96xf32>
    %266 = vector.extract_strided_slice %264 {offsets = [2, 0], sizes = [1, 96], strides = [1, 1]} : vector<70x96xf32> to vector<1x96xf32>
    %267 = vector.extract_strided_slice %264 {offsets = [4, 0], sizes = [1, 96], strides = [1, 1]} : vector<70x96xf32> to vector<1x96xf32>
    %268 = vector.extract_strided_slice %264 {offsets = [6, 0], sizes = [1, 96], strides = [1, 1]} : vector<70x96xf32> to vector<1x96xf32>
    %269 = vector.extract_strided_slice %264 {offsets = [20, 0], sizes = [1, 96], strides = [1, 1]} : vector<70x96xf32> to vector<1x96xf32>
    %270 = vector.extract_strided_slice %264 {offsets = [22, 0], sizes = [1, 96], strides = [1, 1]} : vector<70x96xf32> to vector<1x96xf32>
    %271 = vector.extract_strided_slice %264 {offsets = [24, 0], sizes = [1, 96], strides = [1, 1]} : vector<70x96xf32> to vector<1x96xf32>
    %272 = vector.extract_strided_slice %264 {offsets = [26, 0], sizes = [1, 96], strides = [1, 1]} : vector<70x96xf32> to vector<1x96xf32>
    %273 = vector.extract_strided_slice %264 {offsets = [40, 0], sizes = [1, 96], strides = [1, 1]} : vector<70x96xf32> to vector<1x96xf32>
    %274 = vector.extract_strided_slice %264 {offsets = [42, 0], sizes = [1, 96], strides = [1, 1]} : vector<70x96xf32> to vector<1x96xf32>
    %275 = vector.extract_strided_slice %264 {offsets = [44, 0], sizes = [1, 96], strides = [1, 1]} : vector<70x96xf32> to vector<1x96xf32>
    %276 = vector.extract_strided_slice %264 {offsets = [46, 0], sizes = [1, 96], strides = [1, 1]} : vector<70x96xf32> to vector<1x96xf32>
    %277 = vector.extract_strided_slice %264 {offsets = [60, 0], sizes = [1, 96], strides = [1, 1]} : vector<70x96xf32> to vector<1x96xf32>
    %278 = vector.extract_strided_slice %264 {offsets = [62, 0], sizes = [1, 96], strides = [1, 1]} : vector<70x96xf32> to vector<1x96xf32>
    %279 = vector.extract_strided_slice %264 {offsets = [64, 0], sizes = [1, 96], strides = [1, 1]} : vector<70x96xf32> to vector<1x96xf32>
    %280 = vector.extract_strided_slice %264 {offsets = [66, 0], sizes = [1, 96], strides = [1, 1]} : vector<70x96xf32> to vector<1x96xf32>
    %281 = tpu.concatenate %265, %266, %267, %268, %269, %270, %271, %272, %273, %274, %275, %276, %277, %278, %279, %280 in 0 : vector<1x96xf32>, vector<1x96xf32>, vector<1x96xf32>, vector<1x96xf32>, vector<1x96xf32>, vector<1x96xf32>, vector<1x96xf32>, vector<1x96xf32>, vector<1x96xf32>, vector<1x96xf32>, vector<1x96xf32>, vector<1x96xf32>, vector<1x96xf32>, vector<1x96xf32>, vector<1x96xf32>, vector<1x96xf32> -> vector<16x96xf32>
    %282 = arith.truncf %281 : vector<16x96xf32> to vector<16x96xbf16>
    %c0_97 = arith.constant 0 : index
    %c0_98 = arith.constant 0 : index
    %283 = vector.load %arg12[%c0_97, %c0_98] : memref<96x24xbf16, #tpu.memory_space<vmem>>, vector<96x24xbf16>
    %cst_99 = arith.constant dense<0.000000e+00> : vector<16x24xf32>
    %284 = tpu.matmul %282, %283, %cst_99 {dimension_numbers = #tpu.dot_dimension_numbers<[1], [0], [0], [1], [0, 0, 1, 1], [], []>} : vector<16x96xbf16>, vector<96x24xbf16>, vector<16x24xf32> -> vector<16x24xf32>
    %c0_100 = arith.constant 0 : index
    %c0_101 = arith.constant 0 : index
    %285 = vector.load %arg13[%c0_100, %c0_101] : memref<1x24xf32, #tpu.memory_space<vmem>>, vector<1x24xf32>
    %286 = vector.broadcast %285 : vector<1x24xf32> to vector<16x24xf32>
    %287 = arith.addf %284, %286 : vector<16x24xf32>
    %cst_102 = arith.constant 0.000000e+00 : f32
    %288 = vector.broadcast %cst_102 : f32 to vector<7x24xf32>
    %289 = vector.extract_strided_slice %287 {offsets = [0, 0], sizes = [4, 24], strides = [1, 1]} : vector<16x24xf32> to vector<4x24xf32>
    %cst_103 = arith.constant 0.000000e+00 : f32
    %290 = vector.broadcast %cst_103 : f32 to vector<2x24xf32>
    %291 = vector.extract_strided_slice %287 {offsets = [4, 0], sizes = [4, 24], strides = [1, 1]} : vector<16x24xf32> to vector<4x24xf32>
    %cst_104 = arith.constant 0.000000e+00 : f32
    %292 = vector.broadcast %cst_104 : f32 to vector<2x24xf32>
    %293 = vector.extract_strided_slice %287 {offsets = [8, 0], sizes = [4, 24], strides = [1, 1]} : vector<16x24xf32> to vector<4x24xf32>
    %cst_105 = arith.constant 0.000000e+00 : f32
    %294 = vector.broadcast %cst_105 : f32 to vector<2x24xf32>
    %295 = vector.extract_strided_slice %287 {offsets = [12, 0], sizes = [4, 24], strides = [1, 1]} : vector<16x24xf32> to vector<4x24xf32>
    %cst_106 = arith.constant 0.000000e+00 : f32
    %296 = vector.broadcast %cst_106 : f32 to vector<9x24xf32>
    %297 = tpu.concatenate %288, %289, %290, %291, %292, %293, %294, %295, %296 in 0 : vector<7x24xf32>, vector<4x24xf32>, vector<2x24xf32>, vector<4x24xf32>, vector<2x24xf32>, vector<4x24xf32>, vector<2x24xf32>, vector<4x24xf32>, vector<9x24xf32> -> vector<38x24xf32>
    %298 = arith.truncf %297 : vector<38x24xf32> to vector<38x24xbf16>
    %c0_107 = arith.constant 0 : index
    %c0_108 = arith.constant 0 : index
    %299 = vector.load %arg14[%c0_107, %c0_108] : memref<24x144xbf16, #tpu.memory_space<vmem>>, vector<24x144xbf16>
    %cst_109 = arith.constant dense<0.000000e+00> : vector<38x144xf32>
    %300 = tpu.matmul %298, %299, %cst_109 {dimension_numbers = #tpu.dot_dimension_numbers<[1], [0], [0], [1], [0, 0, 1, 1], [], []>} : vector<38x24xbf16>, vector<24x144xbf16>, vector<38x144xf32> -> vector<38x144xf32>
    %c0_110 = arith.constant 0 : index
    %c0_111 = arith.constant 0 : index
    %301 = vector.load %arg15[%c0_110, %c0_111] : memref<1x144xf32, #tpu.memory_space<vmem>>, vector<1x144xf32>
    %302 = vector.broadcast %301 : vector<1x144xf32> to vector<38x144xf32>
    %303 = arith.addf %300, %302 : vector<38x144xf32>
    %cst_112 = arith.constant 0.000000e+00 : f32
    %cst_113 = arith.constant 6.000000e+00 : f32
    %304 = vector.broadcast %cst_112 : f32 to vector<38x144xf32>
    %305 = arith.maximumf %304, %303 : vector<38x144xf32>
    %306 = vector.broadcast %cst_113 : f32 to vector<38x144xf32>
    %307 = arith.minimumf %306, %305 : vector<38x144xf32>
    %308 = tpu.iota {dimensions = array<i32: 0>} : vector<38x1xi32>
    %c0_i32_114 = arith.constant 0 : i32
    %309 = vector.broadcast %c0_i32_114 : i32 to vector<38x1xi32>
    %310 = arith.cmpi slt, %308, %309 : vector<38x1xi32>
    %c7_i32 = arith.constant 7 : i32
    %311 = vector.broadcast %c7_i32 : i32 to vector<38x1xi32>
    %312 = arith.cmpi sge, %308, %311 : vector<38x1xi32>
    %c11_i32_115 = arith.constant 11 : i32
    %313 = vector.broadcast %c11_i32_115 : i32 to vector<38x1xi32>
    %314 = arith.cmpi slt, %308, %313 : vector<38x1xi32>
    %315 = arith.andi %312, %314 : vector<38x1xi1>
    %316 = arith.ori %310, %315 : vector<38x1xi1>
    %c13_i32 = arith.constant 13 : i32
    %317 = vector.broadcast %c13_i32 : i32 to vector<38x1xi32>
    %318 = arith.cmpi sge, %308, %317 : vector<38x1xi32>
    %c17_i32 = arith.constant 17 : i32
    %319 = vector.broadcast %c17_i32 : i32 to vector<38x1xi32>
    %320 = arith.cmpi slt, %308, %319 : vector<38x1xi32>
    %321 = arith.andi %318, %320 : vector<38x1xi1>
    %322 = arith.ori %316, %321 : vector<38x1xi1>
    %c19_i32_116 = arith.constant 19 : i32
    %323 = vector.broadcast %c19_i32_116 : i32 to vector<38x1xi32>
    %324 = arith.cmpi sge, %308, %323 : vector<38x1xi32>
    %c23_i32 = arith.constant 23 : i32
    %325 = vector.broadcast %c23_i32 : i32 to vector<38x1xi32>
    %326 = arith.cmpi slt, %308, %325 : vector<38x1xi32>
    %327 = arith.andi %324, %326 : vector<38x1xi1>
    %328 = arith.ori %322, %327 : vector<38x1xi1>
    %c25_i32 = arith.constant 25 : i32
    %329 = vector.broadcast %c25_i32 : i32 to vector<38x1xi32>
    %330 = arith.cmpi sge, %308, %329 : vector<38x1xi32>
    %c29_i32_117 = arith.constant 29 : i32
    %331 = vector.broadcast %c29_i32_117 : i32 to vector<38x1xi32>
    %332 = arith.cmpi slt, %308, %331 : vector<38x1xi32>
    %333 = arith.andi %330, %332 : vector<38x1xi1>
    %334 = arith.ori %328, %333 : vector<38x1xi1>
    %cst_118 = arith.constant 0.000000e+00 : f32
    %335 = vector.shape_cast %334 : vector<38x1xi1> to vector<38x1xi1>
    %336 = vector.broadcast %335 : vector<38x1xi1> to vector<38x144xi1>
    %337 = vector.broadcast %cst_118 : f32 to vector<38x144xf32>
    %338 = arith.select %336, %307, %337 : vector<38x144xi1>, vector<38x144xf32>
    %cst_119 = arith.constant 0.000000e+00 : f32
    %339 = vector.broadcast %cst_119 : f32 to vector<24x144xf32>
    %340 = vector.extract_strided_slice %338 {offsets = [0, 0], sizes = [24, 144], strides = [1, 1]} : vector<38x144xf32> to vector<24x144xf32>
    %c0_120 = arith.constant 0 : index
    %c0_121 = arith.constant 0 : index
    %c0_122 = arith.constant 0 : index
    %341 = vector.load %arg16[%c0_120, %c0_121, %c0_122] : memref<9x1x144xf32, #tpu.memory_space<vmem>>, vector<1x1x144xf32>
    %342 = vector.shape_cast %341 : vector<1x1x144xf32> to vector<1x144xf32>
    %343 = vector.broadcast %342 : vector<1x144xf32> to vector<24x144xf32>
    %344 = arith.mulf %340, %343 : vector<24x144xf32>
    %345 = arith.addf %339, %344 : vector<24x144xf32>
    %346 = vector.extract_strided_slice %338 {offsets = [1, 0], sizes = [24, 144], strides = [1, 1]} : vector<38x144xf32> to vector<24x144xf32>
    %c1_123 = arith.constant 1 : index
    %c0_124 = arith.constant 0 : index
    %c0_125 = arith.constant 0 : index
    %347 = vector.load %arg16[%c1_123, %c0_124, %c0_125] : memref<9x1x144xf32, #tpu.memory_space<vmem>>, vector<1x1x144xf32>
    %348 = vector.shape_cast %347 : vector<1x1x144xf32> to vector<1x144xf32>
    %349 = vector.broadcast %348 : vector<1x144xf32> to vector<24x144xf32>
    %350 = arith.mulf %346, %349 : vector<24x144xf32>
    %351 = arith.addf %345, %350 : vector<24x144xf32>
    %352 = vector.extract_strided_slice %338 {offsets = [2, 0], sizes = [24, 144], strides = [1, 1]} : vector<38x144xf32> to vector<24x144xf32>
    %c2_126 = arith.constant 2 : index
    %c0_127 = arith.constant 0 : index
    %c0_128 = arith.constant 0 : index
    %353 = vector.load %arg16[%c2_126, %c0_127, %c0_128] : memref<9x1x144xf32, #tpu.memory_space<vmem>>, vector<1x1x144xf32>
    %354 = vector.shape_cast %353 : vector<1x1x144xf32> to vector<1x144xf32>
    %355 = vector.broadcast %354 : vector<1x144xf32> to vector<24x144xf32>
    %356 = arith.mulf %352, %355 : vector<24x144xf32>
    %357 = arith.addf %351, %356 : vector<24x144xf32>
    %358 = vector.extract_strided_slice %338 {offsets = [6, 0], sizes = [24, 144], strides = [1, 1]} : vector<38x144xf32> to vector<24x144xf32>
    %c3_129 = arith.constant 3 : index
    %c0_130 = arith.constant 0 : index
    %c0_131 = arith.constant 0 : index
    %359 = vector.load %arg16[%c3_129, %c0_130, %c0_131] : memref<9x1x144xf32, #tpu.memory_space<vmem>>, vector<1x1x144xf32>
    %360 = vector.shape_cast %359 : vector<1x1x144xf32> to vector<1x144xf32>
    %361 = vector.broadcast %360 : vector<1x144xf32> to vector<24x144xf32>
    %362 = arith.mulf %358, %361 : vector<24x144xf32>
    %363 = arith.addf %357, %362 : vector<24x144xf32>
    %364 = vector.extract_strided_slice %338 {offsets = [7, 0], sizes = [24, 144], strides = [1, 1]} : vector<38x144xf32> to vector<24x144xf32>
    %c4_132 = arith.constant 4 : index
    %c0_133 = arith.constant 0 : index
    %c0_134 = arith.constant 0 : index
    %365 = vector.load %arg16[%c4_132, %c0_133, %c0_134] : memref<9x1x144xf32, #tpu.memory_space<vmem>>, vector<1x1x144xf32>
    %366 = vector.shape_cast %365 : vector<1x1x144xf32> to vector<1x144xf32>
    %367 = vector.broadcast %366 : vector<1x144xf32> to vector<24x144xf32>
    %368 = arith.mulf %364, %367 : vector<24x144xf32>
    %369 = arith.addf %363, %368 : vector<24x144xf32>
    %370 = vector.extract_strided_slice %338 {offsets = [8, 0], sizes = [24, 144], strides = [1, 1]} : vector<38x144xf32> to vector<24x144xf32>
    %c5_135 = arith.constant 5 : index
    %c0_136 = arith.constant 0 : index
    %c0_137 = arith.constant 0 : index
    %371 = vector.load %arg16[%c5_135, %c0_136, %c0_137] : memref<9x1x144xf32, #tpu.memory_space<vmem>>, vector<1x1x144xf32>
    %372 = vector.shape_cast %371 : vector<1x1x144xf32> to vector<1x144xf32>
    %373 = vector.broadcast %372 : vector<1x144xf32> to vector<24x144xf32>
    %374 = arith.mulf %370, %373 : vector<24x144xf32>
    %375 = arith.addf %369, %374 : vector<24x144xf32>
    %376 = vector.extract_strided_slice %338 {offsets = [12, 0], sizes = [24, 144], strides = [1, 1]} : vector<38x144xf32> to vector<24x144xf32>
    %c6_138 = arith.constant 6 : index
    %c0_139 = arith.constant 0 : index
    %c0_140 = arith.constant 0 : index
    %377 = vector.load %arg16[%c6_138, %c0_139, %c0_140] : memref<9x1x144xf32, #tpu.memory_space<vmem>>, vector<1x1x144xf32>
    %378 = vector.shape_cast %377 : vector<1x1x144xf32> to vector<1x144xf32>
    %379 = vector.broadcast %378 : vector<1x144xf32> to vector<24x144xf32>
    %380 = arith.mulf %376, %379 : vector<24x144xf32>
    %381 = arith.addf %375, %380 : vector<24x144xf32>
    %382 = vector.extract_strided_slice %338 {offsets = [13, 0], sizes = [24, 144], strides = [1, 1]} : vector<38x144xf32> to vector<24x144xf32>
    %c7_141 = arith.constant 7 : index
    %c0_142 = arith.constant 0 : index
    %c0_143 = arith.constant 0 : index
    %383 = vector.load %arg16[%c7_141, %c0_142, %c0_143] : memref<9x1x144xf32, #tpu.memory_space<vmem>>, vector<1x1x144xf32>
    %384 = vector.shape_cast %383 : vector<1x1x144xf32> to vector<1x144xf32>
    %385 = vector.broadcast %384 : vector<1x144xf32> to vector<24x144xf32>
    %386 = arith.mulf %382, %385 : vector<24x144xf32>
    %387 = arith.addf %381, %386 : vector<24x144xf32>
    %388 = vector.extract_strided_slice %338 {offsets = [14, 0], sizes = [24, 144], strides = [1, 1]} : vector<38x144xf32> to vector<24x144xf32>
    %c8_144 = arith.constant 8 : index
    %c0_145 = arith.constant 0 : index
    %c0_146 = arith.constant 0 : index
    %389 = vector.load %arg16[%c8_144, %c0_145, %c0_146] : memref<9x1x144xf32, #tpu.memory_space<vmem>>, vector<1x1x144xf32>
    %390 = vector.shape_cast %389 : vector<1x1x144xf32> to vector<1x144xf32>
    %391 = vector.broadcast %390 : vector<1x144xf32> to vector<24x144xf32>
    %392 = arith.mulf %388, %391 : vector<24x144xf32>
    %393 = arith.addf %387, %392 : vector<24x144xf32>
    %c0_147 = arith.constant 0 : index
    %c0_148 = arith.constant 0 : index
    %394 = vector.load %arg17[%c0_147, %c0_148] : memref<1x144xf32, #tpu.memory_space<vmem>>, vector<1x144xf32>
    %395 = vector.broadcast %394 : vector<1x144xf32> to vector<24x144xf32>
    %396 = arith.addf %393, %395 : vector<24x144xf32>
    %cst_149 = arith.constant 0.000000e+00 : f32
    %cst_150 = arith.constant 6.000000e+00 : f32
    %397 = vector.broadcast %cst_149 : f32 to vector<24x144xf32>
    %398 = arith.maximumf %397, %396 : vector<24x144xf32>
    %399 = vector.broadcast %cst_150 : f32 to vector<24x144xf32>
    %400 = arith.minimumf %399, %398 : vector<24x144xf32>
    %401 = vector.extract_strided_slice %400 {offsets = [0, 0], sizes = [4, 144], strides = [1, 1]} : vector<24x144xf32> to vector<4x144xf32>
    %402 = vector.extract_strided_slice %400 {offsets = [6, 0], sizes = [4, 144], strides = [1, 1]} : vector<24x144xf32> to vector<4x144xf32>
    %403 = vector.extract_strided_slice %400 {offsets = [12, 0], sizes = [4, 144], strides = [1, 1]} : vector<24x144xf32> to vector<4x144xf32>
    %404 = vector.extract_strided_slice %400 {offsets = [18, 0], sizes = [4, 144], strides = [1, 1]} : vector<24x144xf32> to vector<4x144xf32>
    %405 = tpu.concatenate %401, %402, %403, %404 in 0 : vector<4x144xf32>, vector<4x144xf32>, vector<4x144xf32>, vector<4x144xf32> -> vector<16x144xf32>
    %406 = arith.truncf %405 : vector<16x144xf32> to vector<16x144xbf16>
    %c0_151 = arith.constant 0 : index
    %c0_152 = arith.constant 0 : index
    %407 = vector.load %arg18[%c0_151, %c0_152] : memref<144x24xbf16, #tpu.memory_space<vmem>>, vector<144x24xbf16>
    %cst_153 = arith.constant dense<0.000000e+00> : vector<16x24xf32>
    %408 = tpu.matmul %406, %407, %cst_153 {dimension_numbers = #tpu.dot_dimension_numbers<[1], [0], [0], [1], [0, 0, 1, 1], [], []>} : vector<16x144xbf16>, vector<144x24xbf16>, vector<16x24xf32> -> vector<16x24xf32>
    %c0_154 = arith.constant 0 : index
    %c0_155 = arith.constant 0 : index
    %409 = vector.load %arg19[%c0_154, %c0_155] : memref<1x24xf32, #tpu.memory_space<vmem>>, vector<1x24xf32>
    %410 = vector.broadcast %409 : vector<1x24xf32> to vector<16x24xf32>
    %411 = arith.addf %408, %410 : vector<16x24xf32>
    %412 = arith.addf %411, %287 : vector<16x24xf32>
    %c0_156 = arith.constant 0 : index
    %c0_157 = arith.constant 0 : index
    %c0_158 = arith.constant 0 : index
    %413 = vector.load %arg20[%c0_156, %c0_157, %c0_158] : memref<1x16x24xf32, #tpu.memory_space<vmem>>, vector<1x16x24xf32>
    %414 = vector.shape_cast %413 : vector<1x16x24xf32> to vector<16x24xf32>
    %415 = vector.shape_cast %412 : vector<16x24xf32> to vector<1x16x24xf32>
    tpu.vector_store %arg20[%c0_156, %c0_157, %c0_158], %415 {strides = array<i32>} : memref<1x16x24xf32, #tpu.memory_space<vmem>>, vector<1x16x24xf32>,
    return
  }
  func.func @transform_0(%arg0: i32) -> (i32, i32, i32) {
    %c0_i32 = arith.constant 0 : i32
    %c0_i32_0 = arith.constant 0 : i32
    %c0_i32_1 = arith.constant 0 : i32
    return %arg0, %c0_i32, %c0_i32_0 : i32, i32, i32
  }
  func.func @transform_1(%arg0: i32) -> (i32, i32) {
    %c0_i32 = arith.constant 0 : i32
    %c0_i32_0 = arith.constant 0 : i32
    %c0_i32_1 = arith.constant 0 : i32
    return %c0_i32, %c0_i32_0 : i32, i32
  }
  func.func @transform_2(%arg0: i32) -> (i32, i32) {
    %c0_i32 = arith.constant 0 : i32
    %c0_i32_0 = arith.constant 0 : i32
    %c0_i32_1 = arith.constant 0 : i32
    return %c0_i32, %c0_i32_0 : i32, i32
  }
  func.func @transform_3(%arg0: i32) -> (i32, i32, i32) {
    %c0_i32 = arith.constant 0 : i32
    %c0_i32_0 = arith.constant 0 : i32
    %c0_i32_1 = arith.constant 0 : i32
    %c0_i32_2 = arith.constant 0 : i32
    return %c0_i32, %c0_i32_0, %c0_i32_1 : i32, i32, i32
  }
  func.func @transform_4(%arg0: i32) -> (i32, i32) {
    %c0_i32 = arith.constant 0 : i32
    %c0_i32_0 = arith.constant 0 : i32
    %c0_i32_1 = arith.constant 0 : i32
    return %c0_i32, %c0_i32_0 : i32, i32
  }
  func.func @transform_5(%arg0: i32) -> (i32, i32) {
    %c0_i32 = arith.constant 0 : i32
    %c0_i32_0 = arith.constant 0 : i32
    %c0_i32_1 = arith.constant 0 : i32
    return %c0_i32, %c0_i32_0 : i32, i32
  }
  func.func @transform_6(%arg0: i32) -> (i32, i32) {
    %c0_i32 = arith.constant 0 : i32
    %c0_i32_0 = arith.constant 0 : i32
    %c0_i32_1 = arith.constant 0 : i32
    return %c0_i32, %c0_i32_0 : i32, i32
  }
  func.func @transform_7(%arg0: i32) -> (i32, i32) {
    %c0_i32 = arith.constant 0 : i32
    %c0_i32_0 = arith.constant 0 : i32
    %c0_i32_1 = arith.constant 0 : i32
    return %c0_i32, %c0_i32_0 : i32, i32
  }
  func.func @transform_8(%arg0: i32) -> (i32, i32) {
    %c0_i32 = arith.constant 0 : i32
    %c0_i32_0 = arith.constant 0 : i32
    %c0_i32_1 = arith.constant 0 : i32
    return %c0_i32, %c0_i32_0 : i32, i32
  }
  func.func @transform_9(%arg0: i32) -> (i32, i32, i32) {
    %c0_i32 = arith.constant 0 : i32
    %c0_i32_0 = arith.constant 0 : i32
    %c0_i32_1 = arith.constant 0 : i32
    %c0_i32_2 = arith.constant 0 : i32
    return %c0_i32, %c0_i32_0, %c0_i32_1 : i32, i32, i32
  }
  func.func @transform_10(%arg0: i32) -> (i32, i32) {
    %c0_i32 = arith.constant 0 : i32
    %c0_i32_0 = arith.constant 0 : i32
    %c0_i32_1 = arith.constant 0 : i32
    return %c0_i32, %c0_i32_0 : i32, i32
  }
  func.func @transform_11(%arg0: i32) -> (i32, i32) {
    %c0_i32 = arith.constant 0 : i32
    %c0_i32_0 = arith.constant 0 : i32
    %c0_i32_1 = arith.constant 0 : i32
    return %c0_i32, %c0_i32_0 : i32, i32
  }
  func.func @transform_12(%arg0: i32) -> (i32, i32) {
    %c0_i32 = arith.constant 0 : i32
    %c0_i32_0 = arith.constant 0 : i32
    %c0_i32_1 = arith.constant 0 : i32
    return %c0_i32, %c0_i32_0 : i32, i32
  }
  func.func @transform_13(%arg0: i32) -> (i32, i32) {
    %c0_i32 = arith.constant 0 : i32
    %c0_i32_0 = arith.constant 0 : i32
    %c0_i32_1 = arith.constant 0 : i32
    return %c0_i32, %c0_i32_0 : i32, i32
  }
  func.func @transform_14(%arg0: i32) -> (i32, i32) {
    %c0_i32 = arith.constant 0 : i32
    %c0_i32_0 = arith.constant 0 : i32
    %c0_i32_1 = arith.constant 0 : i32
    return %c0_i32, %c0_i32_0 : i32, i32
  }
  func.func @transform_15(%arg0: i32) -> (i32, i32, i32) {
    %c0_i32 = arith.constant 0 : i32
    %c0_i32_0 = arith.constant 0 : i32
    %c0_i32_1 = arith.constant 0 : i32
    %c0_i32_2 = arith.constant 0 : i32
    return %c0_i32, %c0_i32_0, %c0_i32_1 : i32, i32, i32
  }
  func.func @transform_16(%arg0: i32) -> (i32, i32) {
    %c0_i32 = arith.constant 0 : i32
    %c0_i32_0 = arith.constant 0 : i32
    %c0_i32_1 = arith.constant 0 : i32
    return %c0_i32, %c0_i32_0 : i32, i32
  }
  func.func @transform_17(%arg0: i32) -> (i32, i32) {
    %c0_i32 = arith.constant 0 : i32
    %c0_i32_0 = arith.constant 0 : i32
    %c0_i32_1 = arith.constant 0 : i32
    return %c0_i32, %c0_i32_0 : i32, i32
  }
  func.func @transform_18(%arg0: i32) -> (i32, i32) {
    %c0_i32 = arith.constant 0 : i32
    %c0_i32_0 = arith.constant 0 : i32
    %c0_i32_1 = arith.constant 0 : i32
    return %c0_i32, %c0_i32_0 : i32, i32
  }
  func.func @transform_19(%arg0: i32) -> (i32, i32, i32) {
    %c0_i32 = arith.constant 0 : i32
    %c0_i32_0 = arith.constant 0 : i32
    %c0_i32_1 = arith.constant 0 : i32
    return %arg0, %c0_i32, %c0_i32_0 : i32, i32, i32
  }
}

</mosaic_0001>

<llo_original>
// kernel: mobilenetv2_client_forward.1
$region0: #{mobilenetv2_client_forward.1}
  #allocation0 [shape = 'u32[]', space=smem, size = 0x4, offset = 0x4, fixed_abs, tag = 'smem constant byte address 0x4 - core index']
  #allocation1 [shape = 'u32[144,128]{1,0:T(1,128)}', space=vmem, size = 0x12000, scoped, tag = 'internal scratch']
  %s0 = inlined_call_operand.vmem [shape: f32[2,102,27], index: 0, kind: input, shape index: {}]
  %s1 = inlined_call_operand.vmem [shape: bf16[27,32], index: 1, kind: input, shape index: {}]
  %s2 = inlined_call_operand.vmem [shape: f32[1,32], index: 2, kind: input, shape index: {}]
  %s3 = inlined_call_operand.vmem [shape: f32[9,1,32], index: 3, kind: input, shape index: {}]
  %s4 = inlined_call_operand.vmem [shape: f32[1,32], index: 4, kind: input, shape index: {}]
  %s5 = inlined_call_operand.vmem [shape: bf16[32,16], index: 5, kind: input, shape index: {}]
  %s6 = inlined_call_operand.vmem [shape: f32[1,16], index: 6, kind: input, shape index: {}]
  %s7 = inlined_call_operand.vmem [shape: bf16[16,96], index: 7, kind: input, shape index: {}]
  %s8 = inlined_call_operand.vmem [shape: f32[1,96], index: 8, kind: input, shape index: {}]
  %s9 = inlined_call_operand.vmem [shape: f32[9,1,96], index: 9, kind: input, shape index: {}]
  %s10 = inlined_call_operand.vmem [shape: f32[1,96], index: 10, kind: input, shape index: {}]
  %s11 = inlined_call_operand.vmem [shape: bf16[96,24], index: 11, kind: input, shape index: {}]
  %s12 = inlined_call_operand.vmem [shape: f32[1,24], index: 12, kind: input, shape index: {}]
  %s13 = inlined_call_operand.vmem [shape: bf16[24,144], index: 13, kind: input, shape index: {}]
  %s14 = inlined_call_operand.vmem [shape: f32[1,144], index: 14, kind: input, shape index: {}]
  %s15 = inlined_call_operand.vmem [shape: f32[9,1,144], index: 15, kind: input, shape index: {}]
  %s16 = inlined_call_operand.vmem [shape: f32[1,144], index: 16, kind: input, shape index: {}]
  %s17 = inlined_call_operand.vmem [shape: bf16[144,24], index: 17, kind: input, shape index: {}]
  %s18 = inlined_call_operand.vmem [shape: f32[1,24], index: 18, kind: input, shape index: {}]
  %s19 = inlined_call_operand.hbm [shape: f32[2,16,24], index: 19, kind: output, shape index: {}]
  %s20 = sld [smem:[#allocation0]]
  $region109: #{mobilenetv2_client_forward.1} parent=0
    _
  %s22 = ssub.s32 1, %s20
  %s23 = scalar_select 0, %s22, %s20
  $region1: #{mobilenetv2_client_forward.1} parent=0
    #allocation2 [shape = 'u8[16384]{0}', space=vmem, size = 0x4000, scoped, tag = 'output window, operand 0']
    #allocation3 [shape = 's32[2]{0}', space=sflag, size = 0x8, scoped, tag = 'scoped memory for mobilenetv2_client_forward.1']
    %24 = vsyncpa [#allocation3], 0
    %s25 = scalar_lea.sflag [#allocation3], 1
    %26 = vsyncpa %s25, 0
    loop: start=0, step=1, limit=4
    $region2: #{mobilenetv2_client_forward.1} parent=1 // loop_pre_header
      _
    $region3: #{mobilenetv2_client_forward.1} parent=1 // loop_header
      %s28 = sphi 0, %s32
      %p29 = scmp.ge.s32.totalorder %s28, 4
      %s38 = sphi 0, %s40
      %s41 = sphi 0, %s38
      %s42 = sphi 0, %s41
      %s58 = sphi 0, %s42
      %s62 = sphi 0, %s62
      %s64 = sphi 0, %s62
      %s65 = sphi 0, %s64
      %s79 = sphi 0, %s65
      %s83 = sphi 0, %s83
      %s85 = sphi 0, %s83
      %s86 = sphi 0, %s85
      %s100 = sphi 0, %s86
      %s104 = sphi 0, %s104
      %s106 = sphi 0, %s104
      %s107 = sphi 0, %s106
      %s121 = sphi 0, %s107
      %s125 = sphi 0, %s125
      %s127 = sphi 0, %s125
      %s128 = sphi 0, %s127
      %s142 = sphi 0, %s128
      %s146 = sphi 0, %s146
      %s148 = sphi 0, %s146
      %s149 = sphi 0, %s148
      %s163 = sphi 0, %s149
      %s167 = sphi 0, %s167
      %s169 = sphi 0, %s167
      %s170 = sphi 0, %s169
      %s184 = sphi 0, %s170
      %s188 = sphi 0, %s188
      %s190 = sphi 0, %s188
      %s191 = sphi 0, %s190
      %s205 = sphi 0, %s191
      %s209 = sphi 0, %s209
      %s211 = sphi 0, %s209
      %s212 = sphi 0, %s211
      %s226 = sphi 0, %s212
      %s230 = sphi 0, %s230
      %s232 = sphi 0, %s230
      %s233 = sphi 0, %s232
      %s247 = sphi 0, %s233
      %s251 = sphi 0, %s251
      %s253 = sphi 0, %s251
      %s254 = sphi 0, %s253
      %s268 = sphi 0, %s254
      %s272 = sphi 0, %s272
      %s274 = sphi 0, %s272
      %s275 = sphi 0, %s274
      %s289 = sphi 0, %s275
      %s293 = sphi 0, %s293
      %s295 = sphi 0, %s293
      %s296 = sphi 0, %s295
      %s310 = sphi 0, %s296
      %s314 = sphi 0, %s314
      %s316 = sphi 0, %s314
      %s317 = sphi 0, %s316
      %s331 = sphi 0, %s317
      %s335 = sphi 0, %s335
      %s337 = sphi 0, %s335
      %s338 = sphi 0, %s337
      %s352 = sphi 0, %s338
      %s356 = sphi 0, %s356
      %s358 = sphi 0, %s356
      %s359 = sphi 0, %s358
      %s373 = sphi 0, %s359
      %s377 = sphi 0, %s377
      %s379 = sphi 0, %s377
      %s380 = sphi 0, %s379
      %s394 = sphi 0, %s380
      %s398 = sphi 0, %s398
      %s400 = sphi 0, %s398
      %s401 = sphi 0, %s400
      %s415 = sphi 0, %s401
      %s419 = sphi 0, %s419
      %s421 = sphi 0, %s419
      %s422 = sphi 0, %s421
      %s436 = sphi 0, %s422
      %s442 = sphi 0, %s444
      %s445 = sphi 0, %s442
      %s446 = sphi 0, %s445
      %s462 = sphi 0, %s446
    $region4: #{mobilenetv2_client_forward.1} parent=1 // loop_header_branch
      %31 = sbr.rel (%p29) target = $region8
    $region5: #{mobilenetv2_client_forward.1} parent=1 // loop_body
      %s33 = ssub.s32 %s28, 1
      %s34 = ssub.s32 %s28, 2
      %s35 = sadd.s32 %s28, 1
      %s36 = ssub.s32 %s28, %s35
      %p37 = scmp.eq.s32.totalorder %s36, 0
      %s39 = sadd.s32 %s38, 1
      %s40 = scalar_select %p37, %s38, %s39
      %p43 = pneg %p37
      %p44 = scmp.eq.s32.totalorder %s28, 1
      %p45 = por %p43, %p44
      %p46 = scmp.ne.s32.totalorder %s38, %s41
      %p47 = scmp.eq.s32.totalorder %s28, 0
      %p48 = por %p46, %p47
      %p49 = scmp.ne.s32.totalorder %s38, %s41
      %p50 = scmp.eq.s32.totalorder %s33, 1
      %p51 = por %p49, %p50
      %p52 = scmp.ne.s32.totalorder %s41, %s42
      %p53 = scmp.eq.s32.totalorder %s33, 0
      %p54 = por %p52, %p53
      %p55 = scmp.ne.s32.totalorder %s41, %s42
      %p56 = scmp.eq.s32.totalorder %s34, 1
      %p57 = por %p55, %p56
      %p59 = scmp.ne.s32.totalorder %s42, %s58
      %p60 = scmp.eq.s32.totalorder %s34, 0
      %p61 = por %p59, %p60
      %s63 = sadd.s32 %s62, 1
      %p66 = scmp.eq.s32.totalorder %s28, 1
      %p67 = scmp.ne.s32.totalorder %s62, %s64
      %p68 = scmp.eq.s32.totalorder %s28, 0
      %p69 = por %p67, %p68
      %p70 = scmp.ne.s32.totalorder %s62, %s64
      %p71 = scmp.eq.s32.totalorder %s33, 1
      %p72 = por %p70, %p71
      %p73 = scmp.ne.s32.totalorder %s64, %s65
      %p74 = scmp.eq.s32.totalorder %s33, 0
      %p75 = por %p73, %p74
      %p76 = scmp.ne.s32.totalorder %s64, %s65
      %p77 = scmp.eq.s32.totalorder %s34, 1
      %p78 = por %p76, %p77
      %p80 = scmp.ne.s32.totalorder %s65, %s79
      %p81 = scmp.eq.s32.totalorder %s34, 0
      %p82 = por %p80, %p81
      %s84 = sadd.s32 %s83, 1
      %p87 = scmp.eq.s32.totalorder %s28, 1
      %p88 = scmp.ne.s32.totalorder %s83, %s85
      %p89 = scmp.eq.s32.totalorder %s28, 0
      %p90 = por %p88, %p89
      %p91 = scmp.ne.s32.totalorder %s83, %s85
      %p92 = scmp.eq.s32.totalorder %s33, 1
      %p93 = por %p91, %p92
      %p94 = scmp.ne.s32.totalorder %s85, %s86
      %p95 = scmp.eq.s32.totalorder %s33, 0
      %p96 = por %p94, %p95
      %p97 = scmp.ne.s32.totalorder %s85, %s86
      %p98 = scmp.eq.s32.totalorder %s34, 1
      %p99 = por %p97, %p98
      %p101 = scmp.ne.s32.totalorder %s86, %s100
      %p102 = scmp.eq.s32.totalorder %s34, 0
      %p103 = por %p101, %p102
      %s105 = sadd.s32 %s104, 1
      %p108 = scmp.eq.s32.totalorder %s28, 1
      %p109 = scmp.ne.s32.totalorder %s104, %s106
      %p110 = scmp.eq.s32.totalorder %s28, 0
      %p111 = por %p109, %p110
      %p112 = scmp.ne.s32.totalorder %s104, %s106
      %p113 = scmp.eq.s32.totalorder %s33, 1
      %p114 = por %p112, %p113
      %p115 = scmp.ne.s32.totalorder %s106, %s107
      %p116 = scmp.eq.s32.totalorder %s33, 0
      %p117 = por %p115, %p116
      %p118 = scmp.ne.s32.totalorder %s106, %s107
      %p119 = scmp.eq.s32.totalorder %s34, 1
      %p120 = por %p118, %p119
      %p122 = scmp.ne.s32.totalorder %s107, %s121
      %p123 = scmp.eq.s32.totalorder %s34, 0
      %p124 = por %p122, %p123
      %s126 = sadd.s32 %s125, 1
      %p129 = scmp.eq.s32.totalorder %s28, 1
      %p130 = scmp.ne.s32.totalorder %s125, %s127
      %p131 = scmp.eq.s32.totalorder %s28, 0
      %p132 = por %p130, %p131
      %p133 = scmp.ne.s32.totalorder %s125, %s127
      %p134 = scmp.eq.s32.totalorder %s33, 1
      %p135 = por %p133, %p134
      %p136 = scmp.ne.s32.totalorder %s127, %s128
      %p137 = scmp.eq.s32.totalorder %s33, 0
      %p138 = por %p136, %p137
      %p139 = scmp.ne.s32.totalorder %s127, %s128
      %p140 = scmp.eq.s32.totalorder %s34, 1
      %p141 = por %p139, %p140
      %p143 = scmp.ne.s32.totalorder %s128, %s142
      %p144 = scmp.eq.s32.totalorder %s34, 0
      %p145 = por %p143, %p144
      %s147 = sadd.s32 %s146, 1
      %p150 = scmp.eq.s32.totalorder %s28, 1
      %p151 = scmp.ne.s32.totalorder %s146, %s148
      %p152 = scmp.eq.s32.totalorder %s28, 0
      %p153 = por %p151, %p152
      %p154 = scmp.ne.s32.totalorder %s146, %s148
      %p155 = scmp.eq.s32.totalorder %s33, 1
      %p156 = por %p154, %p155
      %p157 = scmp.ne.s32.totalorder %s148, %s149
      %p158 = scmp.eq.s32.totalorder %s33, 0
      %p159 = por %p157, %p158
      %p160 = scmp.ne.s32.totalorder %s148, %s149
      %p161 = scmp.eq.s32.totalorder %s34, 1
      %p162 = por %p160, %p161
      %p164 = scmp.ne.s32.totalorder %s149, %s163
      %p165 = scmp.eq.s32.totalorder %s34, 0
      %p166 = por %p164, %p165
      %s168 = sadd.s32 %s167, 1
      %p171 = scmp.eq.s32.totalorder %s28, 1
      %p172 = scmp.ne.s32.totalorder %s167, %s169
      %p173 = scmp.eq.s32.totalorder %s28, 0
      %p174 = por %p172, %p173
      %p175 = scmp.ne.s32.totalorder %s167, %s169
      %p176 = scmp.eq.s32.totalorder %s33, 1
      %p177 = por %p175, %p176
      %p178 = scmp.ne.s32.totalorder %s169, %s170
      %p179 = scmp.eq.s32.totalorder %s33, 0
      %p180 = por %p178, %p179
      %p181 = scmp.ne.s32.totalorder %s169, %s170
      %p182 = scmp.eq.s32.totalorder %s34, 1
      %p183 = por %p181, %p182
      %p185 = scmp.ne.s32.totalorder %s170, %s184
      %p186 = scmp.eq.s32.totalorder %s34, 0
      %p187 = por %p185, %p186
      %s189 = sadd.s32 %s188, 1
      %p192 = scmp.eq.s32.totalorder %s28, 1
      %p193 = scmp.ne.s32.totalorder %s188, %s190
      %p194 = scmp.eq.s32.totalorder %s28, 0
      %p195 = por %p193, %p194
      %p196 = scmp.ne.s32.totalorder %s188, %s190
      %p197 = scmp.eq.s32.totalorder %s33, 1
      %p198 = por %p196, %p197
      %p199 = scmp.ne.s32.totalorder %s190, %s191
      %p200 = scmp.eq.s32.totalorder %s33, 0
      %p201 = por %p199, %p200
      %p202 = scmp.ne.s32.totalorder %s190, %s191
      %p203 = scmp.eq.s32.totalorder %s34, 1
      %p204 = por %p202, %p203
      %p206 = scmp.ne.s32.totalorder %s191, %s205
      %p207 = scmp.eq.s32.totalorder %s34, 0
      %p208 = por %p206, %p207
      %s210 = sadd.s32 %s209, 1
      %p213 = scmp.eq.s32.totalorder %s28, 1
      %p214 = scmp.ne.s32.totalorder %s209, %s211
      %p215 = scmp.eq.s32.totalorder %s28, 0
      %p216 = por %p214, %p215
      %p217 = scmp.ne.s32.totalorder %s209, %s211
      %p218 = scmp.eq.s32.totalorder %s33, 1
      %p219 = por %p217, %p218
      %p220 = scmp.ne.s32.totalorder %s211, %s212
      %p221 = scmp.eq.s32.totalorder %s33, 0
      %p222 = por %p220, %p221
      %p223 = scmp.ne.s32.totalorder %s211, %s212
      %p224 = scmp.eq.s32.totalorder %s34, 1
      %p225 = por %p223, %p224
      %p227 = scmp.ne.s32.totalorder %s212, %s226
      %p228 = scmp.eq.s32.totalorder %s34, 0
      %p229 = por %p227, %p228
      %s231 = sadd.s32 %s230, 1
      %p234 = scmp.eq.s32.totalorder %s28, 1
      %p235 = scmp.ne.s32.totalorder %s230, %s232
      %p236 = scmp.eq.s32.totalorder %s28, 0
      %p237 = por %p235, %p236
      %p238 = scmp.ne.s32.totalorder %s230, %s232
      %p239 = scmp.eq.s32.totalorder %s33, 1
      %p240 = por %p238, %p239
      %p241 = scmp.ne.s32.totalorder %s232, %s233
      %p242 = scmp.eq.s32.totalorder %s33, 0
      %p243 = por %p241, %p242
      %p244 = scmp.ne.s32.totalorder %s232, %s233
      %p245 = scmp.eq.s32.totalorder %s34, 1
      %p246 = por %p244, %p245
      %p248 = scmp.ne.s32.totalorder %s233, %s247
      %p249 = scmp.eq.s32.totalorder %s34, 0
      %p250 = por %p248, %p249
      %s252 = sadd.s32 %s251, 1
      %p255 = scmp.eq.s32.totalorder %s28, 1
      %p256 = scmp.ne.s32.totalorder %s251, %s253
      %p257 = scmp.eq.s32.totalorder %s28, 0
      %p258 = por %p256, %p257
      %p259 = scmp.ne.s32.totalorder %s251, %s253
      %p260 = scmp.eq.s32.totalorder %s33, 1
      %p261 = por %p259, %p260
      %p262 = scmp.ne.s32.totalorder %s253, %s254
      %p263 = scmp.eq.s32.totalorder %s33, 0
      %p264 = por %p262, %p263
      %p265 = scmp.ne.s32.totalorder %s253, %s254
      %p266 = scmp.eq.s32.totalorder %s34, 1
      %p267 = por %p265, %p266
      %p269 = scmp.ne.s32.totalorder %s254, %s268
      %p270 = scmp.eq.s32.totalorder %s34, 0
      %p271 = por %p269, %p270
      %s273 = sadd.s32 %s272, 1
      %p276 = scmp.eq.s32.totalorder %s28, 1
      %p277 = scmp.ne.s32.totalorder %s272, %s274
      %p278 = scmp.eq.s32.totalorder %s28, 0
      %p279 = por %p277, %p278
      %p280 = scmp.ne.s32.totalorder %s272, %s274
      %p281 = scmp.eq.s32.totalorder %s33, 1
      %p282 = por %p280, %p281
      %p283 = scmp.ne.s32.totalorder %s274, %s275
      %p284 = scmp.eq.s32.totalorder %s33, 0
      %p285 = por %p283, %p284
      %p286 = scmp.ne.s32.totalorder %s274, %s275
      %p287 = scmp.eq.s32.totalorder %s34, 1
      %p288 = por %p286, %p287
      %p290 = scmp.ne.s32.totalorder %s275, %s289
      %p291 = scmp.eq.s32.totalorder %s34, 0
      %p292 = por %p290, %p291
      %s294 = sadd.s32 %s293, 1
      %p297 = scmp.eq.s32.totalorder %s28, 1
      %p298 = scmp.ne.s32.totalorder %s293, %s295
      %p299 = scmp.eq.s32.totalorder %s28, 0
      %p300 = por %p298, %p299
      %p301 = scmp.ne.s32.totalorder %s293, %s295
      %p302 = scmp.eq.s32.totalorder %s33, 1
      %p303 = por %p301, %p302
      %p304 = scmp.ne.s32.totalorder %s295, %s296
      %p305 = scmp.eq.s32.totalorder %s33, 0
      %p306 = por %p304, %p305
      %p307 = scmp.ne.s32.totalorder %s295, %s296
      %p308 = scmp.eq.s32.totalorder %s34, 1
      %p309 = por %p307, %p308
      %p311 = scmp.ne.s32.totalorder %s296, %s310
      %p312 = scmp.eq.s32.totalorder %s34, 0
      %p313 = por %p311, %p312
      %s315 = sadd.s32 %s314, 1
      %p318 = scmp.eq.s32.totalorder %s28, 1
      %p319 = scmp.ne.s32.totalorder %s314, %s316
      %p320 = scmp.eq.s32.totalorder %s28, 0
      %p321 = por %p319, %p320
      %p322 = scmp.ne.s32.totalorder %s314, %s316
      %p323 = scmp.eq.s32.totalorder %s33, 1
      %p324 = por %p322, %p323
      %p325 = scmp.ne.s32.totalorder %s316, %s317
      %p326 = scmp.eq.s32.totalorder %s33, 0
      %p327 = por %p325, %p326
      %p328 = scmp.ne.s32.totalorder %s316, %s317
      %p329 = scmp.eq.s32.totalorder %s34, 1
      %p330 = por %p328, %p329
      %p332 = scmp.ne.s32.totalorder %s317, %s331
      %p333 = scmp.eq.s32.totalorder %s34, 0
      %p334 = por %p332, %p333
      %s336 = sadd.s32 %s335, 1
      %p339 = scmp.eq.s32.totalorder %s28, 1
      %p340 = scmp.ne.s32.totalorder %s335, %s337
      %p341 = scmp.eq.s32.totalorder %s28, 0
      %p342 = por %p340, %p341
      %p343 = scmp.ne.s32.totalorder %s335, %s337
      %p344 = scmp.eq.s32.totalorder %s33, 1
      %p345 = por %p343, %p344
      %p346 = scmp.ne.s32.totalorder %s337, %s338
      %p347 = scmp.eq.s32.totalorder %s33, 0
      %p348 = por %p346, %p347
      %p349 = scmp.ne.s32.totalorder %s337, %s338
      %p350 = scmp.eq.s32.totalorder %s34, 1
      %p351 = por %p349, %p350
      %p353 = scmp.ne.s32.totalorder %s338, %s352
      %p354 = scmp.eq.s32.totalorder %s34, 0
      %p355 = por %p353, %p354
      %s357 = sadd.s32 %s356, 1
      %p360 = scmp.eq.s32.totalorder %s28, 1
      %p361 = scmp.ne.s32.totalorder %s356, %s358
      %p362 = scmp.eq.s32.totalorder %s28, 0
      %p363 = por %p361, %p362
      %p364 = scmp.ne.s32.totalorder %s356, %s358
      %p365 = scmp.eq.s32.totalorder %s33, 1
      %p366 = por %p364, %p365
      %p367 = scmp.ne.s32.totalorder %s358, %s359
      %p368 = scmp.eq.s32.totalorder %s33, 0
      %p369 = por %p367, %p368
      %p370 = scmp.ne.s32.totalorder %s358, %s359
      %p371 = scmp.eq.s32.totalorder %s34, 1
      %p372 = por %p370, %p371
      %p374 = scmp.ne.s32.totalorder %s359, %s373
      %p375 = scmp.eq.s32.totalorder %s34, 0
      %p376 = por %p374, %p375
      %s378 = sadd.s32 %s377, 1
      %p381 = scmp.eq.s32.totalorder %s28, 1
      %p382 = scmp.ne.s32.totalorder %s377, %s379
      %p383 = scmp.eq.s32.totalorder %s28, 0
      %p384 = por %p382, %p383
      %p385 = scmp.ne.s32.totalorder %s377, %s379
      %p386 = scmp.eq.s32.totalorder %s33, 1
      %p387 = por %p385, %p386
      %p388 = scmp.ne.s32.totalorder %s379, %s380
      %p389 = scmp.eq.s32.totalorder %s33, 0
      %p390 = por %p388, %p389
      %p391 = scmp.ne.s32.totalorder %s379, %s380
      %p392 = scmp.eq.s32.totalorder %s34, 1
      %p393 = por %p391, %p392
      %p395 = scmp.ne.s32.totalorder %s380, %s394
      %p396 = scmp.eq.s32.totalorder %s34, 0
      %p397 = por %p395, %p396
      %s399 = sadd.s32 %s398, 1
      %p402 = scmp.eq.s32.totalorder %s28, 1
      %p403 = scmp.ne.s32.totalorder %s398, %s400
      %p404 = scmp.eq.s32.totalorder %s28, 0
      %p405 = por %p403, %p404
      %p406 = scmp.ne.s32.totalorder %s398, %s400
      %p407 = scmp.eq.s32.totalorder %s33, 1
      %p408 = por %p406, %p407
      %p409 = scmp.ne.s32.totalorder %s400, %s401
      %p410 = scmp.eq.s32.totalorder %s33, 0
      %p411 = por %p409, %p410
      %p412 = scmp.ne.s32.totalorder %s400, %s401
      %p413 = scmp.eq.s32.totalorder %s34, 1
      %p414 = por %p412, %p413
      %p416 = scmp.ne.s32.totalorder %s401, %s415
      %p417 = scmp.eq.s32.totalorder %s34, 0
      %p418 = por %p416, %p417
      %s420 = sadd.s32 %s419, 1
      %p423 = scmp.eq.s32.totalorder %s28, 1
      %p424 = scmp.ne.s32.totalorder %s419, %s421
      %p425 = scmp.eq.s32.totalorder %s28, 0
      %p426 = por %p424, %p425
      %p427 = scmp.ne.s32.totalorder %s419, %s421
      %p428 = scmp.eq.s32.totalorder %s33, 1
      %p429 = por %p427, %p428
      %p430 = scmp.ne.s32.totalorder %s421, %s422
      %p431 = scmp.eq.s32.totalorder %s33, 0
      %p432 = por %p430, %p431
      %p433 = scmp.ne.s32.totalorder %s421, %s422
      %p434 = scmp.eq.s32.totalorder %s34, 1
      %p435 = por %p433, %p434
      %p437 = scmp.ne.s32.totalorder %s422, %s436
      %p438 = scmp.eq.s32.totalorder %s34, 0
      %p439 = por %p437, %p438
      %s440 = ssub.s32 %s28, %s35
      %p441 = scmp.eq.s32.totalorder %s440, 0
      %s443 = sadd.s32 %s442, 1
      %s444 = scalar_select %p441, %s442, %s443
      %p447 = pneg %p441
      %p448 = scmp.eq.s32.totalorder %s28, 1
      %p449 = por %p447, %p448
      %p450 = scmp.ne.s32.totalorder %s442, %s445
      %p451 = scmp.eq.s32.totalorder %s28, 0
      %p452 = por %p450, %p451
      %p453 = scmp.ne.s32.totalorder %s442, %s445
      %p454 = scmp.eq.s32.totalorder %s33, 1
      %p455 = por %p453, %p454
      %p456 = scmp.ne.s32.totalorder %s445, %s446
      %p457 = scmp.eq.s32.totalorder %s33, 0
      %p458 = por %p456, %p457
      %p459 = scmp.ne.s32.totalorder %s445, %s446
      %p460 = scmp.eq.s32.totalorder %s34, 1
      %p461 = por %p459, %p460
      %p463 = scmp.ne.s32.totalorder %s446, %s462
      %p464 = scmp.eq.s32.totalorder %s34, 0
      %p465 = por %p463, %p464
      %p466 = scmp.le.s32.totalorder 1, %s28
      %p467 = scmp.lt.s32.totalorder %s28, 3
      %p468 = pnand %p466, %p467
      %p469 = pneg %p468
      // Predicated region
      $region9: #{mobilenetv2_client_forward.1} parent=5 // pred_check
        _
      $region10: #{mobilenetv2_client_forward.1} parent=5 // pred_check_branch
        %471 = sbr.rel (%p468) target = $region12
      $region11: #{mobilenetv2_client_forward.1} parent=5 // pred_region
        %s472 = ssub.s32 %s28, 1
        // Predicated region
        $region13: #{mobilenetv2_client_forward.1} parent=11 // pred_check
          %p473 = pneg %p75
        $region14: #{mobilenetv2_client_forward.1} parent=11 // pred_check_branch
          %475 = sbr.rel (%p473) target = $region16
        $region15: #{mobilenetv2_client_forward.1} parent=11 // pred_region
          _
        $region16: #{mobilenetv2_client_forward.1} parent=11 // pred_fallthru
          _
        // Predicated region
        $region17: #{mobilenetv2_client_forward.1} parent=11 // pred_check
          %p476 = pneg %p96
        $region18: #{mobilenetv2_client_forward.1} parent=11 // pred_check_branch
          %478 = sbr.rel (%p476) target = $region20
        $region19: #{mobilenetv2_client_forward.1} parent=11 // pred_region
          _
        $region20: #{mobilenetv2_client_forward.1} parent=11 // pred_fallthru
          _
        // Predicated region
        $region21: #{mobilenetv2_client_forward.1} parent=11 // pred_check
          %p479 = pneg %p117
        $region22: #{mobilenetv2_client_forward.1} parent=11 // pred_check_branch
          %481 = sbr.rel (%p479) target = $region24
        $region23: #{mobilenetv2_client_forward.1} parent=11 // pred_region
          _
        $region24: #{mobilenetv2_client_forward.1} parent=11 // pred_fallthru
          _
        // Predicated region
        $region25: #{mobilenetv2_client_forward.1} parent=11 // pred_check
          %p482 = pneg %p138
        $region26: #{mobilenetv2_client_forward.1} parent=11 // pred_check_branch
          %484 = sbr.rel (%p482) target = $region28
        $region27: #{mobilenetv2_client_forward.1} parent=11 // pred_region
          _
        $region28: #{mobilenetv2_client_forward.1} parent=11 // pred_fallthru
          _
        // Predicated region
        $region29: #{mobilenetv2_client_forward.1} parent=11 // pred_check
          %p485 = pneg %p159
        $region30: #{mobilenetv2_client_forward.1} parent=11 // pred_check_branch
          %487 = sbr.rel (%p485) target = $region32
        $region31: #{mobilenetv2_client_forward.1} parent=11 // pred_region
          _
        $region32: #{mobilenetv2_client_forward.1} parent=11 // pred_fallthru
          _
        // Predicated region
        $region33: #{mobilenetv2_client_forward.1} parent=11 // pred_check
          %p488 = pneg %p180
        $region34: #{mobilenetv2_client_forward.1} parent=11 // pred_check_branch
          %490 = sbr.rel (%p488) target = $region36
        $region35: #{mobilenetv2_client_forward.1} parent=11 // pred_region
          _
        $region36: #{mobilenetv2_client_forward.1} parent=11 // pred_fallthru
          _
        // Predicated region
        $region37: #{mobilenetv2_client_forward.1} parent=11 // pred_check
          %p491 = pneg %p201
        $region38: #{mobilenetv2_client_forward.1} parent=11 // pred_check_branch
          %493 = sbr.rel (%p491) target = $region40
        $region39: #{mobilenetv2_client_forward.1} parent=11 // pred_region
          _
        $region40: #{mobilenetv2_client_forward.1} parent=11 // pred_fallthru
          _
        // Predicated region
        $region41: #{mobilenetv2_client_forward.1} parent=11 // pred_check
          %p494 = pneg %p222
        $region42: #{mobilenetv2_client_forward.1} parent=11 // pred_check_branch
          %496 = sbr.rel (%p494) target = $region44
        $region43: #{mobilenetv2_client_forward.1} parent=11 // pred_region
          _
        $region44: #{mobilenetv2_client_forward.1} parent=11 // pred_fallthru
          _
        // Predicated region
        $region45: #{mobilenetv2_client_forward.1} parent=11 // pred_check
          %p497 = pneg %p243
        $region46: #{mobilenetv2_client_forward.1} parent=11 // pred_check_branch
          %499 = sbr.rel (%p497) target = $region48
        $region47: #{mobilenetv2_client_forward.1} parent=11 // pred_region
          _
        $region48: #{mobilenetv2_client_forward.1} parent=11 // pred_fallthru
          _
        // Predicated region
        $region49: #{mobilenetv2_client_forward.1} parent=11 // pred_check
          %p500 = pneg %p264
        $region50: #{mobilenetv2_client_forward.1} parent=11 // pred_check_branch
          %502 = sbr.rel (%p500) target = $region52
        $region51: #{mobilenetv2_client_forward.1} parent=11 // pred_region
          _
        $region52: #{mobilenetv2_client_forward.1} parent=11 // pred_fallthru
          _
        // Predicated region
        $region53: #{mobilenetv2_client_forward.1} parent=11 // pred_check
          %p503 = pneg %p285
        $region54: #{mobilenetv2_client_forward.1} parent=11 // pred_check_branch
          %505 = sbr.rel (%p503) target = $region56
        $region55: #{mobilenetv2_client_forward.1} parent=11 // pred_region
          _
        $region56: #{mobilenetv2_client_forward.1} parent=11 // pred_fallthru
          _
        // Predicated region
        $region57: #{mobilenetv2_client_forward.1} parent=11 // pred_check
          %p506 = pneg %p306
        $region58: #{mobilenetv2_client_forward.1} parent=11 // pred_check_branch
          %508 = sbr.rel (%p506) target = $region60
        $region59: #{mobilenetv2_client_forward.1} parent=11 // pred_region
          _
        $region60: #{mobilenetv2_client_forward.1} parent=11 // pred_fallthru
          _
        // Predicated region
        $region61: #{mobilenetv2_client_forward.1} parent=11 // pred_check
          %p509 = pneg %p327
        $region62: #{mobilenetv2_client_forward.1} parent=11 // pred_check_branch
          %511 = sbr.rel (%p509) target = $region64
        $region63: #{mobilenetv2_client_forward.1} parent=11 // pred_region
          _
        $region64: #{mobilenetv2_client_forward.1} parent=11 // pred_fallthru
          _
        // Predicated region
        $region65: #{mobilenetv2_client_forward.1} parent=11 // pred_check
          %p512 = pneg %p348
        $region66: #{mobilenetv2_client_forward.1} parent=11 // pred_check_branch
          %514 = sbr.rel (%p512) target = $region68
        $region67: #{mobilenetv2_client_forward.1} parent=11 // pred_region
          _
        $region68: #{mobilenetv2_client_forward.1} parent=11 // pred_fallthru
          _
        // Predicated region
        $region69: #{mobilenetv2_client_forward.1} parent=11 // pred_check
          %p515 = pneg %p369
        $region70: #{mobilenetv2_client_forward.1} parent=11 // pred_check_branch
          %517 = sbr.rel (%p515) target = $region72
        $region71: #{mobilenetv2_client_forward.1} parent=11 // pred_region
          _
        $region72: #{mobilenetv2_client_forward.1} parent=11 // pred_fallthru
          _
        // Predicated region
        $region73: #{mobilenetv2_client_forward.1} parent=11 // pred_check
          %p518 = pneg %p390
        $region74: #{mobilenetv2_client_forward.1} parent=11 // pred_check_branch
          %520 = sbr.rel (%p518) target = $region76
        $region75: #{mobilenetv2_client_forward.1} parent=11 // pred_region
          _
        $region76: #{mobilenetv2_client_forward.1} parent=11 // pred_fallthru
          _
        // Predicated region
        $region77: #{mobilenetv2_client_forward.1} parent=11 // pred_check
          %p521 = pneg %p411
        $region78: #{mobilenetv2_client_forward.1} parent=11 // pred_check_branch
          %523 = sbr.rel (%p521) target = $region80
        $region79: #{mobilenetv2_client_forward.1} parent=11 // pred_region
          _
        $region80: #{mobilenetv2_client_forward.1} parent=11 // pred_fallthru
          _
        // Predicated region
        $region81: #{mobilenetv2_client_forward.1} parent=11 // pred_check
          %p524 = pneg %p432
        $region82: #{mobilenetv2_client_forward.1} parent=11 // pred_check_branch
          %526 = sbr.rel (%p524) target = $region84
        $region83: #{mobilenetv2_client_forward.1} parent=11 // pred_region
          _
        $region84: #{mobilenetv2_client_forward.1} parent=11 // pred_fallthru
          _
      $region12: #{mobilenetv2_client_forward.1} parent=5 // pred_fallthru
        _
      %p527 = scmp.lt.s32.totalorder %s28, 2
      // Predicated region
      $region85: #{mobilenetv2_client_forward.1} parent=5 // pred_check
        %p528 = pneg %p527
      $region86: #{mobilenetv2_client_forward.1} parent=5 // pred_check_branch
        %530 = sbr.rel (%p528) target = $region88
      $region87: #{mobilenetv2_client_forward.1} parent=5 // pred_region
        // Predicated region
        $region89: #{mobilenetv2_client_forward.1} parent=87 // pred_check
          %p531 = pneg %p48
        $region90: #{mobilenetv2_client_forward.1} parent=87 // pred_check_branch
          %533 = sbr.rel (%p531) target = $region92
        $region91: #{mobilenetv2_client_forward.1} parent=87 // pred_region
          %p534 = scmp.lt.s32.totalorder %s28, 1
          %s535 = scalar_select %p534, %s28, 1
          %s536 = smul.addr %s535, 13
          %s537 = smul.addr %s536, 8
          %s538 = scalar_lea.vmem %s0, %s537
        $region92: #{mobilenetv2_client_forward.1} parent=87 // pred_fallthru
          _
      $region88: #{mobilenetv2_client_forward.1} parent=5 // pred_fallthru
        _
      %p539 = scmp.le.s32.totalorder 1, %s28
      %p540 = scmp.lt.s32.totalorder %s28, 3
      %p541 = pnand %p539, %p540
      %p542 = pneg %p541
      // Predicated region
      $region93: #{mobilenetv2_client_forward.1} parent=5 // pred_check
        _
      $region94: #{mobilenetv2_client_forward.1} parent=5 // pred_check_branch
        %544 = sbr.rel (%p541) target = $region96
      $region95: #{mobilenetv2_client_forward.1} parent=5 // pred_region
        %s545 = ssub.s32 %s28, 1
        %p546 = scmp.lt.s32.totalorder %s33, 1
        %s547 = scalar_select %p546, %s33, 1
        %s548 = smul.addr %s547, 13
        %s549 = smul.addr %s548, 8
        %s550 = scalar_lea.vmem %s0, %s549
        %p551 = pneg %p54
        %p552 = pneg %p51
        %p553 = pneg %p75
        %p554 = pneg %p72
        %p555 = pneg %p96
        %p556 = pneg %p93
        %p557 = pneg %p117
        %p558 = pneg %p114
        %p559 = pneg %p138
        %p560 = pneg %p135
        %p561 = pneg %p159
        %p562 = pneg %p156
        %p563 = pneg %p180
        %p564 = pneg %p177
        %p565 = pneg %p201
        %p566 = pneg %p198
        %p567 = pneg %p222
        %p568 = pneg %p219
        %p569 = pneg %p243
        %p570 = pneg %p240
        %p571 = pneg %p264
        %p572 = pneg %p261
        %p573 = pneg %p285
        %p574 = pneg %p282
        %p575 = pneg %p306
        %p576 = pneg %p303
        %p577 = pneg %p327
        %p578 = pneg %p324
        %p579 = pneg %p348
        %p580 = pneg %p345
        %p581 = pneg %p369
        %p582 = pneg %p366
        %p583 = pneg %p390
        %p584 = pneg %p387
        %p585 = pneg %p411
        %p586 = pneg %p408
        %p587 = pneg %p432
        %p588 = pneg %p429
        %p589 = pneg %p458
        %p590 = pneg %p455
        %s591 = sand.u32 %s445, 1
        %s592 = scalar_lea.sflag [#allocation3], %s591
        %s593 = sand.u32 %s445, 1
        %s594 = smul.addr %s593, 16
        %s595 = scalar_lea.vmem [#allocation2], %s594
        %p596 = scmp.lt.s32.totalorder %s33, 1
        %s597 = scalar_select %p596, %s33, 1
        %s598 = smul.addr %s597, 13
        %s599 = smul.addr %s598, 8
        %s600 = scalar_lea.vmem %s0, %s599
        %v602 = vld [vmem:[%s600] sm:$0xff]
        %v603 = vld [vmem:[%s600 + $0x8] sm:$0xff]
        %v604 = vld [vmem:[%s600 + $0x10] sm:$0xff]
        %v605 = vld [vmem:[%s600 + $0x18] sm:$0xff]
        %v606 = vld [vmem:[%s600 + $0x20] sm:$0xff]
        %v607 = vld [vmem:[%s600 + $0x28] sm:$0xff]
        %v608 = vld [vmem:[%s600 + $0x30] sm:$0xff]
        %v609 = vld [vmem:[%s600 + $0x38] sm:$0xff]
        %v610 = vld [vmem:[%s600 + $0x40] sm:$0xff]
        %v611 = vld [vmem:[%s600 + $0x48] sm:$0xff]
        %v612 = vld [vmem:[%s600 + $0x50] sm:$0xff]
        %v613 = vld [vmem:[%s600 + $0x58] sm:$0xff]
        %v614 = vld [vmem:[%s600 + $0x60] sm:$0x3f]
        %v615 = vpack.c.bf16 %v603, %v602
        %v616 = vpack.c.bf16 %v605, %v604
        %v617 = vpack.c.bf16 %v607, %v606
        %v618 = vpack.c.bf16 %v609, %v608
        %v619 = vpack.c.bf16 %v611, %v610
        %v620 = vpack.c.bf16 %v613, %v612
        %v621 = vpack.c.bf16 %v614, %v614
        %v622 = vld [vmem:[%s1] sm:$0xf]
        %v623 = vld [vmem:[%s1 + $0x4] sm:$0xf]
        %v624 = vld [vmem:[%s1 + $0x8] sm:$0xf]
        %v625 = vld [vmem:[%s1 + $0xc] sm:$0x3]
        %v626 = vld [vmem:[%s2] sm:$0x1]
        %v628 = vlaneseq
        %v629 = vshrl.u32 %v628, 7
        %v630 = vsub.s32 0, %v629
        %v631 = vrot.slane %v626, %v630
        %v637 = vunpack.c.l.b16 %v622
        %v638 = vunpack.c.l.b16 %v623
        %v639 = vunpack.c.l.b16 %v624
        %v640 = vunpack.c.l.b16 %v625
        %v641 = vpack.c.b16 %v638, %v637
        %v642 = vpack.c.b16 %v640, %v639
        %vm644 = vcmask 220160
        %v646 = vsel %vm644, %v615, 0
        %v649 = vsel %vm644, %v616, 0
        %v652 = vsel %vm644, %v617, 0
        %v655 = vsel %vm644, %v618, 0
        %v658 = vsel %vm644, %v619, 0
        %v661 = vsel %vm644, %v620, 0
        %v664 = vsel %vm644, %v621, 0
        %vm666 = vcmask 1044480
        %vm667 = vcmask 1045504
        %v668 = vsel %vm666, 4294967295, 65535
        %v669 = vsel %vm667, %v668, 0
        %v671 = vand.u32 %v642, %v669
        %673 = vmatprep.subr.bf16.mxu0 0
        %674 = vmatpush1.bf16.msra.mxu0 %v641
        %675 = vmatprep.subr.bf16.mxu0 0
        %676 = vmatpush1.bf16.msra.mxu0 %v671
        %677 = vmatprep.subr.bf16.mxu0 0
        %678 = vmatpush1.bf16.msra.mxu0 0
        %679 = vmatprep.subr.bf16.mxu0 0
        %680 = vmatpush1.bf16.msra.mxu0 0
        %681 = vmatprep.subr.bf16.mxu0 0
        %682 = vmatpush1.bf16.msra.mxu0 0
        %683 = vmatprep.subr.bf16.mxu0 0
        %684 = vmatpush1.bf16.msra.mxu0 0
        %685 = vmatprep.subr.bf16.mxu0 0
        %686 = vmatpush1.bf16.msra.mxu0 0
        %687 = vmatprep.subr.bf16.mxu0 0
        %688 = vmatpush1.bf16.msra.mxu0 0
        %689 = vmatprep.subr.bf16.mxu0 0
        %690 = vmatpush1.bf16.msra.mxu0 0
        %691 = vmatprep.subr.bf16.mxu0 0
        %692 = vmatpush1.bf16.msra.mxu0 0
        %693 = vmatprep.subr.bf16.mxu0 0
        %694 = vmatpush1.bf16.msra.mxu0 0
        %695 = vmatprep.subr.bf16.mxu0 0
        %696 = vmatpush1.bf16.msra.mxu0 0
        %697 = vmatprep.subr.bf16.mxu0 0
        %698 = vmatpush1.bf16.msra.mxu0 0
        %699 = vmatprep.subr.bf16.mxu0 0
        %700 = vmatpush1.bf16.msra.mxu0 0
        %701 = vmatprep.subr.bf16.mxu0 0
        %702 = vmatpush1.bf16.msra.mxu0 0
        %703 = vmatprep.subr.bf16.mxu0 0
        %704 = vmatpush1.bf16.msra.mxu0 0
        %705 = vmatprep.mubr.bf16.mxu0 0
        %706 = vmatmul.mubr.bf16.gmra.mrb[0].mxu0 %v646
        %v707 = vpop.f32.mrb[0].mxu0
        %v708 = vadd.f32 %v631, %v707
        %v709 = vpop.f32.mrb[0].mxu0
        %v710 = vpop.f32.mrb[0].mxu0
        %v711 = vadd.f32 %v631, %v710
        %v712 = vpop.f32.mrb[0].mxu0
        %713 = vmatprep.mubr.bf16.mxu0 0
        %714 = vmatmul.mubr.bf16.gmra.mrb[0].mxu0 %v649
        %v715 = vpop.f32.mrb[0].mxu0
        %v716 = vadd.f32 %v631, %v715
        %v717 = vpop.f32.mrb[0].mxu0
        %v718 = vpop.f32.mrb[0].mxu0
        %v719 = vadd.f32 %v631, %v718
        %v720 = vpop.f32.mrb[0].mxu0
        %721 = vmatprep.mubr.bf16.mxu0 0
        %722 = vmatmul.mubr.bf16.gmra.mrb[0].mxu0 %v652
        %v723 = vpop.f32.mrb[0].mxu0
        %v724 = vadd.f32 %v631, %v723
        %v725 = vpop.f32.mrb[0].mxu0
        %v726 = vpop.f32.mrb[0].mxu0
        %v727 = vadd.f32 %v631, %v726
        %v728 = vpop.f32.mrb[0].mxu0
        %729 = vmatprep.mubr.bf16.mxu0 0
        %730 = vmatmul.mubr.bf16.gmra.mrb[0].mxu0 %v655
        %v731 = vpop.f32.mrb[0].mxu0
        %v732 = vadd.f32 %v631, %v731
        %v733 = vpop.f32.mrb[0].mxu0
        %v734 = vpop.f32.mrb[0].mxu0
        %v735 = vadd.f32 %v631, %v734
        %v736 = vpop.f32.mrb[0].mxu0
        %737 = vmatprep.mubr.bf16.mxu0 0
        %738 = vmatmul.mubr.bf16.gmra.mrb[0].mxu0 %v658
        %v739 = vpop.f32.mrb[0].mxu0
        %v740 = vadd.f32 %v631, %v739
        %v741 = vpop.f32.mrb[0].mxu0
        %v742 = vpop.f32.mrb[0].mxu0
        %v743 = vadd.f32 %v631, %v742
        %v744 = vpop.f32.mrb[0].mxu0
        %745 = vmatprep.mubr.bf16.mxu0 0
        %746 = vmatmul.mubr.bf16.gmra.mrb[0].mxu0 %v661
        %v747 = vpop.f32.mrb[0].mxu0
        %v748 = vadd.f32 %v631, %v747
        %v749 = vpop.f32.mrb[0].mxu0
        %v750 = vpop.f32.mrb[0].mxu0
        %v751 = vadd.f32 %v631, %v750
        %v752 = vpop.f32.mrb[0].mxu0
        %753 = vmatprep.mubr.bf16.mxu0 0
        %754 = vmatmul.mubr.bf16.gmra.mrb[0].mxu0 %v664
        %v755 = vpop.f32.mrb[0].mxu0
        %v756 = vadd.f32 %v631, %v755
        %v757 = vpop.f32.mrb[0].mxu0
        %v758 = vpop.f32.mrb[0].mxu0
        %v759 = vpop.f32.mrb[0].mxu0
        %760 = vdwg.mxu0
        %v761 = vmax.f32 %v708, 0.0
        %v762 = vmax.f32 %v711, 0.0
        %v763 = vmax.f32 %v716, 0.0
        %v764 = vmax.f32 %v719, 0.0
        %v765 = vmax.f32 %v724, 0.0
        %v766 = vmax.f32 %v727, 0.0
        %v767 = vmax.f32 %v732, 0.0
        %v768 = vmax.f32 %v735, 0.0
        %v769 = vmax.f32 %v740, 0.0
        %v770 = vmax.f32 %v743, 0.0
        %v771 = vmax.f32 %v748, 0.0
        %v772 = vmax.f32 %v751, 0.0
        %v773 = vmax.f32 %v756, 0.0
        %v774 = vmin.f32 %v761, 6.0
        %v775 = vmin.f32 %v762, 6.0
        %v776 = vmin.f32 %v763, 6.0
        %v777 = vmin.f32 %v764, 6.0
        %v778 = vmin.f32 %v765, 6.0
        %v779 = vmin.f32 %v766, 6.0
        %v780 = vmin.f32 %v767, 6.0
        %v781 = vmin.f32 %v768, 6.0
        %v782 = vmin.f32 %v769, 6.0
        %v783 = vmin.f32 %v770, 6.0
        %v784 = vmin.f32 %v771, 6.0
        %v785 = vmin.f32 %v772, 6.0
        %v786 = vmin.f32 %v773, 6.0
        %v787 = vlaneseq
        %v788 = vshrl.u32 %v787, 7
        %v789 = vadd.s32 %v788, 8
        %v790 = vadd.s32 %v788, 16
        %v791 = vadd.s32 %v788, 24
        %v792 = vadd.s32 %v788, 32
        %v793 = vadd.s32 %v788, 40
        %v794 = vadd.s32 %v788, 48
        %v795 = vadd.s32 %v788, 56
        %v796 = vadd.s32 %v788, 64
        %v797 = vadd.s32 %v788, 72
        %v798 = vadd.s32 %v788, 80
        %v799 = vadd.s32 %v788, 88
        %v800 = vadd.s32 %v788, 96
        %vm801 = vcmp.lt.s32.totalorder %v788, 0
        %vm802 = vcmp.lt.s32.totalorder %v789, 0
        %vm803 = vcmp.lt.s32.totalorder %v790, 0
        %vm804 = vcmp.lt.s32.totalorder %v791, 0
        %vm805 = vcmp.lt.s32.totalorder %v792, 0
        %vm806 = vcmp.lt.s32.totalorder %v793, 0
        %vm807 = vcmp.lt.s32.totalorder %v794, 0
        %vm808 = vcmp.lt.s32.totalorder %v795, 0
        %vm809 = vcmp.lt.s32.totalorder %v796, 0
        %vm810 = vcmp.lt.s32.totalorder %v797, 0
        %vm811 = vcmp.lt.s32.totalorder %v798, 0
        %vm812 = vcmp.lt.s32.totalorder %v799, 0
        %vm813 = vcmp.lt.s32.totalorder %v800, 0
        %vm814 = vcmp.ge.s32.totalorder %v788, 11
        %vm815 = vcmp.ge.s32.totalorder %v789, 11
        %vm816 = vcmp.ge.s32.totalorder %v790, 11
        %vm817 = vcmp.ge.s32.totalorder %v791, 11
        %vm818 = vcmp.ge.s32.totalorder %v792, 11
        %vm819 = vcmp.ge.s32.totalorder %v793, 11
        %vm820 = vcmp.ge.s32.totalorder %v794, 11
        %vm821 = vcmp.ge.s32.totalorder %v795, 11
        %vm822 = vcmp.ge.s32.totalorder %v796, 11
        %vm823 = vcmp.ge.s32.totalorder %v797, 11
        %vm824 = vcmp.ge.s32.totalorder %v798, 11
        %vm825 = vcmp.ge.s32.totalorder %v799, 11
        %vm826 = vcmp.ge.s32.totalorder %v800, 11
        %vm827 = vcmp.lt.s32.totalorder %v788, 19
        %vm828 = vcmp.lt.s32.totalorder %v789, 19
        %vm829 = vcmp.lt.s32.totalorder %v790, 19
        %vm830 = vcmp.lt.s32.totalorder %v791, 19
        %vm831 = vcmp.lt.s32.totalorder %v792, 19
        %vm832 = vcmp.lt.s32.totalorder %v793, 19
        %vm833 = vcmp.lt.s32.totalorder %v794, 19
        %vm834 = vcmp.lt.s32.totalorder %v795, 19
        %vm835 = vcmp.lt.s32.totalorder %v796, 19
        %vm836 = vcmp.lt.s32.totalorder %v797, 19
        %vm837 = vcmp.lt.s32.totalorder %v798, 19
        %vm838 = vcmp.lt.s32.totalorder %v799, 19
        %vm839 = vcmp.lt.s32.totalorder %v800, 19
        %vm840 = vmand %vm814, %vm827
        %vm841 = vmand %vm815, %vm828
        %vm842 = vmand %vm816, %vm829
        %vm843 = vmand %vm817, %vm830
        %vm844 = vmand %vm818, %vm831
        %vm845 = vmand %vm819, %vm832
        %vm846 = vmand %vm820, %vm833
        %vm847 = vmand %vm821, %vm834
        %vm848 = vmand %vm822, %vm835
        %vm849 = vmand %vm823, %vm836
        %vm850 = vmand %vm824, %vm837
        %vm851 = vmand %vm825, %vm838
        %vm852 = vmand %vm826, %vm839
        %vm853 = vmor %vm801, %vm840
        %vm854 = vmor %vm802, %vm841
        %vm855 = vmor %vm803, %vm842
        %vm856 = vmor %vm804, %vm843
        %vm857 = vmor %vm805, %vm844
        %vm858 = vmor %vm806, %vm845
        %vm859 = vmor %vm807, %vm846
        %vm860 = vmor %vm808, %vm847
        %vm861 = vmor %vm809, %vm848
        %vm862 = vmor %vm810, %vm849
        %vm863 = vmor %vm811, %vm850
        %vm864 = vmor %vm812, %vm851
        %vm865 = vmor %vm813, %vm852
        %vm866 = vcmp.ge.s32.totalorder %v788, 21
        %vm867 = vcmp.ge.s32.totalorder %v789, 21
        %vm868 = vcmp.ge.s32.totalorder %v790, 21
        %vm869 = vcmp.ge.s32.totalorder %v791, 21
        %vm870 = vcmp.ge.s32.totalorder %v792, 21
        %vm871 = vcmp.ge.s32.totalorder %v793, 21
        %vm872 = vcmp.ge.s32.totalorder %v794, 21
        %vm873 = vcmp.ge.s32.totalorder %v795, 21
        %vm874 = vcmp.ge.s32.totalorder %v796, 21
        %vm875 = vcmp.ge.s32.totalorder %v797, 21
        %vm876 = vcmp.ge.s32.totalorder %v798, 21
        %vm877 = vcmp.ge.s32.totalorder %v799, 21
        %vm878 = vcmp.ge.s32.totalorder %v800, 21
        %vm879 = vcmp.lt.s32.totalorder %v788, 29
        %vm880 = vcmp.lt.s32.totalorder %v789, 29
        %vm881 = vcmp.lt.s32.totalorder %v790, 29
        %vm882 = vcmp.lt.s32.totalorder %v791, 29
        %vm883 = vcmp.lt.s32.totalorder %v792, 29
        %vm884 = vcmp.lt.s32.totalorder %v793, 29
        %vm885 = vcmp.lt.s32.totalorder %v794, 29
        %vm886 = vcmp.lt.s32.totalorder %v795, 29
        %vm887 = vcmp.lt.s32.totalorder %v796, 29
        %vm888 = vcmp.lt.s32.totalorder %v797, 29
        %vm889 = vcmp.lt.s32.totalorder %v798, 29
        %vm890 = vcmp.lt.s32.totalorder %v799, 29
        %vm891 = vcmp.lt.s32.totalorder %v800, 29
        %vm892 = vmand %vm866, %vm879
        %vm893 = vmand %vm867, %vm880
        %vm894 = vmand %vm868, %vm881
        %vm895 = vmand %vm869, %vm882
        %vm896 = vmand %vm870, %vm883
        %vm897 = vmand %vm871, %vm884
        %vm898 = vmand %vm872, %vm885
        %vm899 = vmand %vm873, %vm886
        %vm900 = vmand %vm874, %vm887
        %vm901 = vmand %vm875, %vm888
        %vm902 = vmand %vm876, %vm889
        %vm903 = vmand %vm877, %vm890
        %vm904 = vmand %vm878, %vm891
        %vm905 = vmor %vm853, %vm892
        %vm906 = vmor %vm854, %vm893
        %vm907 = vmor %vm855, %vm894
        %vm908 = vmor %vm856, %vm895
        %vm909 = vmor %vm857, %vm896
        %vm910 = vmor %vm858, %vm897
        %vm911 = vmor %vm859, %vm898
        %vm912 = vmor %vm860, %vm899
        %vm913 = vmor %vm861, %vm900
        %vm914 = vmor %vm862, %vm901
        %vm915 = vmor %vm863, %vm902
        %vm916 = vmor %vm864, %vm903
        %vm917 = vmor %vm865, %vm904
        %vm918 = vcmp.ge.s32.totalorder %v788, 31
        %vm919 = vcmp.ge.s32.totalorder %v789, 31
        %vm920 = vcmp.ge.s32.totalorder %v790, 31
        %vm921 = vcmp.ge.s32.totalorder %v791, 31
        %vm922 = vcmp.ge.s32.totalorder %v792, 31
        %vm923 = vcmp.ge.s32.totalorder %v793, 31
        %vm924 = vcmp.ge.s32.totalorder %v794, 31
        %vm925 = vcmp.ge.s32.totalorder %v795, 31
        %vm926 = vcmp.ge.s32.totalorder %v796, 31
        %vm927 = vcmp.ge.s32.totalorder %v797, 31
        %vm928 = vcmp.ge.s32.totalorder %v798, 31
        %vm929 = vcmp.ge.s32.totalorder %v799, 31
        %vm930 = vcmp.ge.s32.totalorder %v800, 31
        %vm931 = vcmp.lt.s32.totalorder %v788, 39
        %vm932 = vcmp.lt.s32.totalorder %v789, 39
        %vm933 = vcmp.lt.s32.totalorder %v790, 39
        %vm934 = vcmp.lt.s32.totalorder %v791, 39
        %vm935 = vcmp.lt.s32.totalorder %v792, 39
        %vm936 = vcmp.lt.s32.totalorder %v793, 39
        %vm937 = vcmp.lt.s32.totalorder %v794, 39
        %vm938 = vcmp.lt.s32.totalorder %v795, 39
        %vm939 = vcmp.lt.s32.totalorder %v796, 39
        %vm940 = vcmp.lt.s32.totalorder %v797, 39
        %vm941 = vcmp.lt.s32.totalorder %v798, 39
        %vm942 = vcmp.lt.s32.totalorder %v799, 39
        %vm943 = vcmp.lt.s32.totalorder %v800, 39
        %vm944 = vmand %vm918, %vm931
        %vm945 = vmand %vm919, %vm932
        %vm946 = vmand %vm920, %vm933
        %vm947 = vmand %vm921, %vm934
        %vm948 = vmand %vm922, %vm935
        %vm949 = vmand %vm923, %vm936
        %vm950 = vmand %vm924, %vm937
        %vm951 = vmand %vm925, %vm938
        %vm952 = vmand %vm926, %vm939
        %vm953 = vmand %vm927, %vm940
        %vm954 = vmand %vm928, %vm941
        %vm955 = vmand %vm929, %vm942
        %vm956 = vmand %vm930, %vm943
        %vm957 = vmor %vm905, %vm944
        %vm958 = vmor %vm906, %vm945
        %vm959 = vmor %vm907, %vm946
        %vm960 = vmor %vm908, %vm947
        %vm961 = vmor %vm909, %vm948
        %vm962 = vmor %vm910, %vm949
        %vm963 = vmor %vm911, %vm950
        %vm964 = vmor %vm912, %vm951
        %vm965 = vmor %vm913, %vm952
        %vm966 = vmor %vm914, %vm953
        %vm967 = vmor %vm915, %vm954
        %vm968 = vmor %vm916, %vm955
        %vm969 = vmor %vm917, %vm956
        %vm970 = vcmp.ge.s32.totalorder %v788, 41
        %vm971 = vcmp.ge.s32.totalorder %v789, 41
        %vm972 = vcmp.ge.s32.totalorder %v790, 41
        %vm973 = vcmp.ge.s32.totalorder %v791, 41
        %vm974 = vcmp.ge.s32.totalorder %v792, 41
        %vm975 = vcmp.ge.s32.totalorder %v793, 41
        %vm976 = vcmp.ge.s32.totalorder %v794, 41
        %vm977 = vcmp.ge.s32.totalorder %v795, 41
        %vm978 = vcmp.ge.s32.totalorder %v796, 41
        %vm979 = vcmp.ge.s32.totalorder %v797, 41
        %vm980 = vcmp.ge.s32.totalorder %v798, 41
        %vm981 = vcmp.ge.s32.totalorder %v799, 41
        %vm982 = vcmp.ge.s32.totalorder %v800, 41
        %vm983 = vcmp.lt.s32.totalorder %v788, 49
        %vm984 = vcmp.lt.s32.totalorder %v789, 49
        %vm985 = vcmp.lt.s32.totalorder %v790, 49
        %vm986 = vcmp.lt.s32.totalorder %v791, 49
        %vm987 = vcmp.lt.s32.totalorder %v792, 49
        %vm988 = vcmp.lt.s32.totalorder %v793, 49
        %vm989 = vcmp.lt.s32.totalorder %v794, 49
        %vm990 = vcmp.lt.s32.totalorder %v795, 49
        %vm991 = vcmp.lt.s32.totalorder %v796, 49
        %vm992 = vcmp.lt.s32.totalorder %v797, 49
        %vm993 = vcmp.lt.s32.totalorder %v798, 49
        %vm994 = vcmp.lt.s32.totalorder %v799, 49
        %vm995 = vcmp.lt.s32.totalorder %v800, 49
        %vm996 = vmand %vm970, %vm983
        %vm997 = vmand %vm971, %vm984
        %vm998 = vmand %vm972, %vm985
        %vm999 = vmand %vm973, %vm986
        %vm1000 = vmand %vm974, %vm987
        %vm1001 = vmand %vm975, %vm988
        %vm1002 = vmand %vm976, %vm989
        %vm1003 = vmand %vm977, %vm990
        %vm1004 = vmand %vm978, %vm991
        %vm1005 = vmand %vm979, %vm992
        %vm1006 = vmand %vm980, %vm993
        %vm1007 = vmand %vm981, %vm994
        %vm1008 = vmand %vm982, %vm995
        %vm1009 = vmor %vm957, %vm996
        %vm1010 = vmor %vm958, %vm997
        %vm1011 = vmor %vm959, %vm998
        %vm1012 = vmor %vm960, %vm999
        %vm1013 = vmor %vm961, %vm1000
        %vm1014 = vmor %vm962, %vm1001
        %vm1015 = vmor %vm963, %vm1002
        %vm1016 = vmor %vm964, %vm1003
        %vm1017 = vmor %vm965, %vm1004
        %vm1018 = vmor %vm966, %vm1005
        %vm1019 = vmor %vm967, %vm1006
        %vm1020 = vmor %vm968, %vm1007
        %vm1021 = vmor %vm969, %vm1008
        %vm1022 = vcmp.ge.s32.totalorder %v788, 51
        %vm1023 = vcmp.ge.s32.totalorder %v789, 51
        %vm1024 = vcmp.ge.s32.totalorder %v790, 51
        %vm1025 = vcmp.ge.s32.totalorder %v791, 51
        %vm1026 = vcmp.ge.s32.totalorder %v792, 51
        %vm1027 = vcmp.ge.s32.totalorder %v793, 51
        %vm1028 = vcmp.ge.s32.totalorder %v794, 51
        %vm1029 = vcmp.ge.s32.totalorder %v795, 51
        %vm1030 = vcmp.ge.s32.totalorder %v796, 51
        %vm1031 = vcmp.ge.s32.totalorder %v797, 51
        %vm1032 = vcmp.ge.s32.totalorder %v798, 51
        %vm1033 = vcmp.ge.s32.totalorder %v799, 51
        %vm1034 = vcmp.ge.s32.totalorder %v800, 51
        %vm1035 = vcmp.lt.s32.totalorder %v788, 59
        %vm1036 = vcmp.lt.s32.totalorder %v789, 59
        %vm1037 = vcmp.lt.s32.totalorder %v790, 59
        %vm1038 = vcmp.lt.s32.totalorder %v791, 59
        %vm1039 = vcmp.lt.s32.totalorder %v792, 59
        %vm1040 = vcmp.lt.s32.totalorder %v793, 59
        %vm1041 = vcmp.lt.s32.totalorder %v794, 59
        %vm1042 = vcmp.lt.s32.totalorder %v795, 59
        %vm1043 = vcmp.lt.s32.totalorder %v796, 59
        %vm1044 = vcmp.lt.s32.totalorder %v797, 59
        %vm1045 = vcmp.lt.s32.totalorder %v798, 59
        %vm1046 = vcmp.lt.s32.totalorder %v799, 59
        %vm1047 = vcmp.lt.s32.totalorder %v800, 59
        %vm1048 = vmand %vm1022, %vm1035
        %vm1049 = vmand %vm1023, %vm1036
        %vm1050 = vmand %vm1024, %vm1037
        %vm1051 = vmand %vm1025, %vm1038
        %vm1052 = vmand %vm1026, %vm1039
        %vm1053 = vmand %vm1027, %vm1040
        %vm1054 = vmand %vm1028, %vm1041
        %vm1055 = vmand %vm1029, %vm1042
        %vm1056 = vmand %vm1030, %vm1043
        %vm1057 = vmand %vm1031, %vm1044
        %vm1058 = vmand %vm1032, %vm1045
        %vm1059 = vmand %vm1033, %vm1046
        %vm1060 = vmand %vm1034, %vm1047
        %vm1061 = vmor %vm1009, %vm1048
        %vm1062 = vmor %vm1010, %vm1049
        %vm1063 = vmor %vm1011, %vm1050
        %vm1064 = vmor %vm1012, %vm1051
        %vm1065 = vmor %vm1013, %vm1052
        %vm1066 = vmor %vm1014, %vm1053
        %vm1067 = vmor %vm1015, %vm1054
        %vm1068 = vmor %vm1016, %vm1055
        %vm1069 = vmor %vm1017, %vm1056
        %vm1070 = vmor %vm1018, %vm1057
        %vm1071 = vmor %vm1019, %vm1058
        %vm1072 = vmor %vm1020, %vm1059
        %vm1073 = vmor %vm1021, %vm1060
        %vm1074 = vcmp.ge.s32.totalorder %v788, 61
        %vm1075 = vcmp.ge.s32.totalorder %v789, 61
        %vm1076 = vcmp.ge.s32.totalorder %v790, 61
        %vm1077 = vcmp.ge.s32.totalorder %v791, 61
        %vm1078 = vcmp.ge.s32.totalorder %v792, 61
        %vm1079 = vcmp.ge.s32.totalorder %v793, 61
        %vm1080 = vcmp.ge.s32.totalorder %v794, 61
        %vm1081 = vcmp.ge.s32.totalorder %v795, 61
        %vm1082 = vcmp.ge.s32.totalorder %v796, 61
        %vm1083 = vcmp.ge.s32.totalorder %v797, 61
        %vm1084 = vcmp.ge.s32.totalorder %v798, 61
        %vm1085 = vcmp.ge.s32.totalorder %v799, 61
        %vm1086 = vcmp.ge.s32.totalorder %v800, 61
        %vm1087 = vcmp.lt.s32.totalorder %v788, 69
        %vm1088 = vcmp.lt.s32.totalorder %v789, 69
        %vm1089 = vcmp.lt.s32.totalorder %v790, 69
        %vm1090 = vcmp.lt.s32.totalorder %v791, 69
        %vm1091 = vcmp.lt.s32.totalorder %v792, 69
        %vm1092 = vcmp.lt.s32.totalorder %v793, 69
        %vm1093 = vcmp.lt.s32.totalorder %v794, 69
        %vm1094 = vcmp.lt.s32.totalorder %v795, 69
        %vm1095 = vcmp.lt.s32.totalorder %v796, 69
        %vm1096 = vcmp.lt.s32.totalorder %v797, 69
        %vm1097 = vcmp.lt.s32.totalorder %v798, 69
        %vm1098 = vcmp.lt.s32.totalorder %v799, 69
        %vm1099 = vcmp.lt.s32.totalorder %v800, 69
        %vm1100 = vmand %vm1074, %vm1087
        %vm1101 = vmand %vm1075, %vm1088
        %vm1102 = vmand %vm1076, %vm1089
        %vm1103 = vmand %vm1077, %vm1090
        %vm1104 = vmand %vm1078, %vm1091
        %vm1105 = vmand %vm1079, %vm1092
        %vm1106 = vmand %vm1080, %vm1093
        %vm1107 = vmand %vm1081, %vm1094
        %vm1108 = vmand %vm1082, %vm1095
        %vm1109 = vmand %vm1083, %vm1096
        %vm1110 = vmand %vm1084, %vm1097
        %vm1111 = vmand %vm1085, %vm1098
        %vm1112 = vmand %vm1086, %vm1099
        %vm1113 = vmor %vm1061, %vm1100
        %vm1114 = vmor %vm1062, %vm1101
        %vm1115 = vmor %vm1063, %vm1102
        %vm1116 = vmor %vm1064, %vm1103
        %vm1117 = vmor %vm1065, %vm1104
        %vm1118 = vmor %vm1066, %vm1105
        %vm1119 = vmor %vm1067, %vm1106
        %vm1120 = vmor %vm1068, %vm1107
        %vm1121 = vmor %vm1069, %vm1108
        %vm1122 = vmor %vm1070, %vm1109
        %vm1123 = vmor %vm1071, %vm1110
        %vm1124 = vmor %vm1072, %vm1111
        %vm1125 = vmor %vm1073, %vm1112
        %vm1126 = vcmp.ge.s32.totalorder %v788, 71
        %vm1127 = vcmp.ge.s32.totalorder %v789, 71
        %vm1128 = vcmp.ge.s32.totalorder %v790, 71
        %vm1129 = vcmp.ge.s32.totalorder %v791, 71
        %vm1130 = vcmp.ge.s32.totalorder %v792, 71
        %vm1131 = vcmp.ge.s32.totalorder %v793, 71
        %vm1132 = vcmp.ge.s32.totalorder %v794, 71
        %vm1133 = vcmp.ge.s32.totalorder %v795, 71
        %vm1134 = vcmp.ge.s32.totalorder %v796, 71
        %vm1135 = vcmp.ge.s32.totalorder %v797, 71
        %vm1136 = vcmp.ge.s32.totalorder %v798, 71
        %vm1137 = vcmp.ge.s32.totalorder %v799, 71
        %vm1138 = vcmp.ge.s32.totalorder %v800, 71
        %vm1139 = vcmp.lt.s32.totalorder %v788, 79
        %vm1140 = vcmp.lt.s32.totalorder %v789, 79
        %vm1141 = vcmp.lt.s32.totalorder %v790, 79
        %vm1142 = vcmp.lt.s32.totalorder %v791, 79
        %vm1143 = vcmp.lt.s32.totalorder %v792, 79
        %vm1144 = vcmp.lt.s32.totalorder %v793, 79
        %vm1145 = vcmp.lt.s32.totalorder %v794, 79
        %vm1146 = vcmp.lt.s32.totalorder %v795, 79
        %vm1147 = vcmp.lt.s32.totalorder %v796, 79
        %vm1148 = vcmp.lt.s32.totalorder %v797, 79
        %vm1149 = vcmp.lt.s32.totalorder %v798, 79
        %vm1150 = vcmp.lt.s32.totalorder %v799, 79
        %vm1151 = vcmp.lt.s32.totalorder %v800, 79
        %vm1152 = vmand %vm1126, %vm1139
        %vm1153 = vmand %vm1127, %vm1140
        %vm1154 = vmand %vm1128, %vm1141
        %vm1155 = vmand %vm1129, %vm1142
        %vm1156 = vmand %vm1130, %vm1143
        %vm1157 = vmand %vm1131, %vm1144
        %vm1158 = vmand %vm1132, %vm1145
        %vm1159 = vmand %vm1133, %vm1146
        %vm1160 = vmand %vm1134, %vm1147
        %vm1161 = vmand %vm1135, %vm1148
        %vm1162 = vmand %vm1136, %vm1149
        %vm1163 = vmand %vm1137, %vm1150
        %vm1164 = vmand %vm1138, %vm1151
        %vm1165 = vmor %vm1113, %vm1152
        %vm1166 = vmor %vm1114, %vm1153
        %vm1167 = vmor %vm1115, %vm1154
        %vm1168 = vmor %vm1116, %vm1155
        %vm1169 = vmor %vm1117, %vm1156
        %vm1170 = vmor %vm1118, %vm1157
        %vm1171 = vmor %vm1119, %vm1158
        %vm1172 = vmor %vm1120, %vm1159
        %vm1173 = vmor %vm1121, %vm1160
        %vm1174 = vmor %vm1122, %vm1161
        %vm1175 = vmor %vm1123, %vm1162
        %vm1176 = vmor %vm1124, %vm1163
        %vm1177 = vmor %vm1125, %vm1164
        %vm1178 = vcmp.ge.s32.totalorder %v788, 81
        %vm1179 = vcmp.ge.s32.totalorder %v789, 81
        %vm1180 = vcmp.ge.s32.totalorder %v790, 81
        %vm1181 = vcmp.ge.s32.totalorder %v791, 81
        %vm1182 = vcmp.ge.s32.totalorder %v792, 81
        %vm1183 = vcmp.ge.s32.totalorder %v793, 81
        %vm1184 = vcmp.ge.s32.totalorder %v794, 81
        %vm1185 = vcmp.ge.s32.totalorder %v795, 81
        %vm1186 = vcmp.ge.s32.totalorder %v796, 81
        %vm1187 = vcmp.ge.s32.totalorder %v797, 81
        %vm1188 = vcmp.ge.s32.totalorder %v798, 81
        %vm1189 = vcmp.ge.s32.totalorder %v799, 81
        %vm1190 = vcmp.ge.s32.totalorder %v800, 81
        %vm1191 = vcmp.lt.s32.totalorder %v788, 89
        %vm1192 = vcmp.lt.s32.totalorder %v789, 89
        %vm1193 = vcmp.lt.s32.totalorder %v790, 89
        %vm1194 = vcmp.lt.s32.totalorder %v791, 89
        %vm1195 = vcmp.lt.s32.totalorder %v792, 89
        %vm1196 = vcmp.lt.s32.totalorder %v793, 89
        %vm1197 = vcmp.lt.s32.totalorder %v794, 89
        %vm1198 = vcmp.lt.s32.totalorder %v795, 89
        %vm1199 = vcmp.lt.s32.totalorder %v796, 89
        %vm1200 = vcmp.lt.s32.totalorder %v797, 89
        %vm1201 = vcmp.lt.s32.totalorder %v798, 89
        %vm1202 = vcmp.lt.s32.totalorder %v799, 89
        %vm1203 = vcmp.lt.s32.totalorder %v800, 89
        %vm1204 = vmand %vm1178, %vm1191
        %vm1205 = vmand %vm1179, %vm1192
        %vm1206 = vmand %vm1180, %vm1193
        %vm1207 = vmand %vm1181, %vm1194
        %vm1208 = vmand %vm1182, %vm1195
        %vm1209 = vmand %vm1183, %vm1196
        %vm1210 = vmand %vm1184, %vm1197
        %vm1211 = vmand %vm1185, %vm1198
        %vm1212 = vmand %vm1186, %vm1199
        %vm1213 = vmand %vm1187, %vm1200
        %vm1214 = vmand %vm1188, %vm1201
        %vm1215 = vmand %vm1189, %vm1202
        %vm1216 = vmand %vm1190, %vm1203
        %vm1217 = vmor %vm1165, %vm1204
        %vm1218 = vmor %vm1166, %vm1205
        %vm1219 = vmor %vm1167, %vm1206
        %vm1220 = vmor %vm1168, %vm1207
        %vm1221 = vmor %vm1169, %vm1208
        %vm1222 = vmor %vm1170, %vm1209
        %vm1223 = vmor %vm1171, %vm1210
        %vm1224 = vmor %vm1172, %vm1211
        %vm1225 = vmor %vm1173, %vm1212
        %vm1226 = vmor %vm1174, %vm1213
        %vm1227 = vmor %vm1175, %vm1214
        %vm1228 = vmor %vm1176, %vm1215
        %vm1229 = vmor %vm1177, %vm1216
        %v1230 = vsel %vm1217, 1, 0
        %v1231 = vsel %vm1218, 1, 0
        %v1232 = vsel %vm1219, 1, 0
        %v1233 = vsel %vm1220, 1, 0
        %v1234 = vsel %vm1221, 1, 0
        %v1235 = vsel %vm1222, 1, 0
        %v1236 = vsel %vm1223, 1, 0
        %v1237 = vsel %vm1224, 1, 0
        %v1238 = vsel %vm1225, 1, 0
        %v1239 = vsel %vm1226, 1, 0
        %v1240 = vsel %vm1227, 1, 0
        %v1241 = vsel %vm1228, 1, 0
        %v1242 = vsel %vm1229, 1, 0
        %vm1243 = vcmp.eq.s32.totalorder %v1230, 1
        %vm1244 = vcmp.eq.s32.totalorder %v1231, 1
        %vm1245 = vcmp.eq.s32.totalorder %v1232, 1
        %vm1246 = vcmp.eq.s32.totalorder %v1233, 1
        %vm1247 = vcmp.eq.s32.totalorder %v1234, 1
        %vm1248 = vcmp.eq.s32.totalorder %v1235, 1
        %vm1249 = vcmp.eq.s32.totalorder %v1236, 1
        %vm1250 = vcmp.eq.s32.totalorder %v1237, 1
        %vm1251 = vcmp.eq.s32.totalorder %v1238, 1
        %vm1252 = vcmp.eq.s32.totalorder %v1239, 1
        %vm1253 = vcmp.eq.s32.totalorder %v1240, 1
        %vm1254 = vcmp.eq.s32.totalorder %v1241, 1
        %vm1255 = vcmp.eq.s32.totalorder %v1242, 1
        %v1256 = vsel %vm1243, %v774, 0.0
        %v1257 = vsel %vm1244, %v775, 0.0
        %v1258 = vsel %vm1245, %v776, 0.0
        %v1259 = vsel %vm1246, %v777, 0.0
        %v1260 = vsel %vm1247, %v778, 0.0
        %v1261 = vsel %vm1248, %v779, 0.0
        %v1262 = vsel %vm1249, %v780, 0.0
        %v1263 = vsel %vm1250, %v781, 0.0
        %v1264 = vsel %vm1251, %v782, 0.0
        %v1265 = vsel %vm1252, %v783, 0.0
        %v1266 = vsel %vm1253, %v784, 0.0
        %v1267 = vsel %vm1254, %v785, 0.0
        %v1268 = vsel %vm1255, %v786, 0.0
        %v1269 = vld [vmem:[%s3] sm:$0x1]
        %v1271 = vlaneseq
        %v1272 = vshrl.u32 %v1271, 7
        %v1273 = vsub.s32 0, %v1272
        %v1274 = vrot.slane %v1269, %v1273
        %v1276 = vmul.f32 %v1256, %v1274
        %v1277 = vmul.f32 %v1257, %v1274
        %v1278 = vmul.f32 %v1258, %v1274
        %v1279 = vmul.f32 %v1259, %v1274
        %v1280 = vmul.f32 %v1260, %v1274
        %v1281 = vmul.f32 %v1261, %v1274
        %v1282 = vmul.f32 %v1262, %v1274
        %v1283 = vmul.f32 %v1263, %v1274
        %v1284 = vmul.f32 %v1264, %v1274
        %v1285 = vmul.f32 %v1265, %v1274
        %v1286 = vadd.f32 %v1276, 0.0
        %v1287 = vadd.f32 %v1277, 0.0
        %v1288 = vadd.f32 %v1278, 0.0
        %v1289 = vadd.f32 %v1279, 0.0
        %v1290 = vadd.f32 %v1280, 0.0
        %v1291 = vadd.f32 %v1281, 0.0
        %v1292 = vadd.f32 %v1282, 0.0
        %v1293 = vadd.f32 %v1283, 0.0
        %v1294 = vadd.f32 %v1284, 0.0
        %v1295 = vadd.f32 %v1285, 0.0
        %s1296 = scalar_lea.vmem %s3, 1
        %v1297 = vld [vmem:[%s1296] sm:$0x1]
        %v1299 = vlaneseq
        %v1300 = vshrl.u32 %v1299, 7
        %v1301 = vsub.s32 0, %v1300
        %v1302 = vrot.slane %v1297, %v1301
        %v1304 = vmul.f32 %v1256, %v1302
        %v1305 = vmul.f32 %v1257, %v1302
        %v1306 = vmul.f32 %v1258, %v1302
        %v1307 = vmul.f32 %v1259, %v1302
        %v1308 = vmul.f32 %v1260, %v1302
        %v1309 = vmul.f32 %v1261, %v1302
        %v1310 = vmul.f32 %v1262, %v1302
        %v1311 = vmul.f32 %v1263, %v1302
        %v1312 = vmul.f32 %v1264, %v1302
        %v1313 = vmul.f32 %v1265, %v1302
        %v1314 = vmul.f32 %v1266, %v1302
        %vm1326 = vcmask 1046528
        %v1327 = vrot.slane %v1304, 1
        %v1328 = vrot.slane %v1305, 1
        %v1329 = vsel %vm1326, %v1327, %v1328
        %v1330 = vrot.slane %v1306, 1
        %v1331 = vsel %vm1326, %v1328, %v1330
        %v1332 = vrot.slane %v1307, 1
        %v1333 = vsel %vm1326, %v1330, %v1332
        %v1334 = vrot.slane %v1308, 1
        %v1335 = vsel %vm1326, %v1332, %v1334
        %v1336 = vrot.slane %v1309, 1
        %v1337 = vsel %vm1326, %v1334, %v1336
        %v1338 = vrot.slane %v1310, 1
        %v1339 = vsel %vm1326, %v1336, %v1338
        %v1340 = vrot.slane %v1311, 1
        %v1341 = vsel %vm1326, %v1338, %v1340
        %v1342 = vrot.slane %v1312, 1
        %v1343 = vsel %vm1326, %v1340, %v1342
        %v1344 = vrot.slane %v1313, 1
        %v1345 = vsel %vm1326, %v1342, %v1344
        %v1346 = vrot.slane %v1314, 1
        %v1347 = vsel %vm1326, %v1344, %v1346
        %v1358 = vadd.f32 %v1286, %v1329
        %v1359 = vadd.f32 %v1287, %v1331
        %v1360 = vadd.f32 %v1288, %v1333
        %v1361 = vadd.f32 %v1289, %v1335
        %v1362 = vadd.f32 %v1290, %v1337
        %v1363 = vadd.f32 %v1291, %v1339
        %v1364 = vadd.f32 %v1292, %v1341
        %v1365 = vadd.f32 %v1293, %v1343
        %v1366 = vadd.f32 %v1294, %v1345
        %v1367 = vadd.f32 %v1295, %v1347
        %s1368 = scalar_lea.vmem %s3, 2
        %v1369 = vld [vmem:[%s1368] sm:$0x1]
        %v1371 = vlaneseq
        %v1372 = vshrl.u32 %v1371, 7
        %v1373 = vsub.s32 0, %v1372
        %v1374 = vrot.slane %v1369, %v1373
        %v1376 = vmul.f32 %v1256, %v1374
        %v1377 = vmul.f32 %v1257, %v1374
        %v1378 = vmul.f32 %v1258, %v1374
        %v1379 = vmul.f32 %v1259, %v1374
        %v1380 = vmul.f32 %v1260, %v1374
        %v1381 = vmul.f32 %v1261, %v1374
        %v1382 = vmul.f32 %v1262, %v1374
        %v1383 = vmul.f32 %v1263, %v1374
        %v1384 = vmul.f32 %v1264, %v1374
        %v1385 = vmul.f32 %v1265, %v1374
        %v1386 = vmul.f32 %v1266, %v1374
        %v1398 = vrot.slane %v1376, 2
        %v1399 = vrot.slane %v1377, 2
        %v1400 = vsel %vm667, %v1398, %v1399
        %v1401 = vrot.slane %v1378, 2
        %v1402 = vsel %vm667, %v1399, %v1401
        %v1403 = vrot.slane %v1379, 2
        %v1404 = vsel %vm667, %v1401, %v1403
        %v1405 = vrot.slane %v1380, 2
        %v1406 = vsel %vm667, %v1403, %v1405
        %v1407 = vrot.slane %v1381, 2
        %v1408 = vsel %vm667, %v1405, %v1407
        %v1409 = vrot.slane %v1382, 2
        %v1410 = vsel %vm667, %v1407, %v1409
        %v1411 = vrot.slane %v1383, 2
        %v1412 = vsel %vm667, %v1409, %v1411
        %v1413 = vrot.slane %v1384, 2
        %v1414 = vsel %vm667, %v1411, %v1413
        %v1415 = vrot.slane %v1385, 2
        %v1416 = vsel %vm667, %v1413, %v1415
        %v1417 = vrot.slane %v1386, 2
        %v1418 = vsel %vm667, %v1415, %v1417
        %v1429 = vadd.f32 %v1358, %v1400
        %v1430 = vadd.f32 %v1359, %v1402
        %v1431 = vadd.f32 %v1360, %v1404
        %v1432 = vadd.f32 %v1361, %v1406
        %v1433 = vadd.f32 %v1362, %v1408
        %v1434 = vadd.f32 %v1363, %v1410
        %v1435 = vadd.f32 %v1364, %v1412
        %v1436 = vadd.f32 %v1365, %v1414
        %v1437 = vadd.f32 %v1366, %v1416
        %v1438 = vadd.f32 %v1367, %v1418
        %s1439 = scalar_lea.vmem %s3, 3
        %v1440 = vld [vmem:[%s1439] sm:$0x1]
        %v1442 = vlaneseq
        %v1443 = vshrl.u32 %v1442, 7
        %v1444 = vsub.s32 0, %v1443
        %v1445 = vrot.slane %v1440, %v1444
        %v1447 = vmul.f32 %v1257, %v1445
        %v1448 = vmul.f32 %v1258, %v1445
        %v1449 = vmul.f32 %v1259, %v1445
        %v1450 = vmul.f32 %v1260, %v1445
        %v1451 = vmul.f32 %v1261, %v1445
        %v1452 = vmul.f32 %v1262, %v1445
        %v1453 = vmul.f32 %v1263, %v1445
        %v1454 = vmul.f32 %v1264, %v1445
        %v1455 = vmul.f32 %v1265, %v1445
        %v1456 = vmul.f32 %v1266, %v1445
        %v1457 = vmul.f32 %v1267, %v1445
        %v1469 = vrot.slane %v1447, 2
        %v1470 = vrot.slane %v1448, 2
        %v1471 = vsel %vm667, %v1469, %v1470
        %v1472 = vrot.slane %v1449, 2
        %v1473 = vsel %vm667, %v1470, %v1472
        %v1474 = vrot.slane %v1450, 2
        %v1475 = vsel %vm667, %v1472, %v1474
        %v1476 = vrot.slane %v1451, 2
        %v1477 = vsel %vm667, %v1474, %v1476
        %v1478 = vrot.slane %v1452, 2
        %v1479 = vsel %vm667, %v1476, %v1478
        %v1480 = vrot.slane %v1453, 2
        %v1481 = vsel %vm667, %v1478, %v1480
        %v1482 = vrot.slane %v1454, 2
        %v1483 = vsel %vm667, %v1480, %v1482
        %v1484 = vrot.slane %v1455, 2
        %v1485 = vsel %vm667, %v1482, %v1484
        %v1486 = vrot.slane %v1456, 2
        %v1487 = vsel %vm667, %v1484, %v1486
        %v1488 = vrot.slane %v1457, 2
        %v1489 = vsel %vm667, %v1486, %v1488
        %v1500 = vadd.f32 %v1429, %v1471
        %v1501 = vadd.f32 %v1430, %v1473
        %v1502 = vadd.f32 %v1431, %v1475
        %v1503 = vadd.f32 %v1432, %v1477
        %v1504 = vadd.f32 %v1433, %v1479
        %v1505 = vadd.f32 %v1434, %v1481
        %v1506 = vadd.f32 %v1435, %v1483
        %v1507 = vadd.f32 %v1436, %v1485
        %v1508 = vadd.f32 %v1437, %v1487
        %v1509 = vadd.f32 %v1438, %v1489
        %s1510 = scalar_lea.vmem %s3, 4
        %v1511 = vld [vmem:[%s1510] sm:$0x1]
        %v1513 = vlaneseq
        %v1514 = vshrl.u32 %v1513, 7
        %v1515 = vsub.s32 0, %v1514
        %v1516 = vrot.slane %v1511, %v1515
        %v1518 = vmul.f32 %v1257, %v1516
        %v1519 = vmul.f32 %v1258, %v1516
        %v1520 = vmul.f32 %v1259, %v1516
        %v1521 = vmul.f32 %v1260, %v1516
        %v1522 = vmul.f32 %v1261, %v1516
        %v1523 = vmul.f32 %v1262, %v1516
        %v1524 = vmul.f32 %v1263, %v1516
        %v1525 = vmul.f32 %v1264, %v1516
        %v1526 = vmul.f32 %v1265, %v1516
        %v1527 = vmul.f32 %v1266, %v1516
        %v1528 = vmul.f32 %v1267, %v1516
        %v1540 = vrot.slane %v1518, 3
        %v1541 = vrot.slane %v1519, 3
        %v1542 = vsel %vm666, %v1540, %v1541
        %v1543 = vrot.slane %v1520, 3
        %v1544 = vsel %vm666, %v1541, %v1543
        %v1545 = vrot.slane %v1521, 3
        %v1546 = vsel %vm666, %v1543, %v1545
        %v1547 = vrot.slane %v1522, 3
        %v1548 = vsel %vm666, %v1545, %v1547
        %v1549 = vrot.slane %v1523, 3
        %v1550 = vsel %vm666, %v1547, %v1549
        %v1551 = vrot.slane %v1524, 3
        %v1552 = vsel %vm666, %v1549, %v1551
        %v1553 = vrot.slane %v1525, 3
        %v1554 = vsel %vm666, %v1551, %v1553
        %v1555 = vrot.slane %v1526, 3
        %v1556 = vsel %vm666, %v1553, %v1555
        %v1557 = vrot.slane %v1527, 3
        %v1558 = vsel %vm666, %v1555, %v1557
        %v1559 = vrot.slane %v1528, 3
        %v1560 = vsel %vm666, %v1557, %v1559
        %v1571 = vadd.f32 %v1500, %v1542
        %v1572 = vadd.f32 %v1501, %v1544
        %v1573 = vadd.f32 %v1502, %v1546
        %v1574 = vadd.f32 %v1503, %v1548
        %v1575 = vadd.f32 %v1504, %v1550
        %v1576 = vadd.f32 %v1505, %v1552
        %v1577 = vadd.f32 %v1506, %v1554
        %v1578 = vadd.f32 %v1507, %v1556
        %v1579 = vadd.f32 %v1508, %v1558
        %v1580 = vadd.f32 %v1509, %v1560
        %s1581 = scalar_lea.vmem %s3, 5
        %v1582 = vld [vmem:[%s1581] sm:$0x1]
        %v1584 = vlaneseq
        %v1585 = vshrl.u32 %v1584, 7
        %v1586 = vsub.s32 0, %v1585
        %v1587 = vrot.slane %v1582, %v1586
        %v1589 = vmul.f32 %v1257, %v1587
        %v1590 = vmul.f32 %v1258, %v1587
        %v1591 = vmul.f32 %v1259, %v1587
        %v1592 = vmul.f32 %v1260, %v1587
        %v1593 = vmul.f32 %v1261, %v1587
        %v1594 = vmul.f32 %v1262, %v1587
        %v1595 = vmul.f32 %v1263, %v1587
        %v1596 = vmul.f32 %v1264, %v1587
        %v1597 = vmul.f32 %v1265, %v1587
        %v1598 = vmul.f32 %v1266, %v1587
        %v1599 = vmul.f32 %v1267, %v1587
        %vm1611 = vcmask 1043456
        %v1612 = vrot.slane %v1589, 4
        %v1613 = vrot.slane %v1590, 4
        %v1614 = vsel %vm1611, %v1612, %v1613
        %v1615 = vrot.slane %v1591, 4
        %v1616 = vsel %vm1611, %v1613, %v1615
        %v1617 = vrot.slane %v1592, 4
        %v1618 = vsel %vm1611, %v1615, %v1617
        %v1619 = vrot.slane %v1593, 4
        %v1620 = vsel %vm1611, %v1617, %v1619
        %v1621 = vrot.slane %v1594, 4
        %v1622 = vsel %vm1611, %v1619, %v1621
        %v1623 = vrot.slane %v1595, 4
        %v1624 = vsel %vm1611, %v1621, %v1623
        %v1625 = vrot.slane %v1596, 4
        %v1626 = vsel %vm1611, %v1623, %v1625
        %v1627 = vrot.slane %v1597, 4
        %v1628 = vsel %vm1611, %v1625, %v1627
        %v1629 = vrot.slane %v1598, 4
        %v1630 = vsel %vm1611, %v1627, %v1629
        %v1631 = vrot.slane %v1599, 4
        %v1632 = vsel %vm1611, %v1629, %v1631
        %v1643 = vadd.f32 %v1571, %v1614
        %v1644 = vadd.f32 %v1572, %v1616
        %v1645 = vadd.f32 %v1573, %v1618
        %v1646 = vadd.f32 %v1574, %v1620
        %v1647 = vadd.f32 %v1575, %v1622
        %v1648 = vadd.f32 %v1576, %v1624
        %v1649 = vadd.f32 %v1577, %v1626
        %v1650 = vadd.f32 %v1578, %v1628
        %v1651 = vadd.f32 %v1579, %v1630
        %v1652 = vadd.f32 %v1580, %v1632
        %s1653 = scalar_lea.vmem %s3, 6
        %v1654 = vld [vmem:[%s1653] sm:$0x1]
        %v1656 = vlaneseq
        %v1657 = vshrl.u32 %v1656, 7
        %v1658 = vsub.s32 0, %v1657
        %v1659 = vrot.slane %v1654, %v1658
        %v1661 = vmul.f32 %v1258, %v1659
        %v1662 = vmul.f32 %v1259, %v1659
        %v1663 = vmul.f32 %v1260, %v1659
        %v1664 = vmul.f32 %v1261, %v1659
        %v1665 = vmul.f32 %v1262, %v1659
        %v1666 = vmul.f32 %v1263, %v1659
        %v1667 = vmul.f32 %v1264, %v1659
        %v1668 = vmul.f32 %v1265, %v1659
        %v1669 = vmul.f32 %v1266, %v1659
        %v1670 = vmul.f32 %v1267, %v1659
        %v1671 = vmul.f32 %v1268, %v1659
        %v1683 = vrot.slane %v1661, 4
        %v1684 = vrot.slane %v1662, 4
        %v1685 = vsel %vm1611, %v1683, %v1684
        %v1686 = vrot.slane %v1663, 4
        %v1687 = vsel %vm1611, %v1684, %v1686
        %v1688 = vrot.slane %v1664, 4
        %v1689 = vsel %vm1611, %v1686, %v1688
        %v1690 = vrot.slane %v1665, 4
        %v1691 = vsel %vm1611, %v1688, %v1690
        %v1692 = vrot.slane %v1666, 4
        %v1693 = vsel %vm1611, %v1690, %v1692
        %v1694 = vrot.slane %v1667, 4
        %v1695 = vsel %vm1611, %v1692, %v1694
        %v1696 = vrot.slane %v1668, 4
        %v1697 = vsel %vm1611, %v1694, %v1696
        %v1698 = vrot.slane %v1669, 4
        %v1699 = vsel %vm1611, %v1696, %v1698
        %v1700 = vrot.slane %v1670, 4
        %v1701 = vsel %vm1611, %v1698, %v1700
        %v1702 = vrot.slane %v1671, 4
        %v1703 = vsel %vm1611, %v1700, %v1702
        %v1714 = vadd.f32 %v1643, %v1685
        %v1715 = vadd.f32 %v1644, %v1687
        %v1716 = vadd.f32 %v1645, %v1689
        %v1717 = vadd.f32 %v1646, %v1691
        %v1718 = vadd.f32 %v1647, %v1693
        %v1719 = vadd.f32 %v1648, %v1695
        %v1720 = vadd.f32 %v1649, %v1697
        %v1721 = vadd.f32 %v1650, %v1699
        %v1722 = vadd.f32 %v1651, %v1701
        %v1723 = vadd.f32 %v1652, %v1703
        %s1724 = scalar_lea.vmem %s3, 7
        %v1725 = vld [vmem:[%s1724] sm:$0x1]
        %v1727 = vlaneseq
        %v1728 = vshrl.u32 %v1727, 7
        %v1729 = vsub.s32 0, %v1728
        %v1730 = vrot.slane %v1725, %v1729
        %v1732 = vmul.f32 %v1258, %v1730
        %v1733 = vmul.f32 %v1259, %v1730
        %v1734 = vmul.f32 %v1260, %v1730
        %v1735 = vmul.f32 %v1261, %v1730
        %v1736 = vmul.f32 %v1262, %v1730
        %v1737 = vmul.f32 %v1263, %v1730
        %v1738 = vmul.f32 %v1264, %v1730
        %v1739 = vmul.f32 %v1265, %v1730
        %v1740 = vmul.f32 %v1266, %v1730
        %v1741 = vmul.f32 %v1267, %v1730
        %v1742 = vmul.f32 %v1268, %v1730
        %vm1754 = vcmask 1042432
        %v1755 = vrot.slane %v1732, 5
        %v1756 = vrot.slane %v1733, 5
        %v1757 = vsel %vm1754, %v1755, %v1756
        %v1758 = vrot.slane %v1734, 5
        %v1759 = vsel %vm1754, %v1756, %v1758
        %v1760 = vrot.slane %v1735, 5
        %v1761 = vsel %vm1754, %v1758, %v1760
        %v1762 = vrot.slane %v1736, 5
        %v1763 = vsel %vm1754, %v1760, %v1762
        %v1764 = vrot.slane %v1737, 5
        %v1765 = vsel %vm1754, %v1762, %v1764
        %v1766 = vrot.slane %v1738, 5
        %v1767 = vsel %vm1754, %v1764, %v1766
        %v1768 = vrot.slane %v1739, 5
        %v1769 = vsel %vm1754, %v1766, %v1768
        %v1770 = vrot.slane %v1740, 5
        %v1771 = vsel %vm1754, %v1768, %v1770
        %v1772 = vrot.slane %v1741, 5
        %v1773 = vsel %vm1754, %v1770, %v1772
        %v1774 = vrot.slane %v1742, 5
        %v1775 = vsel %vm1754, %v1772, %v1774
        %v1786 = vadd.f32 %v1714, %v1757
        %v1787 = vadd.f32 %v1715, %v1759
        %v1788 = vadd.f32 %v1716, %v1761
        %v1789 = vadd.f32 %v1717, %v1763
        %v1790 = vadd.f32 %v1718, %v1765
        %v1791 = vadd.f32 %v1719, %v1767
        %v1792 = vadd.f32 %v1720, %v1769
        %v1793 = vadd.f32 %v1721, %v1771
        %v1794 = vadd.f32 %v1722, %v1773
        %v1795 = vadd.f32 %v1723, %v1775
        %s1796 = scalar_lea.vmem %s3, 8
        %v1797 = vld [vmem:[%s1796] sm:$0x1]
        %v1799 = vlaneseq
        %v1800 = vshrl.u32 %v1799, 7
        %v1801 = vsub.s32 0, %v1800
        %v1802 = vrot.slane %v1797, %v1801
        %v1804 = vmul.f32 %v1258, %v1802
        %v1805 = vmul.f32 %v1259, %v1802
        %v1806 = vmul.f32 %v1260, %v1802
        %v1807 = vmul.f32 %v1261, %v1802
        %v1808 = vmul.f32 %v1262, %v1802
        %v1809 = vmul.f32 %v1263, %v1802
        %v1810 = vmul.f32 %v1264, %v1802
        %v1811 = vmul.f32 %v1265, %v1802
        %v1812 = vmul.f32 %v1266, %v1802
        %v1813 = vmul.f32 %v1267, %v1802
        %v1814 = vmul.f32 %v1268, %v1802
        %vm1826 = vcmask 1041408
        %v1827 = vrot.slane %v1804, 6
        %v1828 = vrot.slane %v1805, 6
        %v1829 = vsel %vm1826, %v1827, %v1828
        %v1830 = vrot.slane %v1806, 6
        %v1831 = vsel %vm1826, %v1828, %v1830
        %v1832 = vrot.slane %v1807, 6
        %v1833 = vsel %vm1826, %v1830, %v1832
        %v1834 = vrot.slane %v1808, 6
        %v1835 = vsel %vm1826, %v1832, %v1834
        %v1836 = vrot.slane %v1809, 6
        %v1837 = vsel %vm1826, %v1834, %v1836
        %v1838 = vrot.slane %v1810, 6
        %v1839 = vsel %vm1826, %v1836, %v1838
        %v1840 = vrot.slane %v1811, 6
        %v1841 = vsel %vm1826, %v1838, %v1840
        %v1842 = vrot.slane %v1812, 6
        %v1843 = vsel %vm1826, %v1840, %v1842
        %v1844 = vrot.slane %v1813, 6
        %v1845 = vsel %vm1826, %v1842, %v1844
        %v1846 = vrot.slane %v1814, 6
        %v1847 = vsel %vm1826, %v1844, %v1846
        %v1858 = vadd.f32 %v1786, %v1829
        %v1859 = vadd.f32 %v1787, %v1831
        %v1860 = vadd.f32 %v1788, %v1833
        %v1861 = vadd.f32 %v1789, %v1835
        %v1862 = vadd.f32 %v1790, %v1837
        %v1863 = vadd.f32 %v1791, %v1839
        %v1864 = vadd.f32 %v1792, %v1841
        %v1865 = vadd.f32 %v1793, %v1843
        %v1866 = vadd.f32 %v1794, %v1845
        %v1867 = vadd.f32 %v1795, %v1847
        %v1868 = vld [vmem:[%s4] sm:$0x1]
        %v1870 = vlaneseq
        %v1871 = vshrl.u32 %v1870, 7
        %v1872 = vsub.s32 0, %v1871
        %v1873 = vrot.slane %v1868, %v1872
        %v1875 = vadd.f32 %v1858, %v1873
        %v1876 = vadd.f32 %v1859, %v1873
        %v1877 = vadd.f32 %v1860, %v1873
        %v1878 = vadd.f32 %v1861, %v1873
        %v1879 = vadd.f32 %v1862, %v1873
        %v1880 = vadd.f32 %v1863, %v1873
        %v1881 = vadd.f32 %v1864, %v1873
        %v1882 = vadd.f32 %v1865, %v1873
        %v1883 = vadd.f32 %v1866, %v1873
        %v1884 = vadd.f32 %v1867, %v1873
        %v1885 = vmax.f32 %v1875, 0.0
        %v1886 = vmax.f32 %v1876, 0.0
        %v1887 = vmax.f32 %v1877, 0.0
        %v1888 = vmax.f32 %v1878, 0.0
        %v1889 = vmax.f32 %v1879, 0.0
        %v1890 = vmax.f32 %v1880, 0.0
        %v1891 = vmax.f32 %v1881, 0.0
        %v1892 = vmax.f32 %v1882, 0.0
        %v1893 = vmax.f32 %v1883, 0.0
        %v1894 = vmax.f32 %v1884, 0.0
        %v1895 = vmin.f32 %v1885, 6.0
        %v1896 = vmin.f32 %v1886, 6.0
        %v1897 = vmin.f32 %v1887, 6.0
        %v1898 = vmin.f32 %v1888, 6.0
        %v1899 = vmin.f32 %v1889, 6.0
        %v1900 = vmin.f32 %v1890, 6.0
        %v1901 = vmin.f32 %v1891, 6.0
        %v1902 = vmin.f32 %v1892, 6.0
        %v1903 = vmin.f32 %v1893, 6.0
        %v1904 = vmin.f32 %v1894, 6.0
        %v1905 = vpack.c.bf16 %v1896, %v1895
        %v1906 = vpack.c.bf16 %v1898, %v1897
        %v1907 = vpack.c.bf16 %v1900, %v1899
        %v1908 = vpack.c.bf16 %v1902, %v1901
        %v1909 = vpack.c.bf16 %v1904, %v1903
        %v1910 = vld [vmem:[%s5] sm:$0xf]
        %v1911 = vld [vmem:[%s5 + $0x4] sm:$0xf]
        %v1912 = vld [vmem:[%s5 + $0x8] sm:$0xf]
        %v1913 = vld [vmem:[%s5 + $0xc] sm:$0xf]
        %v1914 = vld [vmem:[%s6] sm:$0x1]
        %v1916 = vlaneseq
        %v1917 = vshrl.u32 %v1916, 7
        %v1918 = vsub.s32 0, %v1917
        %v1919 = vrot.slane %v1914, %v1918
        %v1925 = vunpack.c.l.b16 %v1910
        %v1926 = vunpack.c.l.b16 %v1911
        %v1927 = vunpack.c.l.b16 %v1912
        %v1928 = vunpack.c.l.b16 %v1913
        %v1929 = vpack.c.b16 %v1926, %v1925
        %v1930 = vpack.c.b16 %v1928, %v1927
        %vm1933 = vcmask 261120
        %v1935 = vsel %vm1933, %v1905, 0
        %v1938 = vsel %vm1933, %v1906, 0
        %v1941 = vsel %vm1933, %v1907, 0
        %v1944 = vsel %vm1933, %v1908, 0
        %v1947 = vsel %vm1933, %v1909, 0
        %1949 = vmatprep.subr.bf16.mxu0 0
        %1950 = vmatpush1.bf16.msra.mxu0 %v1929
        %1951 = vmatprep.subr.bf16.mxu0 0
        %1952 = vmatpush1.bf16.msra.mxu0 %v1930
        %1953 = vmatprep.subr.bf16.mxu0 0
        %1954 = vmatpush1.bf16.msra.mxu0 0
        %1955 = vmatprep.subr.bf16.mxu0 0
        %1956 = vmatpush1.bf16.msra.mxu0 0
        %1957 = vmatprep.subr.bf16.mxu0 0
        %1958 = vmatpush1.bf16.msra.mxu0 0
        %1959 = vmatprep.subr.bf16.mxu0 0
        %1960 = vmatpush1.bf16.msra.mxu0 0
        %1961 = vmatprep.subr.bf16.mxu0 0
        %1962 = vmatpush1.bf16.msra.mxu0 0
        %1963 = vmatprep.subr.bf16.mxu0 0
        %1964 = vmatpush1.bf16.msra.mxu0 0
        %1965 = vmatprep.subr.bf16.mxu0 0
        %1966 = vmatpush1.bf16.msra.mxu0 0
        %1967 = vmatprep.subr.bf16.mxu0 0
        %1968 = vmatpush1.bf16.msra.mxu0 0
        %1969 = vmatprep.subr.bf16.mxu0 0
        %1970 = vmatpush1.bf16.msra.mxu0 0
        %1971 = vmatprep.subr.bf16.mxu0 0
        %1972 = vmatpush1.bf16.msra.mxu0 0
        %1973 = vmatprep.subr.bf16.mxu0 0
        %1974 = vmatpush1.bf16.msra.mxu0 0
        %1975 = vmatprep.subr.bf16.mxu0 0
        %1976 = vmatpush1.bf16.msra.mxu0 0
        %1977 = vmatprep.subr.bf16.mxu0 0
        %1978 = vmatpush1.bf16.msra.mxu0 0
        %1979 = vmatprep.subr.bf16.mxu0 0
        %1980 = vmatpush1.bf16.msra.mxu0 0
        %1981 = vmatprep.mubr.bf16.mxu0 0
        %1982 = vmatmul.mubr.bf16.gmra.mrb[0].mxu0 %v1935
        %v1983 = vpop.f32.mrb[0].mxu0
        %v1984 = vadd.f32 %v1919, %v1983
        %v1985 = vpop.f32.mrb[0].mxu0
        %v1986 = vpop.f32.mrb[0].mxu0
        %v1987 = vadd.f32 %v1919, %v1986
        %v1988 = vpop.f32.mrb[0].mxu0
        %1989 = vmatprep.mubr.bf16.mxu0 0
        %1990 = vmatmul.mubr.bf16.gmra.mrb[0].mxu0 %v1938
        %v1991 = vpop.f32.mrb[0].mxu0
        %v1992 = vadd.f32 %v1919, %v1991
        %v1993 = vpop.f32.mrb[0].mxu0
        %v1994 = vpop.f32.mrb[0].mxu0
        %v1995 = vadd.f32 %v1919, %v1994
        %v1996 = vpop.f32.mrb[0].mxu0
        %1997 = vmatprep.mubr.bf16.mxu0 0
        %1998 = vmatmul.mubr.bf16.gmra.mrb[0].mxu0 %v1941
        %v1999 = vpop.f32.mrb[0].mxu0
        %v2000 = vadd.f32 %v1919, %v1999
        %v2001 = vpop.f32.mrb[0].mxu0
        %v2002 = vpop.f32.mrb[0].mxu0
        %v2003 = vadd.f32 %v1919, %v2002
        %v2004 = vpop.f32.mrb[0].mxu0
        %2005 = vmatprep.mubr.bf16.mxu0 0
        %2006 = vmatmul.mubr.bf16.gmra.mrb[0].mxu0 %v1944
        %v2007 = vpop.f32.mrb[0].mxu0
        %v2008 = vadd.f32 %v1919, %v2007
        %v2009 = vpop.f32.mrb[0].mxu0
        %v2010 = vpop.f32.mrb[0].mxu0
        %v2011 = vadd.f32 %v1919, %v2010
        %v2012 = vpop.f32.mrb[0].mxu0
        %2013 = vmatprep.mubr.bf16.mxu0 0
        %2014 = vmatmul.mubr.bf16.gmra.mrb[0].mxu0 %v1947
        %v2015 = vpop.f32.mrb[0].mxu0
        %v2016 = vadd.f32 %v1919, %v2015
        %v2017 = vpop.f32.mrb[0].mxu0
        %v2018 = vpop.f32.mrb[0].mxu0
        %v2019 = vadd.f32 %v1919, %v2018
        %v2020 = vpop.f32.mrb[0].mxu0
        %2021 = vdwg.mxu0
        %v2032 = vrot.slane %v1984, 5
        %v2033 = vrot.slane %v1987, 5
        %v2034 = vsel %vm1754, %v2032, %v2033
        %v2035 = vrot.slane %v1992, 5
        %v2036 = vsel %vm1754, %v2033, %v2035
        %v2037 = vrot.slane %v1995, 5
        %v2038 = vsel %vm1754, %v2035, %v2037
        %v2039 = vrot.slane %v2000, 5
        %v2040 = vsel %vm1754, %v2037, %v2039
        %v2041 = vrot.slane %v2003, 5
        %v2042 = vsel %vm1754, %v2039, %v2041
        %v2043 = vrot.slane %v2008, 5
        %v2044 = vsel %vm1754, %v2041, %v2043
        %v2045 = vrot.slane %v2011, 5
        %v2046 = vsel %vm1754, %v2043, %v2045
        %v2047 = vrot.slane %v2016, 5
        %v2048 = vsel %vm1754, %v2045, %v2047
        %v2049 = vrot.slane %v2019, 5
        %v2050 = vsel %vm1754, %v2047, %v2049
        %v2062 = vsel %vm1754, 0.0, %v2032
        %v2063 = vsel %vm1754, %v2049, 0.0
        %v2064 = vpack.c.bf16 %v2062, 0.0
        %v2065 = vpack.c.bf16 %v2036, %v2034
        %v2066 = vpack.c.bf16 %v2040, %v2038
        %v2067 = vpack.c.bf16 %v2044, %v2042
        %v2068 = vpack.c.bf16 %v2048, %v2046
        %v2069 = vpack.c.bf16 %v2063, %v2050
        %v2070 = vpack.c.bf16 0.0, 0.0
        %v2071 = vld [vmem:[%s7] sm:$0xf]
        %v2072 = vld [vmem:[%s7 + $0x4] sm:$0xf]
        %v2073 = vld [vmem:[%s8] sm:$0x1]
        %v2075 = vlaneseq
        %v2076 = vshrl.u32 %v2075, 7
        %v2077 = vsub.s32 0, %v2076
        %v2078 = vrot.slane %v2073, %v2077
        %v2082 = vunpack.c.l.b16 %v2071
        %v2083 = vunpack.c.l.b16 %v2072
        %v2084 = vpack.c.b16 %v2083, %v2082
        %vm2086 = vcmask 130048
        %v2088 = vsel %vm2086, %v2064, 0
        %v2091 = vsel %vm2086, %v2065, 0
        %v2094 = vsel %vm2086, %v2066, 0
        %v2097 = vsel %vm2086, %v2067, 0
        %v2100 = vsel %vm2086, %v2068, 0
        %v2103 = vsel %vm2086, %v2069, 0
        %v2106 = vsel %vm2086, %v2070, 0
        %2108 = vmatprep.subr.bf16.mxu0 0
        %2109 = vmatpush1.bf16.msra.mxu0 %v2084
        %2110 = vmatprep.subr.bf16.mxu0 0
        %2111 = vmatpush1.bf16.msra.mxu0 0
        %2112 = vmatprep.subr.bf16.mxu0 0
        %2113 = vmatpush1.bf16.msra.mxu0 0
        %2114 = vmatprep.subr.bf16.mxu0 0
        %2115 = vmatpush1.bf16.msra.mxu0 0
        %2116 = vmatprep.subr.bf16.mxu0 0
        %2117 = vmatpush1.bf16.msra.mxu0 0
        %2118 = vmatprep.subr.bf16.mxu0 0
        %2119 = vmatpush1.bf16.msra.mxu0 0
        %2120 = vmatprep.subr.bf16.mxu0 0
        %2121 = vmatpush1.bf16.msra.mxu0 0
        %2122 = vmatprep.subr.bf16.mxu0 0
        %2123 = vmatpush1.bf16.msra.mxu0 0
        %2124 = vmatprep.subr.bf16.mxu0 0
        %2125 = vmatpush1.bf16.msra.mxu0 0
        %2126 = vmatprep.subr.bf16.mxu0 0
        %2127 = vmatpush1.bf16.msra.mxu0 0
        %2128 = vmatprep.subr.bf16.mxu0 0
        %2129 = vmatpush1.bf16.msra.mxu0 0
        %2130 = vmatprep.subr.bf16.mxu0 0
        %2131 = vmatpush1.bf16.msra.mxu0 0
        %2132 = vmatprep.subr.bf16.mxu0 0
        %2133 = vmatpush1.bf16.msra.mxu0 0
        %2134 = vmatprep.subr.bf16.mxu0 0
        %2135 = vmatpush1.bf16.msra.mxu0 0
        %2136 = vmatprep.subr.bf16.mxu0 0
        %2137 = vmatpush1.bf16.msra.mxu0 0
        %2138 = vmatprep.subr.bf16.mxu0 0
        %2139 = vmatpush1.bf16.msra.mxu0 0
        %2140 = vmatprep.mubr.bf16.mxu0 0
        %2141 = vmatmul.mubr.bf16.gmra.mrb[0].mxu0 %v2088
        %v2142 = vpop.f32.mrb[0].mxu0
        %v2143 = vadd.f32 %v2078, %v2142
        %v2144 = vpop.f32.mrb[0].mxu0
        %v2145 = vpop.f32.mrb[0].mxu0
        %v2146 = vadd.f32 %v2078, %v2145
        %v2147 = vpop.f32.mrb[0].mxu0
        %2148 = vmatprep.mubr.bf16.mxu0 0
        %2149 = vmatmul.mubr.bf16.gmra.mrb[0].mxu0 %v2091
        %v2150 = vpop.f32.mrb[0].mxu0
        %v2151 = vadd.f32 %v2078, %v2150
        %v2152 = vpop.f32.mrb[0].mxu0
        %v2153 = vpop.f32.mrb[0].mxu0
        %v2154 = vadd.f32 %v2078, %v2153
        %v2155 = vpop.f32.mrb[0].mxu0
        %2156 = vmatprep.mubr.bf16.mxu0 0
        %2157 = vmatmul.mubr.bf16.gmra.mrb[0].mxu0 %v2094
        %v2158 = vpop.f32.mrb[0].mxu0
        %v2159 = vadd.f32 %v2078, %v2158
        %v2160 = vpop.f32.mrb[0].mxu0
        %v2161 = vpop.f32.mrb[0].mxu0
        %v2162 = vadd.f32 %v2078, %v2161
        %v2163 = vpop.f32.mrb[0].mxu0
        %2164 = vmatprep.mubr.bf16.mxu0 0
        %2165 = vmatmul.mubr.bf16.gmra.mrb[0].mxu0 %v2097
        %v2166 = vpop.f32.mrb[0].mxu0
        %v2167 = vadd.f32 %v2078, %v2166
        %v2168 = vpop.f32.mrb[0].mxu0
        %v2169 = vpop.f32.mrb[0].mxu0
        %v2170 = vadd.f32 %v2078, %v2169
        %v2171 = vpop.f32.mrb[0].mxu0
        %2172 = vmatprep.mubr.bf16.mxu0 0
        %2173 = vmatmul.mubr.bf16.gmra.mrb[0].mxu0 %v2100
        %v2174 = vpop.f32.mrb[0].mxu0
        %v2175 = vadd.f32 %v2078, %v2174
        %v2176 = vpop.f32.mrb[0].mxu0
        %v2177 = vpop.f32.mrb[0].mxu0
        %v2178 = vadd.f32 %v2078, %v2177
        %v2179 = vpop.f32.mrb[0].mxu0
        %2180 = vmatprep.mubr.bf16.mxu0 0
        %2181 = vmatmul.mubr.bf16.gmra.mrb[0].mxu0 %v2103
        %v2182 = vpop.f32.mrb[0].mxu0
        %v2183 = vadd.f32 %v2078, %v2182
        %v2184 = vpop.f32.mrb[0].mxu0
        %v2185 = vpop.f32.mrb[0].mxu0
        %v2186 = vadd.f32 %v2078, %v2185
        %v2187 = vpop.f32.mrb[0].mxu0
        %2188 = vmatprep.mubr.bf16.mxu0 0
        %2189 = vmatmul.mubr.bf16.gmra.mrb[0].mxu0 %v2106
        %v2190 = vpop.f32.mrb[0].mxu0
        %v2191 = vpop.f32.mrb[0].mxu0
        %v2192 = vpop.f32.mrb[0].mxu0
        %v2193 = vpop.f32.mrb[0].mxu0
        %2194 = vdwg.mxu0
        %v2195 = vmax.f32 %v2143, 0.0
        %v2196 = vmax.f32 %v2146, 0.0
        %v2197 = vmax.f32 %v2151, 0.0
        %v2198 = vmax.f32 %v2154, 0.0
        %v2199 = vmax.f32 %v2159, 0.0
        %v2200 = vmax.f32 %v2162, 0.0
        %v2201 = vmax.f32 %v2167, 0.0
        %v2202 = vmax.f32 %v2170, 0.0
        %v2203 = vmax.f32 %v2175, 0.0
        %v2204 = vmax.f32 %v2178, 0.0
        %v2205 = vmax.f32 %v2183, 0.0
        %v2206 = vmax.f32 %v2186, 0.0
        %v2207 = vmin.f32 %v2195, 6.0
        %v2208 = vmin.f32 %v2196, 6.0
        %v2209 = vmin.f32 %v2197, 6.0
        %v2210 = vmin.f32 %v2198, 6.0
        %v2211 = vmin.f32 %v2199, 6.0
        %v2212 = vmin.f32 %v2200, 6.0
        %v2213 = vmin.f32 %v2201, 6.0
        %v2214 = vmin.f32 %v2202, 6.0
        %v2215 = vmin.f32 %v2203, 6.0
        %v2216 = vmin.f32 %v2204, 6.0
        %v2217 = vmin.f32 %v2205, 6.0
        %v2218 = vmin.f32 %v2206, 6.0
        %v2219 = vsel %vm1243, %v2207, 0.0
        %v2220 = vsel %vm1244, %v2208, 0.0
        %v2221 = vsel %vm1245, %v2209, 0.0
        %v2222 = vsel %vm1246, %v2210, 0.0
        %v2223 = vsel %vm1247, %v2211, 0.0
        %v2224 = vsel %vm1248, %v2212, 0.0
        %v2225 = vsel %vm1249, %v2213, 0.0
        %v2226 = vsel %vm1250, %v2214, 0.0
        %v2227 = vsel %vm1251, %v2215, 0.0
        %v2228 = vsel %vm1252, %v2216, 0.0
        %v2229 = vsel %vm1253, %v2217, 0.0
        %v2230 = vsel %vm1254, %v2218, 0.0
        %v2231 = vld [vmem:[%s9] sm:$0x1]
        %v2233 = vlaneseq
        %v2234 = vshrl.u32 %v2233, 7
        %v2235 = vsub.s32 0, %v2234
        %v2236 = vrot.slane %v2231, %v2235
        %v2238 = vmul.f32 %v2219, %v2236
        %v2239 = vmul.f32 %v2221, %v2236
        %v2240 = vmul.f32 %v2222, %v2236
        %v2241 = vmul.f32 %v2224, %v2236
        %v2242 = vmul.f32 %v2226, %v2236
        %v2243 = vmul.f32 %v2227, %v2236
        %v2244 = vadd.f32 %v2238, 0.0
        %v2245 = vadd.f32 %v2239, 0.0
        %v2246 = vadd.f32 %v2240, 0.0
        %v2247 = vadd.f32 %v2241, 0.0
        %v2248 = vadd.f32 %v2242, 0.0
        %v2249 = vadd.f32 %v2243, 0.0
        %s2250 = scalar_lea.vmem %s9, 1
        %v2251 = vld [vmem:[%s2250] sm:$0x1]
        %v2253 = vlaneseq
        %v2254 = vshrl.u32 %v2253, 7
        %v2255 = vsub.s32 0, %v2254
        %v2256 = vrot.slane %v2251, %v2255
        %v2258 = vmul.f32 %v2219, %v2256
        %v2259 = vmul.f32 %v2220, %v2256
        %v2260 = vmul.f32 %v2221, %v2256
        %v2261 = vmul.f32 %v2222, %v2256
        %v2262 = vmul.f32 %v2223, %v2256
        %v2263 = vmul.f32 %v2224, %v2256
        %v2264 = vmul.f32 %v2225, %v2256
        %v2265 = vmul.f32 %v2226, %v2256
        %v2266 = vmul.f32 %v2227, %v2256
        %v2276 = vrot.slane %v2258, 1
        %v2277 = vrot.slane %v2259, 1
        %v2278 = vsel %vm1326, %v2276, %v2277
        %v2279 = vrot.slane %v2260, 1
        %v2280 = vrot.slane %v2261, 1
        %v2281 = vsel %vm1326, %v2279, %v2280
        %v2282 = vrot.slane %v2262, 1
        %v2283 = vsel %vm1326, %v2280, %v2282
        %v2284 = vrot.slane %v2263, 1
        %v2285 = vrot.slane %v2264, 1
        %v2286 = vsel %vm1326, %v2284, %v2285
        %v2287 = vrot.slane %v2265, 1
        %v2288 = vrot.slane %v2266, 1
        %v2289 = vsel %vm1326, %v2287, %v2288
        %v2296 = vadd.f32 %v2244, %v2278
        %v2297 = vadd.f32 %v2245, %v2281
        %v2298 = vadd.f32 %v2246, %v2283
        %v2299 = vadd.f32 %v2247, %v2286
        %v2300 = vadd.f32 %v2248, %v2289
        %v2301 = vadd.f32 %v2249, %v2288
        %s2302 = scalar_lea.vmem %s9, 2
        %v2303 = vld [vmem:[%s2302] sm:$0x1]
        %v2305 = vlaneseq
        %v2306 = vshrl.u32 %v2305, 7
        %v2307 = vsub.s32 0, %v2306
        %v2308 = vrot.slane %v2303, %v2307
        %v2310 = vmul.f32 %v2219, %v2308
        %v2311 = vmul.f32 %v2220, %v2308
        %v2312 = vmul.f32 %v2221, %v2308
        %v2313 = vmul.f32 %v2222, %v2308
        %v2314 = vmul.f32 %v2223, %v2308
        %v2315 = vmul.f32 %v2224, %v2308
        %v2316 = vmul.f32 %v2225, %v2308
        %v2317 = vmul.f32 %v2226, %v2308
        %v2318 = vmul.f32 %v2227, %v2308
        %v2328 = vrot.slane %v2310, 2
        %v2329 = vrot.slane %v2311, 2
        %v2330 = vsel %vm667, %v2328, %v2329
        %v2331 = vrot.slane %v2312, 2
        %v2332 = vrot.slane %v2313, 2
        %v2333 = vsel %vm667, %v2331, %v2332
        %v2334 = vrot.slane %v2314, 2
        %v2335 = vsel %vm667, %v2332, %v2334
        %v2336 = vrot.slane %v2315, 2
        %v2337 = vrot.slane %v2316, 2
        %v2338 = vsel %vm667, %v2336, %v2337
        %v2339 = vrot.slane %v2317, 2
        %v2340 = vrot.slane %v2318, 2
        %v2341 = vsel %vm667, %v2339, %v2340
        %v2348 = vadd.f32 %v2296, %v2330
        %v2349 = vadd.f32 %v2297, %v2333
        %v2350 = vadd.f32 %v2298, %v2335
        %v2351 = vadd.f32 %v2299, %v2338
        %v2352 = vadd.f32 %v2300, %v2341
        %v2353 = vadd.f32 %v2301, %v2340
        %s2354 = scalar_lea.vmem %s9, 3
        %v2355 = vld [vmem:[%s2354] sm:$0x1]
        %v2357 = vlaneseq
        %v2358 = vshrl.u32 %v2357, 7
        %v2359 = vsub.s32 0, %v2358
        %v2360 = vrot.slane %v2355, %v2359
        %v2362 = vmul.f32 %v2220, %v2360
        %v2363 = vmul.f32 %v2221, %v2360
        %v2364 = vmul.f32 %v2222, %v2360
        %v2365 = vmul.f32 %v2223, %v2360
        %v2366 = vmul.f32 %v2224, %v2360
        %v2367 = vmul.f32 %v2225, %v2360
        %v2368 = vmul.f32 %v2226, %v2360
        %v2369 = vmul.f32 %v2227, %v2360
        %v2370 = vmul.f32 %v2228, %v2360
        %v2380 = vrot.slane %v2362, 2
        %v2381 = vrot.slane %v2363, 2
        %v2382 = vsel %vm667, %v2380, %v2381
        %v2383 = vrot.slane %v2364, 2
        %v2384 = vrot.slane %v2365, 2
        %v2385 = vsel %vm667, %v2383, %v2384
        %v2386 = vrot.slane %v2366, 2
        %v2387 = vsel %vm667, %v2384, %v2386
        %v2388 = vrot.slane %v2367, 2
        %v2389 = vrot.slane %v2368, 2
        %v2390 = vsel %vm667, %v2388, %v2389
        %v2391 = vrot.slane %v2369, 2
        %v2392 = vrot.slane %v2370, 2
        %v2393 = vsel %vm667, %v2391, %v2392
        %v2400 = vadd.f32 %v2348, %v2382
        %v2401 = vadd.f32 %v2349, %v2385
        %v2402 = vadd.f32 %v2350, %v2387
        %v2403 = vadd.f32 %v2351, %v2390
        %v2404 = vadd.f32 %v2352, %v2393
        %v2405 = vadd.f32 %v2353, %v2392
        %s2406 = scalar_lea.vmem %s9, 4
        %v2407 = vld [vmem:[%s2406] sm:$0x1]
        %v2409 = vlaneseq
        %v2410 = vshrl.u32 %v2409, 7
        %v2411 = vsub.s32 0, %v2410
        %v2412 = vrot.slane %v2407, %v2411
        %v2414 = vmul.f32 %v2220, %v2412
        %v2415 = vmul.f32 %v2221, %v2412
        %v2416 = vmul.f32 %v2222, %v2412
        %v2417 = vmul.f32 %v2223, %v2412
        %v2418 = vmul.f32 %v2224, %v2412
        %v2419 = vmul.f32 %v2225, %v2412
        %v2420 = vmul.f32 %v2226, %v2412
        %v2421 = vmul.f32 %v2227, %v2412
        %v2422 = vmul.f32 %v2228, %v2412
        %v2423 = vmul.f32 %v2229, %v2412
        %v2434 = vrot.slane %v2414, 3
        %v2435 = vrot.slane %v2415, 3
        %v2436 = vsel %vm666, %v2434, %v2435
        %v2437 = vrot.slane %v2416, 3
        %v2438 = vrot.slane %v2417, 3
        %v2439 = vsel %vm666, %v2437, %v2438
        %v2440 = vrot.slane %v2418, 3
        %v2441 = vsel %vm666, %v2438, %v2440
        %v2442 = vrot.slane %v2419, 3
        %v2443 = vrot.slane %v2420, 3
        %v2444 = vsel %vm666, %v2442, %v2443
        %v2445 = vrot.slane %v2421, 3
        %v2446 = vrot.slane %v2422, 3
        %v2447 = vsel %vm666, %v2445, %v2446
        %v2448 = vrot.slane %v2423, 3
        %v2449 = vsel %vm666, %v2446, %v2448
        %v2456 = vadd.f32 %v2400, %v2436
        %v2457 = vadd.f32 %v2401, %v2439
        %v2458 = vadd.f32 %v2402, %v2441
        %v2459 = vadd.f32 %v2403, %v2444
        %v2460 = vadd.f32 %v2404, %v2447
        %v2461 = vadd.f32 %v2405, %v2449
        %s2462 = scalar_lea.vmem %s9, 5
        %v2463 = vld [vmem:[%s2462] sm:$0x1]
        %v2465 = vlaneseq
        %v2466 = vshrl.u32 %v2465, 7
        %v2467 = vsub.s32 0, %v2466
        %v2468 = vrot.slane %v2463, %v2467
        %v2470 = vmul.f32 %v2220, %v2468
        %v2471 = vmul.f32 %v2221, %v2468
        %v2472 = vmul.f32 %v2222, %v2468
        %v2473 = vmul.f32 %v2223, %v2468
        %v2474 = vmul.f32 %v2224, %v2468
        %v2475 = vmul.f32 %v2225, %v2468
        %v2476 = vmul.f32 %v2226, %v2468
        %v2477 = vmul.f32 %v2227, %v2468
        %v2478 = vmul.f32 %v2228, %v2468
        %v2479 = vmul.f32 %v2229, %v2468
        %v2490 = vrot.slane %v2470, 4
        %v2491 = vrot.slane %v2471, 4
        %v2492 = vsel %vm1611, %v2490, %v2491
        %v2493 = vrot.slane %v2472, 4
        %v2494 = vrot.slane %v2473, 4
        %v2495 = vsel %vm1611, %v2493, %v2494
        %v2496 = vrot.slane %v2474, 4
        %v2497 = vsel %vm1611, %v2494, %v2496
        %v2498 = vrot.slane %v2475, 4
        %v2499 = vrot.slane %v2476, 4
        %v2500 = vsel %vm1611, %v2498, %v2499
        %v2501 = vrot.slane %v2477, 4
        %v2502 = vrot.slane %v2478, 4
        %v2503 = vsel %vm1611, %v2501, %v2502
        %v2504 = vrot.slane %v2479, 4
        %v2505 = vsel %vm1611, %v2502, %v2504
        %v2512 = vadd.f32 %v2456, %v2492
        %v2513 = vadd.f32 %v2457, %v2495
        %v2514 = vadd.f32 %v2458, %v2497
        %v2515 = vadd.f32 %v2459, %v2500
        %v2516 = vadd.f32 %v2460, %v2503
        %v2517 = vadd.f32 %v2461, %v2505
        %s2518 = scalar_lea.vmem %s9, 6
        %v2519 = vld [vmem:[%s2518] sm:$0x1]
        %v2521 = vlaneseq
        %v2522 = vshrl.u32 %v2521, 7
        %v2523 = vsub.s32 0, %v2522
        %v2524 = vrot.slane %v2519, %v2523
        %v2526 = vmul.f32 %v2221, %v2524
        %v2527 = vmul.f32 %v2222, %v2524
        %v2528 = vmul.f32 %v2223, %v2524
        %v2529 = vmul.f32 %v2224, %v2524
        %v2530 = vmul.f32 %v2225, %v2524
        %v2531 = vmul.f32 %v2226, %v2524
        %v2532 = vmul.f32 %v2227, %v2524
        %v2533 = vmul.f32 %v2228, %v2524
        %v2534 = vmul.f32 %v2229, %v2524
        %v2535 = vmul.f32 %v2230, %v2524
        %v2546 = vrot.slane %v2526, 4
        %v2547 = vrot.slane %v2527, 4
        %v2548 = vsel %vm1611, %v2546, %v2547
        %v2549 = vrot.slane %v2528, 4
        %v2550 = vrot.slane %v2529, 4
        %v2551 = vsel %vm1611, %v2549, %v2550
        %v2552 = vrot.slane %v2530, 4
        %v2553 = vsel %vm1611, %v2550, %v2552
        %v2554 = vrot.slane %v2531, 4
        %v2555 = vrot.slane %v2532, 4
        %v2556 = vsel %vm1611, %v2554, %v2555
        %v2557 = vrot.slane %v2533, 4
        %v2558 = vrot.slane %v2534, 4
        %v2559 = vsel %vm1611, %v2557, %v2558
        %v2560 = vrot.slane %v2535, 4
        %v2561 = vsel %vm1611, %v2558, %v2560
        %v2568 = vadd.f32 %v2512, %v2548
        %v2569 = vadd.f32 %v2513, %v2551
        %v2570 = vadd.f32 %v2514, %v2553
        %v2571 = vadd.f32 %v2515, %v2556
        %v2572 = vadd.f32 %v2516, %v2559
        %v2573 = vadd.f32 %v2517, %v2561
        %s2574 = scalar_lea.vmem %s9, 7
        %v2575 = vld [vmem:[%s2574] sm:$0x1]
        %v2577 = vlaneseq
        %v2578 = vshrl.u32 %v2577, 7
        %v2579 = vsub.s32 0, %v2578
        %v2580 = vrot.slane %v2575, %v2579
        %v2582 = vmul.f32 %v2221, %v2580
        %v2583 = vmul.f32 %v2222, %v2580
        %v2584 = vmul.f32 %v2223, %v2580
        %v2585 = vmul.f32 %v2224, %v2580
        %v2586 = vmul.f32 %v2225, %v2580
        %v2587 = vmul.f32 %v2226, %v2580
        %v2588 = vmul.f32 %v2227, %v2580
        %v2589 = vmul.f32 %v2228, %v2580
        %v2590 = vmul.f32 %v2229, %v2580
        %v2591 = vmul.f32 %v2230, %v2580
        %v2602 = vrot.slane %v2582, 5
        %v2603 = vrot.slane %v2583, 5
        %v2604 = vsel %vm1754, %v2602, %v2603
        %v2605 = vrot.slane %v2584, 5
        %v2606 = vrot.slane %v2585, 5
        %v2607 = vsel %vm1754, %v2605, %v2606
        %v2608 = vrot.slane %v2586, 5
        %v2609 = vsel %vm1754, %v2606, %v2608
        %v2610 = vrot.slane %v2587, 5
        %v2611 = vrot.slane %v2588, 5
        %v2612 = vsel %vm1754, %v2610, %v2611
        %v2613 = vrot.slane %v2589, 5
        %v2614 = vrot.slane %v2590, 5
        %v2615 = vsel %vm1754, %v2613, %v2614
        %v2616 = vrot.slane %v2591, 5
        %v2617 = vsel %vm1754, %v2614, %v2616
        %v2624 = vadd.f32 %v2568, %v2604
        %v2625 = vadd.f32 %v2569, %v2607
        %v2626 = vadd.f32 %v2570, %v2609
        %v2627 = vadd.f32 %v2571, %v2612
        %v2628 = vadd.f32 %v2572, %v2615
        %v2629 = vadd.f32 %v2573, %v2617
        %s2630 = scalar_lea.vmem %s9, 8
        %v2631 = vld [vmem:[%s2630] sm:$0x1]
        %v2633 = vlaneseq
        %v2634 = vshrl.u32 %v2633, 7
        %v2635 = vsub.s32 0, %v2634
        %v2636 = vrot.slane %v2631, %v2635
        %v2638 = vmul.f32 %v2221, %v2636
        %v2639 = vmul.f32 %v2222, %v2636
        %v2640 = vmul.f32 %v2223, %v2636
        %v2641 = vmul.f32 %v2224, %v2636
        %v2642 = vmul.f32 %v2225, %v2636
        %v2643 = vmul.f32 %v2226, %v2636
        %v2644 = vmul.f32 %v2227, %v2636
        %v2645 = vmul.f32 %v2228, %v2636
        %v2646 = vmul.f32 %v2229, %v2636
        %v2647 = vmul.f32 %v2230, %v2636
        %v2658 = vrot.slane %v2638, 6
        %v2659 = vrot.slane %v2639, 6
        %v2660 = vsel %vm1826, %v2658, %v2659
        %v2661 = vrot.slane %v2640, 6
        %v2662 = vrot.slane %v2641, 6
        %v2663 = vsel %vm1826, %v2661, %v2662
        %v2664 = vrot.slane %v2642, 6
        %v2665 = vsel %vm1826, %v2662, %v2664
        %v2666 = vrot.slane %v2643, 6
        %v2667 = vrot.slane %v2644, 6
        %v2668 = vsel %vm1826, %v2666, %v2667
        %v2669 = vrot.slane %v2645, 6
        %v2670 = vrot.slane %v2646, 6
        %v2671 = vsel %vm1826, %v2669, %v2670
        %v2672 = vrot.slane %v2647, 6
        %v2673 = vsel %vm1826, %v2670, %v2672
        %v2680 = vadd.f32 %v2624, %v2660
        %v2681 = vadd.f32 %v2625, %v2663
        %v2682 = vadd.f32 %v2626, %v2665
        %v2683 = vadd.f32 %v2627, %v2668
        %v2684 = vadd.f32 %v2628, %v2671
        %v2685 = vadd.f32 %v2629, %v2673
        %v2686 = vld [vmem:[%s10] sm:$0x1]
        %v2688 = vlaneseq
        %v2689 = vshrl.u32 %v2688, 7
        %v2690 = vsub.s32 0, %v2689
        %v2691 = vrot.slane %v2686, %v2690
        %v2693 = vadd.f32 %v2680, %v2691
        %v2694 = vadd.f32 %v2681, %v2691
        %v2695 = vadd.f32 %v2682, %v2691
        %v2696 = vadd.f32 %v2683, %v2691
        %v2697 = vadd.f32 %v2684, %v2691
        %v2698 = vadd.f32 %v2685, %v2691
        %v2699 = vmax.f32 %v2693, 0.0
        %v2700 = vmax.f32 %v2694, 0.0
        %v2701 = vmax.f32 %v2695, 0.0
        %v2702 = vmax.f32 %v2696, 0.0
        %v2703 = vmax.f32 %v2697, 0.0
        %v2704 = vmax.f32 %v2698, 0.0
        %v2705 = vmin.f32 %v2699, 6.0
        %v2706 = vmin.f32 %v2700, 6.0
        %v2707 = vmin.f32 %v2701, 6.0
        %v2708 = vmin.f32 %v2702, 6.0
        %v2709 = vmin.f32 %v2703, 6.0
        %v2710 = vmin.f32 %v2704, 6.0
        %v2712 = vrot.slane %v2705, 1
        %v2714 = vrot.slane %v2705, 2
        %v2716 = vrot.slane %v2705, 3
        %v2719 = vrot.slane %v2706, 1
        %v2722 = vrot.slane %v2707, 2
        %v2724 = vrot.slane %v2707, 3
        %v2727 = vrot.slane %v2708, 1
        %v2729 = vrot.slane %v2708, 2
        %v2731 = vrot.slane %v2708, 3
        %v2734 = vrot.slane %v2709, 1
        %v2737 = vrot.slane %v2710, 2
        %v2739 = vrot.slane %v2710, 3
        %vm2741 = vcmask 1040384
        %v2742 = vsel %vm2741, %v2705, %v2712
        %v2743 = vsel %vm1826, %v2742, %v2714
        %v2744 = vsel %vm1754, %v2743, %v2716
        %v2745 = vsel %vm1611, %v2744, %v2706
        %v2746 = vsel %vm666, %v2745, %v2719
        %v2747 = vsel %vm667, %v2746, %v2722
        %v2748 = vsel %vm1326, %v2747, %v2724
        %v2749 = vsel %vm2741, %v2708, %v2727
        %v2750 = vsel %vm1826, %v2749, %v2729
        %v2751 = vsel %vm1754, %v2750, %v2731
        %v2752 = vsel %vm1611, %v2751, %v2709
        %v2753 = vsel %vm666, %v2752, %v2734
        %v2754 = vsel %vm667, %v2753, %v2737
        %v2755 = vsel %vm1326, %v2754, %v2739
        %v2756 = vpack.c.bf16 %v2755, %v2748
        %v2757 = vld [vmem:[%s11] sm:$0xf]
        %v2758 = vld [vmem:[%s11 + $0x4] sm:$0xf]
        %v2759 = vld [vmem:[%s11 + $0x8] sm:$0xf]
        %v2760 = vld [vmem:[%s11 + $0xc] sm:$0xf]
        %v2761 = vld [vmem:[%s11 + $0x10] sm:$0xf]
        %v2762 = vld [vmem:[%s11 + $0x14] sm:$0xf]
        %v2763 = vld [vmem:[%s11 + $0x18] sm:$0xf]
        %v2764 = vld [vmem:[%s11 + $0x1c] sm:$0xf]
        %v2765 = vld [vmem:[%s11 + $0x20] sm:$0xf]
        %v2766 = vld [vmem:[%s11 + $0x24] sm:$0xf]
        %v2767 = vld [vmem:[%s11 + $0x28] sm:$0xf]
        %v2768 = vld [vmem:[%s11 + $0x2c] sm:$0xf]
        %v2769 = vld [vmem:[%s12] sm:$0x1]
        %v2771 = vlaneseq
        %v2772 = vshrl.u32 %v2771, 7
        %v2773 = vsub.s32 0, %v2772
        %v2774 = vrot.slane %v2769, %v2773
        %v2788 = vunpack.c.l.b16 %v2757
        %v2789 = vunpack.c.l.b16 %v2758
        %v2790 = vunpack.c.l.b16 %v2759
        %v2791 = vunpack.c.l.b16 %v2760
        %v2792 = vunpack.c.l.b16 %v2761
        %v2793 = vunpack.c.l.b16 %v2762
        %v2794 = vunpack.c.l.b16 %v2763
        %v2795 = vunpack.c.l.b16 %v2764
        %v2796 = vunpack.c.l.b16 %v2765
        %v2797 = vunpack.c.l.b16 %v2766
        %v2798 = vunpack.c.l.b16 %v2767
        %v2799 = vunpack.c.l.b16 %v2768
        %v2800 = vpack.c.b16 %v2789, %v2788
        %v2801 = vpack.c.b16 %v2791, %v2790
        %v2802 = vpack.c.b16 %v2793, %v2792
        %v2803 = vpack.c.b16 %v2795, %v2794
        %v2804 = vpack.c.b16 %v2797, %v2796
        %v2805 = vpack.c.b16 %v2799, %v2798
        %vm2812 = vcmask 785408
        %v2814 = vsel %vm2812, %v2756, 0
        %2816 = vmatprep.subr.bf16.mxu0 0
        %2817 = vmatpush1.bf16.msra.mxu0 %v2800
        %2818 = vmatprep.subr.bf16.mxu0 0
        %2819 = vmatpush1.bf16.msra.mxu0 %v2801
        %2820 = vmatprep.subr.bf16.mxu0 0
        %2821 = vmatpush1.bf16.msra.mxu0 %v2802
        %2822 = vmatprep.subr.bf16.mxu0 0
        %2823 = vmatpush1.bf16.msra.mxu0 %v2803
        %2824 = vmatprep.subr.bf16.mxu0 0
        %2825 = vmatpush1.bf16.msra.mxu0 %v2804
        %2826 = vmatprep.subr.bf16.mxu0 0
        %2827 = vmatpush1.bf16.msra.mxu0 %v2805
        %2828 = vmatprep.subr.bf16.mxu0 0
        %2829 = vmatpush1.bf16.msra.mxu0 0
        %2830 = vmatprep.subr.bf16.mxu0 0
        %2831 = vmatpush1.bf16.msra.mxu0 0
        %2832 = vmatprep.subr.bf16.mxu0 0
        %2833 = vmatpush1.bf16.msra.mxu0 0
        %2834 = vmatprep.subr.bf16.mxu0 0
        %2835 = vmatpush1.bf16.msra.mxu0 0
        %2836 = vmatprep.subr.bf16.mxu0 0
        %2837 = vmatpush1.bf16.msra.mxu0 0
        %2838 = vmatprep.subr.bf16.mxu0 0
        %2839 = vmatpush1.bf16.msra.mxu0 0
        %2840 = vmatprep.subr.bf16.mxu0 0
        %2841 = vmatpush1.bf16.msra.mxu0 0
        %2842 = vmatprep.subr.bf16.mxu0 0
        %2843 = vmatpush1.bf16.msra.mxu0 0
        %2844 = vmatprep.subr.bf16.mxu0 0
        %2845 = vmatpush1.bf16.msra.mxu0 0
        %2846 = vmatprep.subr.bf16.mxu0 0
        %2847 = vmatpush1.bf16.msra.mxu0 0
        %2848 = vmatprep.mubr.bf16.mxu0 0
        %2849 = vmatmul.mubr.bf16.gmra.mrb[0].mxu0 %v2814
        %v2850 = vpop.f32.mrb[0].mxu0
        %v2851 = vadd.f32 %v2774, %v2850
        %v2852 = vpop.f32.mrb[0].mxu0
        %v2853 = vpop.f32.mrb[0].mxu0
        %v2854 = vadd.f32 %v2774, %v2853
        %v2855 = vpop.f32.mrb[0].mxu0
        %2856 = vdwg.mxu0
        %v2858 = vrot.slane %v2851, 1
        %v2860 = vrot.slane %v2851, 7
        %v2863 = vrot.slane %v2854, 5
        %v2865 = vrot.slane %v2854, 3
        %v2867 = vsel %vm1326, 0.0, %v2858
        %v2868 = vsel %vm1754, %v2858, 0.0
        %v2869 = vsel %vm666, %v2868, %v2860
        %v2870 = vsel %vm2741, %v2860, 0.0
        %v2871 = vsel %vm1754, %v2870, %v2863
        %v2872 = vsel %vm1326, %v2871, 0.0
        %v2873 = vsel %vm2741, 0.0, %v2865
        %v2874 = vsel %vm666, %v2873, 0.0
        %v2875 = vpack.c.bf16 %v2869, %v2867
        %v2876 = vpack.c.bf16 %v2874, %v2872
        %v2877 = vld [vmem:[%s13] sm:$0xff]
        %v2878 = vld [vmem:[%s13 + $0x8] sm:$0xff]
        %v2879 = vld [vmem:[%s13 + $0x10] sm:$0xff]
        %v2880 = vld [vmem:[%s14] sm:$0x3]
        %v2882 = vlaneseq
        %v2883 = vshrl.u32 %v2882, 7
        %v2884 = vsub.s32 0, %v2883
        %v2885 = vrot.slane %v2880, %v2884
        %v2886 = vlaneseq
        %v2887 = vshrl.u32 %v2886, 7
        %v2888 = vsub.s32 1, %v2887
        %v2889 = vrot.slane %v2880, %v2888
        %v2895 = vunpack.c.l.b16 %v2877
        %v2896 = vunpack.c.h.b16 %v2877
        %v2897 = vunpack.c.l.b16 %v2878
        %v2898 = vunpack.c.h.b16 %v2878
        %v2899 = vunpack.c.l.b16 %v2879
        %v2900 = vunpack.c.h.b16 %v2879
        %v2901 = vpack.c.b16 %v2897, %v2895
        %v2902 = vpack.c.b16 %v2898, %v2896
        %v2903 = vpack.c.b16 %v2899, %v2899
        %v2904 = vpack.c.b16 %v2900, %v2900
        %vm2907 = vcmask 195584
        %v2909 = vsel %vm2907, %v2875, 0
        %v2912 = vsel %vm2907, %v2876, 0
        %v2914 = vsel %vm2907, %v2070, 0
        %v2917 = vsel %vm1611, %v2903, 0
        %v2920 = vsel %vm1611, %v2904, 0
        %2922 = vmatprep.subr.bf16.mxu0 %v2902
        %2923 = vmatpush1.bf16.msra.mxu0 %v2901
        %2924 = vmatprep.subr.bf16.mxu0 %v2920
        %2925 = vmatpush1.bf16.msra.mxu0 %v2917
        %2926 = vmatprep.subr.bf16.mxu0 0
        %2927 = vmatpush1.bf16.msra.mxu0 0
        %2928 = vmatprep.subr.bf16.mxu0 0
        %2929 = vmatpush1.bf16.msra.mxu0 0
        %2930 = vmatprep.subr.bf16.mxu0 0
        %2931 = vmatpush1.bf16.msra.mxu0 0
        %2932 = vmatprep.subr.bf16.mxu0 0
        %2933 = vmatpush1.bf16.msra.mxu0 0
        %2934 = vmatprep.subr.bf16.mxu0 0
        %2935 = vmatpush1.bf16.msra.mxu0 0
        %2936 = vmatprep.subr.bf16.mxu0 0
        %2937 = vmatpush1.bf16.msra.mxu0 0
        %2938 = vmatprep.subr.bf16.mxu0 0
        %2939 = vmatpush1.bf16.msra.mxu0 0
        %2940 = vmatprep.subr.bf16.mxu0 0
        %2941 = vmatpush1.bf16.msra.mxu0 0
        %2942 = vmatprep.subr.bf16.mxu0 0
        %2943 = vmatpush1.bf16.msra.mxu0 0
        %2944 = vmatprep.subr.bf16.mxu0 0
        %2945 = vmatpush1.bf16.msra.mxu0 0
        %2946 = vmatprep.subr.bf16.mxu0 0
        %2947 = vmatpush1.bf16.msra.mxu0 0
        %2948 = vmatprep.subr.bf16.mxu0 0
        %2949 = vmatpush1.bf16.msra.mxu0 0
        %2950 = vmatprep.subr.bf16.mxu0 0
        %2951 = vmatpush1.bf16.msra.mxu0 0
        %2952 = vmatprep.subr.bf16.mxu0 0
        %2953 = vmatpush1.bf16.msra.mxu0 0
        %2954 = vmatprep.mubr.bf16.mxu0 0
        %2955 = vmatmul.mubr.bf16.gmra.mrb[0].mxu0 %v2909
        %v2956 = vpop.f32.mrb[0].mxu0
        %v2957 = vadd.f32 %v2885, %v2956
        %v2958 = vpop.f32.mrb[0].mxu0
        %v2959 = vadd.f32 %v2889, %v2958
        %v2960 = vpop.f32.mrb[0].mxu0
        %v2961 = vadd.f32 %v2885, %v2960
        %v2962 = vpop.f32.mrb[0].mxu0
        %v2963 = vadd.f32 %v2889, %v2962
        %2964 = vmatprep.mubr.bf16.mxu0 0
        %2965 = vmatmul.mubr.bf16.gmra.mrb[0].mxu0 %v2912
        %v2966 = vpop.f32.mrb[0].mxu0
        %v2967 = vadd.f32 %v2885, %v2966
        %v2968 = vpop.f32.mrb[0].mxu0
        %v2969 = vadd.f32 %v2889, %v2968
        %v2970 = vpop.f32.mrb[0].mxu0
        %v2971 = vadd.f32 %v2885, %v2970
        %v2972 = vpop.f32.mrb[0].mxu0
        %v2973 = vadd.f32 %v2889, %v2972
        %2974 = vmatprep.mubr.bf16.mxu0 0
        %2975 = vmatmul.mubr.bf16.gmra.mrb[0].mxu0 %v2914
        %v2976 = vpop.f32.mrb[0].mxu0
        %v2977 = vadd.f32 %v2885, %v2976
        %v2978 = vpop.f32.mrb[0].mxu0
        %v2979 = vadd.f32 %v2889, %v2978
        %v2980 = vpop.f32.mrb[0].mxu0
        %v2981 = vpop.f32.mrb[0].mxu0
        %2982 = vdwg.mxu0
        %v2983 = vmax.f32 %v2957, 0.0
        %v2984 = vmax.f32 %v2959, 0.0
        %v2985 = vmax.f32 %v2961, 0.0
        %v2986 = vmax.f32 %v2963, 0.0
        %v2987 = vmax.f32 %v2967, 0.0
        %v2988 = vmax.f32 %v2969, 0.0
        %v2989 = vmax.f32 %v2971, 0.0
        %v2990 = vmax.f32 %v2973, 0.0
        %v2991 = vmax.f32 %v2977, 0.0
        %v2992 = vmax.f32 %v2979, 0.0
        %v2993 = vmin.f32 %v2983, 6.0
        %v2994 = vmin.f32 %v2984, 6.0
        %v2995 = vmin.f32 %v2985, 6.0
        %v2996 = vmin.f32 %v2986, 6.0
        %v2997 = vmin.f32 %v2987, 6.0
        %v2998 = vmin.f32 %v2988, 6.0
        %v2999 = vmin.f32 %v2989, 6.0
        %v3000 = vmin.f32 %v2990, 6.0
        %v3001 = vmin.f32 %v2991, 6.0
        %v3002 = vmin.f32 %v2992, 6.0
        %vm3003 = vcmp.ge.s32.totalorder %v788, 7
        %vm3004 = vcmp.ge.s32.totalorder %v789, 7
        %vm3005 = vcmp.ge.s32.totalorder %v790, 7
        %vm3006 = vcmp.ge.s32.totalorder %v791, 7
        %vm3007 = vcmp.ge.s32.totalorder %v792, 7
        %vm3008 = vcmp.lt.s32.totalorder %v788, 11
        %vm3009 = vcmp.lt.s32.totalorder %v789, 11
        %vm3010 = vcmp.lt.s32.totalorder %v790, 11
        %vm3011 = vcmp.lt.s32.totalorder %v791, 11
        %vm3012 = vcmp.lt.s32.totalorder %v792, 11
        %vm3013 = vmand %vm3003, %vm3008
        %vm3014 = vmand %vm3004, %vm3009
        %vm3015 = vmand %vm3005, %vm3010
        %vm3016 = vmand %vm3006, %vm3011
        %vm3017 = vmand %vm3007, %vm3012
        %vm3018 = vmor %vm801, %vm3013
        %vm3019 = vmor %vm802, %vm3014
        %vm3020 = vmor %vm803, %vm3015
        %vm3021 = vmor %vm804, %vm3016
        %vm3022 = vmor %vm805, %vm3017
        %vm3023 = vcmp.ge.s32.totalorder %v788, 13
        %vm3024 = vcmp.ge.s32.totalorder %v789, 13
        %vm3025 = vcmp.ge.s32.totalorder %v790, 13
        %vm3026 = vcmp.ge.s32.totalorder %v791, 13
        %vm3027 = vcmp.ge.s32.totalorder %v792, 13
        %vm3028 = vcmp.lt.s32.totalorder %v788, 17
        %vm3029 = vcmp.lt.s32.totalorder %v789, 17
        %vm3030 = vcmp.lt.s32.totalorder %v790, 17
        %vm3031 = vcmp.lt.s32.totalorder %v791, 17
        %vm3032 = vcmp.lt.s32.totalorder %v792, 17
        %vm3033 = vmand %vm3023, %vm3028
        %vm3034 = vmand %vm3024, %vm3029
        %vm3035 = vmand %vm3025, %vm3030
        %vm3036 = vmand %vm3026, %vm3031
        %vm3037 = vmand %vm3027, %vm3032
        %vm3038 = vmor %vm3018, %vm3033
        %vm3039 = vmor %vm3019, %vm3034
        %vm3040 = vmor %vm3020, %vm3035
        %vm3041 = vmor %vm3021, %vm3036
        %vm3042 = vmor %vm3022, %vm3037
        %vm3043 = vcmp.ge.s32.totalorder %v788, 19
        %vm3044 = vcmp.ge.s32.totalorder %v789, 19
        %vm3045 = vcmp.ge.s32.totalorder %v790, 19
        %vm3046 = vcmp.ge.s32.totalorder %v791, 19
        %vm3047 = vcmp.ge.s32.totalorder %v792, 19
        %vm3048 = vcmp.lt.s32.totalorder %v788, 23
        %vm3049 = vcmp.lt.s32.totalorder %v789, 23
        %vm3050 = vcmp.lt.s32.totalorder %v790, 23
        %vm3051 = vcmp.lt.s32.totalorder %v791, 23
        %vm3052 = vcmp.lt.s32.totalorder %v792, 23
        %vm3053 = vmand %vm3043, %vm3048
        %vm3054 = vmand %vm3044, %vm3049
        %vm3055 = vmand %vm3045, %vm3050
        %vm3056 = vmand %vm3046, %vm3051
        %vm3057 = vmand %vm3047, %vm3052
        %vm3058 = vmor %vm3038, %vm3053
        %vm3059 = vmor %vm3039, %vm3054
        %vm3060 = vmor %vm3040, %vm3055
        %vm3061 = vmor %vm3041, %vm3056
        %vm3062 = vmor %vm3042, %vm3057
        %vm3063 = vcmp.ge.s32.totalorder %v788, 25
        %vm3064 = vcmp.ge.s32.totalorder %v789, 25
        %vm3065 = vcmp.ge.s32.totalorder %v790, 25
        %vm3066 = vcmp.ge.s32.totalorder %v791, 25
        %vm3067 = vcmp.ge.s32.totalorder %v792, 25
        %vm3068 = vmand %vm3063, %vm879
        %vm3069 = vmand %vm3064, %vm880
        %vm3070 = vmand %vm3065, %vm881
        %vm3071 = vmand %vm3066, %vm882
        %vm3072 = vmand %vm3067, %vm883
        %vm3073 = vmor %vm3058, %vm3068
        %vm3074 = vmor %vm3059, %vm3069
        %vm3075 = vmor %vm3060, %vm3070
        %vm3076 = vmor %vm3061, %vm3071
        %vm3077 = vmor %vm3062, %vm3072
        %v3078 = vsel %vm3073, 1, 0
        %v3079 = vsel %vm3074, 1, 0
        %v3080 = vsel %vm3075, 1, 0
        %v3081 = vsel %vm3076, 1, 0
        %v3082 = vsel %vm3077, 1, 0
        %vm3083 = vcmp.eq.s32.totalorder %v3078, 1
        %vm3084 = vcmp.eq.s32.totalorder %v3079, 1
        %vm3085 = vcmp.eq.s32.totalorder %v3080, 1
        %vm3086 = vcmp.eq.s32.totalorder %v3081, 1
        %vm3087 = vcmp.eq.s32.totalorder %v3082, 1
        %v3088 = vsel %vm3083, %v2993, 0.0
        %v3089 = vsel %vm3083, %v2994, 0.0
        %v3090 = vsel %vm3084, %v2995, 0.0
        %v3091 = vsel %vm3084, %v2996, 0.0
        %v3092 = vsel %vm3085, %v2997, 0.0
        %v3093 = vsel %vm3085, %v2998, 0.0
        %v3094 = vsel %vm3086, %v2999, 0.0
        %v3095 = vsel %vm3086, %v3000, 0.0
        %v3096 = vsel %vm3087, %v3001, 0.0
        %v3097 = vsel %vm3087, %v3002, 0.0
        %v3098 = vld [vmem:[%s15] sm:$0x3]
        %v3100 = vlaneseq
        %v3101 = vshrl.u32 %v3100, 7
        %v3102 = vsub.s32 0, %v3101
        %v3103 = vrot.slane %v3098, %v3102
        %v3104 = vlaneseq
        %v3105 = vshrl.u32 %v3104, 7
        %v3106 = vsub.s32 1, %v3105
        %v3107 = vrot.slane %v3098, %v3106
        %v3110 = vmul.f32 %v3088, %v3103
        %v3111 = vmul.f32 %v3089, %v3107
        %v3112 = vmul.f32 %v3090, %v3103
        %v3113 = vmul.f32 %v3091, %v3107
        %v3114 = vmul.f32 %v3092, %v3103
        %v3115 = vmul.f32 %v3093, %v3107
        %v3116 = vadd.f32 %v3110, 0.0
        %v3117 = vadd.f32 %v3111, 0.0
        %v3118 = vadd.f32 %v3112, 0.0
        %v3119 = vadd.f32 %v3113, 0.0
        %v3120 = vadd.f32 %v3114, 0.0
        %v3121 = vadd.f32 %v3115, 0.0
        %s3122 = scalar_lea.vmem %s15, 2
        %v3123 = vld [vmem:[%s3122] sm:$0x3]
        %v3125 = vlaneseq
        %v3126 = vshrl.u32 %v3125, 7
        %v3127 = vsub.s32 0, %v3126
        %v3128 = vrot.slane %v3123, %v3127
        %v3129 = vlaneseq
        %v3130 = vshrl.u32 %v3129, 7
        %v3131 = vsub.s32 1, %v3130
        %v3132 = vrot.slane %v3123, %v3131
        %v3135 = vmul.f32 %v3088, %v3128
        %v3136 = vmul.f32 %v3089, %v3132
        %v3137 = vmul.f32 %v3090, %v3128
        %v3138 = vmul.f32 %v3091, %v3132
        %v3139 = vmul.f32 %v3092, %v3128
        %v3140 = vmul.f32 %v3093, %v3132
        %v3141 = vmul.f32 %v3094, %v3128
        %v3142 = vmul.f32 %v3095, %v3132
        %v3151 = vrot.slane %v3135, 1
        %v3152 = vrot.slane %v3137, 1
        %v3153 = vsel %vm1326, %v3151, %v3152
        %v3154 = vrot.slane %v3136, 1
        %v3155 = vrot.slane %v3138, 1
        %v3156 = vsel %vm1326, %v3154, %v3155
        %v3157 = vrot.slane %v3139, 1
        %v3158 = vsel %vm1326, %v3152, %v3157
        %v3159 = vrot.slane %v3140, 1
        %v3160 = vsel %vm1326, %v3155, %v3159
        %v3161 = vrot.slane %v3141, 1
        %v3162 = vsel %vm1326, %v3157, %v3161
        %v3163 = vrot.slane %v3142, 1
        %v3164 = vsel %vm1326, %v3159, %v3163
        %v3171 = vadd.f32 %v3116, %v3153
        %v3172 = vadd.f32 %v3117, %v3156
        %v3173 = vadd.f32 %v3118, %v3158
        %v3174 = vadd.f32 %v3119, %v3160
        %v3175 = vadd.f32 %v3120, %v3162
        %v3176 = vadd.f32 %v3121, %v3164
        %s3177 = scalar_lea.vmem %s15, 4
        %v3178 = vld [vmem:[%s3177] sm:$0x3]
        %v3180 = vlaneseq
        %v3181 = vshrl.u32 %v3180, 7
        %v3182 = vsub.s32 0, %v3181
        %v3183 = vrot.slane %v3178, %v3182
        %v3184 = vlaneseq
        %v3185 = vshrl.u32 %v3184, 7
        %v3186 = vsub.s32 1, %v3185
        %v3187 = vrot.slane %v3178, %v3186
        %v3190 = vmul.f32 %v3088, %v3183
        %v3191 = vmul.f32 %v3089, %v3187
        %v3192 = vmul.f32 %v3090, %v3183
        %v3193 = vmul.f32 %v3091, %v3187
        %v3194 = vmul.f32 %v3092, %v3183
        %v3195 = vmul.f32 %v3093, %v3187
        %v3196 = vmul.f32 %v3094, %v3183
        %v3197 = vmul.f32 %v3095, %v3187
        %v3206 = vrot.slane %v3190, 2
        %v3207 = vrot.slane %v3192, 2
        %v3208 = vsel %vm667, %v3206, %v3207
        %v3209 = vrot.slane %v3191, 2
        %v3210 = vrot.slane %v3193, 2
        %v3211 = vsel %vm667, %v3209, %v3210
        %v3212 = vrot.slane %v3194, 2
        %v3213 = vsel %vm667, %v3207, %v3212
        %v3214 = vrot.slane %v3195, 2
        %v3215 = vsel %vm667, %v3210, %v3214
        %v3216 = vrot.slane %v3196, 2
        %v3217 = vsel %vm667, %v3212, %v3216
        %v3218 = vrot.slane %v3197, 2
        %v3219 = vsel %vm667, %v3214, %v3218
        %v3226 = vadd.f32 %v3171, %v3208
        %v3227 = vadd.f32 %v3172, %v3211
        %v3228 = vadd.f32 %v3173, %v3213
        %v3229 = vadd.f32 %v3174, %v3215
        %v3230 = vadd.f32 %v3175, %v3217
        %v3231 = vadd.f32 %v3176, %v3219
        %s3232 = scalar_lea.vmem %s15, 6
        %v3233 = vld [vmem:[%s3232] sm:$0x3]
        %v3235 = vlaneseq
        %v3236 = vshrl.u32 %v3235, 7
        %v3237 = vsub.s32 0, %v3236
        %v3238 = vrot.slane %v3233, %v3237
        %v3239 = vlaneseq
        %v3240 = vshrl.u32 %v3239, 7
        %v3241 = vsub.s32 1, %v3240
        %v3242 = vrot.slane %v3233, %v3241
        %v3245 = vmul.f32 %v3088, %v3238
        %v3246 = vmul.f32 %v3089, %v3242
        %v3247 = vmul.f32 %v3090, %v3238
        %v3248 = vmul.f32 %v3091, %v3242
        %v3249 = vmul.f32 %v3092, %v3238
        %v3250 = vmul.f32 %v3093, %v3242
        %v3251 = vmul.f32 %v3094, %v3238
        %v3252 = vmul.f32 %v3095, %v3242
        %v3261 = vrot.slane %v3245, 6
        %v3262 = vrot.slane %v3247, 6
        %v3263 = vsel %vm1826, %v3261, %v3262
        %v3264 = vrot.slane %v3246, 6
        %v3265 = vrot.slane %v3248, 6
        %v3266 = vsel %vm1826, %v3264, %v3265
        %v3267 = vrot.slane %v3249, 6
        %v3268 = vsel %vm1826, %v3262, %v3267
        %v3269 = vrot.slane %v3250, 6
        %v3270 = vsel %vm1826, %v3265, %v3269
        %v3271 = vrot.slane %v3251, 6
        %v3272 = vsel %vm1826, %v3267, %v3271
        %v3273 = vrot.slane %v3252, 6
        %v3274 = vsel %vm1826, %v3269, %v3273
        %v3281 = vadd.f32 %v3226, %v3263
        %v3282 = vadd.f32 %v3227, %v3266
        %v3283 = vadd.f32 %v3228, %v3268
        %v3284 = vadd.f32 %v3229, %v3270
        %v3285 = vadd.f32 %v3230, %v3272
        %v3286 = vadd.f32 %v3231, %v3274
        %s3287 = scalar_lea.vmem %s15, 8
        %v3288 = vld [vmem:[%s3287] sm:$0x3]
        %v3290 = vlaneseq
        %v3291 = vshrl.u32 %v3290, 7
        %v3292 = vsub.s32 0, %v3291
        %v3293 = vrot.slane %v3288, %v3292
        %v3294 = vlaneseq
        %v3295 = vshrl.u32 %v3294, 7
        %v3296 = vsub.s32 1, %v3295
        %v3297 = vrot.slane %v3288, %v3296
        %v3300 = vmul.f32 %v3088, %v3293
        %v3301 = vmul.f32 %v3089, %v3297
        %v3302 = vmul.f32 %v3090, %v3293
        %v3303 = vmul.f32 %v3091, %v3297
        %v3304 = vmul.f32 %v3092, %v3293
        %v3305 = vmul.f32 %v3093, %v3297
        %v3306 = vmul.f32 %v3094, %v3293
        %v3307 = vmul.f32 %v3095, %v3297
        %v3316 = vrot.slane %v3300, 7
        %v3317 = vrot.slane %v3302, 7
        %v3318 = vsel %vm2741, %v3316, %v3317
        %v3319 = vrot.slane %v3301, 7
        %v3320 = vrot.slane %v3303, 7
        %v3321 = vsel %vm2741, %v3319, %v3320
        %v3322 = vrot.slane %v3304, 7
        %v3323 = vsel %vm2741, %v3317, %v3322
        %v3324 = vrot.slane %v3305, 7
        %v3325 = vsel %vm2741, %v3320, %v3324
        %v3326 = vrot.slane %v3306, 7
        %v3327 = vsel %vm2741, %v3322, %v3326
        %v3328 = vrot.slane %v3307, 7
        %v3329 = vsel %vm2741, %v3324, %v3328
        %v3336 = vadd.f32 %v3281, %v3318
        %v3337 = vadd.f32 %v3282, %v3321
        %v3338 = vadd.f32 %v3283, %v3323
        %v3339 = vadd.f32 %v3284, %v3325
        %v3340 = vadd.f32 %v3285, %v3327
        %v3341 = vadd.f32 %v3286, %v3329
        %s3342 = scalar_lea.vmem %s15, 10
        %v3343 = vld [vmem:[%s3342] sm:$0x3]
        %v3345 = vlaneseq
        %v3346 = vshrl.u32 %v3345, 7
        %v3347 = vsub.s32 0, %v3346
        %v3348 = vrot.slane %v3343, %v3347
        %v3349 = vlaneseq
        %v3350 = vshrl.u32 %v3349, 7
        %v3351 = vsub.s32 1, %v3350
        %v3352 = vrot.slane %v3343, %v3351
        %v3355 = vmul.f32 %v3090, %v3348
        %v3356 = vmul.f32 %v3091, %v3352
        %v3357 = vmul.f32 %v3092, %v3348
        %v3358 = vmul.f32 %v3093, %v3352
        %v3359 = vmul.f32 %v3094, %v3348
        %v3360 = vmul.f32 %v3095, %v3352
        %v3361 = vadd.f32 %v3336, %v3355
        %v3362 = vadd.f32 %v3337, %v3356
        %v3363 = vadd.f32 %v3338, %v3357
        %v3364 = vadd.f32 %v3339, %v3358
        %v3365 = vadd.f32 %v3340, %v3359
        %v3366 = vadd.f32 %v3341, %v3360
        %s3367 = scalar_lea.vmem %s15, 12
        %v3368 = vld [vmem:[%s3367] sm:$0x3]
        %v3370 = vlaneseq
        %v3371 = vshrl.u32 %v3370, 7
        %v3372 = vsub.s32 0, %v3371
        %v3373 = vrot.slane %v3368, %v3372
        %v3374 = vlaneseq
        %v3375 = vshrl.u32 %v3374, 7
        %v3376 = vsub.s32 1, %v3375
        %v3377 = vrot.slane %v3368, %v3376
        %v3380 = vmul.f32 %v3090, %v3373
        %v3381 = vmul.f32 %v3091, %v3377
        %v3382 = vmul.f32 %v3092, %v3373
        %v3383 = vmul.f32 %v3093, %v3377
        %v3384 = vmul.f32 %v3094, %v3373
        %v3385 = vmul.f32 %v3095, %v3377
        %v3386 = vmul.f32 %v3096, %v3373
        %v3387 = vmul.f32 %v3097, %v3377
        %v3396 = vrot.slane %v3380, 4
        %v3397 = vrot.slane %v3382, 4
        %v3398 = vsel %vm1611, %v3396, %v3397
        %v3399 = vrot.slane %v3381, 4
        %v3400 = vrot.slane %v3383, 4
        %v3401 = vsel %vm1611, %v3399, %v3400
        %v3402 = vrot.slane %v3384, 4
        %v3403 = vsel %vm1611, %v3397, %v3402
        %v3404 = vrot.slane %v3385, 4
        %v3405 = vsel %vm1611, %v3400, %v3404
        %v3406 = vrot.slane %v3386, 4
        %v3407 = vsel %vm1611, %v3402, %v3406
        %v3408 = vrot.slane %v3387, 4
        %v3409 = vsel %vm1611, %v3404, %v3408
        %v3416 = vadd.f32 %v3361, %v3398
        %v3417 = vadd.f32 %v3362, %v3401
        %v3418 = vadd.f32 %v3363, %v3403
        %v3419 = vadd.f32 %v3364, %v3405
        %v3420 = vadd.f32 %v3365, %v3407
        %v3421 = vadd.f32 %v3366, %v3409
        %s3422 = scalar_lea.vmem %s15, 14
        %v3423 = vld [vmem:[%s3422] sm:$0x3]
        %v3425 = vlaneseq
        %v3426 = vshrl.u32 %v3425, 7
        %v3427 = vsub.s32 0, %v3426
        %v3428 = vrot.slane %v3423, %v3427
        %v3429 = vlaneseq
        %v3430 = vshrl.u32 %v3429, 7
        %v3431 = vsub.s32 1, %v3430
        %v3432 = vrot.slane %v3423, %v3431
        %v3435 = vmul.f32 %v3090, %v3428
        %v3436 = vmul.f32 %v3091, %v3432
        %v3437 = vmul.f32 %v3092, %v3428
        %v3438 = vmul.f32 %v3093, %v3432
        %v3439 = vmul.f32 %v3094, %v3428
        %v3440 = vmul.f32 %v3095, %v3432
        %v3441 = vmul.f32 %v3096, %v3428
        %v3442 = vmul.f32 %v3097, %v3432
        %v3451 = vrot.slane %v3435, 5
        %v3452 = vrot.slane %v3437, 5
        %v3453 = vsel %vm1754, %v3451, %v3452
        %v3454 = vrot.slane %v3436, 5
        %v3455 = vrot.slane %v3438, 5
        %v3456 = vsel %vm1754, %v3454, %v3455
        %v3457 = vrot.slane %v3439, 5
        %v3458 = vsel %vm1754, %v3452, %v3457
        %v3459 = vrot.slane %v3440, 5
        %v3460 = vsel %vm1754, %v3455, %v3459
        %v3461 = vrot.slane %v3441, 5
        %v3462 = vsel %vm1754, %v3457, %v3461
        %v3463 = vrot.slane %v3442, 5
        %v3464 = vsel %vm1754, %v3459, %v3463
        %v3471 = vadd.f32 %v3416, %v3453
        %v3472 = vadd.f32 %v3417, %v3456
        %v3473 = vadd.f32 %v3418, %v3458
        %v3474 = vadd.f32 %v3419, %v3460
        %v3475 = vadd.f32 %v3420, %v3462
        %v3476 = vadd.f32 %v3421, %v3464
        %s3477 = scalar_lea.vmem %s15, 16
        %v3478 = vld [vmem:[%s3477] sm:$0x3]
        %v3480 = vlaneseq
        %v3481 = vshrl.u32 %v3480, 7
        %v3482 = vsub.s32 0, %v3481
        %v3483 = vrot.slane %v3478, %v3482
        %v3484 = vlaneseq
        %v3485 = vshrl.u32 %v3484, 7
        %v3486 = vsub.s32 1, %v3485
        %v3487 = vrot.slane %v3478, %v3486
        %v3490 = vmul.f32 %v3090, %v3483
        %v3491 = vmul.f32 %v3091, %v3487
        %v3492 = vmul.f32 %v3092, %v3483
        %v3493 = vmul.f32 %v3093, %v3487
        %v3494 = vmul.f32 %v3094, %v3483
        %v3495 = vmul.f32 %v3095, %v3487
        %v3496 = vmul.f32 %v3096, %v3483
        %v3497 = vmul.f32 %v3097, %v3487
        %v3506 = vrot.slane %v3490, 6
        %v3507 = vrot.slane %v3492, 6
        %v3508 = vsel %vm1826, %v3506, %v3507
        %v3509 = vrot.slane %v3491, 6
        %v3510 = vrot.slane %v3493, 6
        %v3511 = vsel %vm1826, %v3509, %v3510
        %v3512 = vrot.slane %v3494, 6
        %v3513 = vsel %vm1826, %v3507, %v3512
        %v3514 = vrot.slane %v3495, 6
        %v3515 = vsel %vm1826, %v3510, %v3514
        %v3516 = vrot.slane %v3496, 6
        %v3517 = vsel %vm1826, %v3512, %v3516
        %v3518 = vrot.slane %v3497, 6
        %v3519 = vsel %vm1826, %v3514, %v3518
        %v3526 = vadd.f32 %v3471, %v3508
        %v3527 = vadd.f32 %v3472, %v3511
        %v3528 = vadd.f32 %v3473, %v3513
        %v3529 = vadd.f32 %v3474, %v3515
        %v3530 = vadd.f32 %v3475, %v3517
        %v3531 = vadd.f32 %v3476, %v3519
        %v3532 = vld [vmem:[%s16] sm:$0x3]
        %v3534 = vlaneseq
        %v3535 = vshrl.u32 %v3534, 7
        %v3536 = vsub.s32 0, %v3535
        %v3537 = vrot.slane %v3532, %v3536
        %v3538 = vlaneseq
        %v3539 = vshrl.u32 %v3538, 7
        %v3540 = vsub.s32 1, %v3539
        %v3541 = vrot.slane %v3532, %v3540
        %v3544 = vadd.f32 %v3526, %v3537
        %v3545 = vadd.f32 %v3527, %v3541
        %v3546 = vadd.f32 %v3528, %v3537
        %v3547 = vadd.f32 %v3529, %v3541
        %v3548 = vadd.f32 %v3530, %v3537
        %v3549 = vadd.f32 %v3531, %v3541
        %v3550 = vmax.f32 %v3544, 0.0
        %v3551 = vmax.f32 %v3545, 0.0
        %v3552 = vmax.f32 %v3546, 0.0
        %v3553 = vmax.f32 %v3547, 0.0
        %v3554 = vmax.f32 %v3548, 0.0
        %v3555 = vmax.f32 %v3549, 0.0
        %v3556 = vmin.f32 %v3550, 6.0
        %v3557 = vmin.f32 %v3551, 6.0
        %v3558 = vmin.f32 %v3552, 6.0
        %v3559 = vmin.f32 %v3553, 6.0
        %v3560 = vmin.f32 %v3554, 6.0
        %v3561 = vmin.f32 %v3555, 6.0
        %v3566 = vrot.slane %v3556, 2
        %v3567 = vrot.slane %v3558, 2
        %v3568 = vsel %vm667, %v3566, %v3567
        %v3569 = vrot.slane %v3557, 2
        %v3570 = vrot.slane %v3559, 2
        %v3571 = vsel %vm667, %v3569, %v3570
        %v3574 = vrot.slane %v3558, 4
        %v3575 = vrot.slane %v3559, 4
        %v3580 = vrot.slane %v3560, 6
        %v3581 = vrot.slane %v3561, 6
        %v3584 = vsel %vm1611, %v3556, %v3568
        %v3585 = vsel %vm1611, %v3557, %v3571
        %v3586 = vsel %vm1611, %v3574, %v3580
        %v3587 = vsel %vm1611, %v3575, %v3581
        %v3588 = vpack.c.bf16 %v3586, %v3584
        %v3589 = vpack.c.bf16 %v3587, %v3585
        %v3590 = vld [vmem:[%s17] sm:$0xf]
        %v3591 = vld [vmem:[%s17 + $0x4] sm:$0xf]
        %v3592 = vld [vmem:[%s17 + $0x8] sm:$0xf]
        %v3593 = vld [vmem:[%s17 + $0xc] sm:$0xf]
        %v3594 = vld [vmem:[%s17 + $0x10] sm:$0xf]
        %v3595 = vld [vmem:[%s17 + $0x14] sm:$0xf]
        %v3596 = vld [vmem:[%s17 + $0x18] sm:$0xf]
        %v3597 = vld [vmem:[%s17 + $0x1c] sm:$0xf]
        %v3598 = vld [vmem:[%s17 + $0x20] sm:$0xf]
        %v3599 = vld [vmem:[%s17 + $0x24] sm:$0xf]
        %v3600 = vld [vmem:[%s17 + $0x28] sm:$0xf]
        %v3601 = vld [vmem:[%s17 + $0x2c] sm:$0xf]
        %v3602 = vld [vmem:[%s17 + $0x30] sm:$0xf]
        %v3603 = vld [vmem:[%s17 + $0x34] sm:$0xf]
        %v3604 = vld [vmem:[%s17 + $0x38] sm:$0xf]
        %v3605 = vld [vmem:[%s17 + $0x3c] sm:$0xf]
        %v3606 = vld [vmem:[%s17 + $0x40] sm:$0xf]
        %v3607 = vld [vmem:[%s17 + $0x44] sm:$0xf]
        %v3608 = vld [vmem:[%s18] sm:$0x1]
        %v3610 = vlaneseq
        %v3611 = vshrl.u32 %v3610, 7
        %v3612 = vsub.s32 0, %v3611
        %v3613 = vrot.slane %v3608, %v3612
        %v3633 = vunpack.c.l.b16 %v3590
        %v3634 = vunpack.c.l.b16 %v3591
        %v3635 = vunpack.c.l.b16 %v3592
        %v3636 = vunpack.c.l.b16 %v3593
        %v3637 = vunpack.c.l.b16 %v3594
        %v3638 = vunpack.c.l.b16 %v3595
        %v3639 = vunpack.c.l.b16 %v3596
        %v3640 = vunpack.c.l.b16 %v3597
        %v3641 = vunpack.c.l.b16 %v3598
        %v3642 = vunpack.c.l.b16 %v3599
        %v3643 = vunpack.c.l.b16 %v3600
        %v3644 = vunpack.c.l.b16 %v3601
        %v3645 = vunpack.c.l.b16 %v3602
        %v3646 = vunpack.c.l.b16 %v3603
        %v3647 = vunpack.c.l.b16 %v3604
        %v3648 = vunpack.c.l.b16 %v3605
        %v3649 = vunpack.c.l.b16 %v3606
        %v3650 = vunpack.c.l.b16 %v3607
        %v3651 = vpack.c.b16 %v3634, %v3633
        %v3652 = vpack.c.b16 %v3636, %v3635
        %v3653 = vpack.c.b16 %v3638, %v3637
        %v3654 = vpack.c.b16 %v3640, %v3639
        %v3655 = vpack.c.b16 %v3642, %v3641
        %v3656 = vpack.c.b16 %v3644, %v3643
        %v3657 = vpack.c.b16 %v3646, %v3645
        %v3658 = vpack.c.b16 %v3648, %v3647
        %v3659 = vpack.c.b16 %v3650, %v3649
        %v3670 = vsel %vm2086, %v3589, 0
        %3672 = vmatprep.subr.bf16.mxu0 0
        %3673 = vmatpush1.bf16.msra.mxu0 %v3651
        %3674 = vmatprep.subr.bf16.mxu0 0
        %3675 = vmatpush1.bf16.msra.mxu0 %v3652
        %3676 = vmatprep.subr.bf16.mxu0 0
        %3677 = vmatpush1.bf16.msra.mxu0 %v3653
        %3678 = vmatprep.subr.bf16.mxu0 0
        %3679 = vmatpush1.bf16.msra.mxu0 %v3654
        %3680 = vmatprep.subr.bf16.mxu0 0
        %3681 = vmatpush1.bf16.msra.mxu0 %v3655
        %3682 = vmatprep.subr.bf16.mxu0 0
        %3683 = vmatpush1.bf16.msra.mxu0 %v3656
        %3684 = vmatprep.subr.bf16.mxu0 0
        %3685 = vmatpush1.bf16.msra.mxu0 %v3657
        %3686 = vmatprep.subr.bf16.mxu0 0
        %3687 = vmatpush1.bf16.msra.mxu0 %v3658
        %3688 = vmatprep.subr.bf16.mxu0 0
        %3689 = vmatpush1.bf16.msra.mxu0 %v3659
        %3690 = vmatprep.subr.bf16.mxu0 0
        %3691 = vmatpush1.bf16.msra.mxu0 0
        %3692 = vmatprep.subr.bf16.mxu0 0
        %3693 = vmatpush1.bf16.msra.mxu0 0
        %3694 = vmatprep.subr.bf16.mxu0 0
        %3695 = vmatpush1.bf16.msra.mxu0 0
        %3696 = vmatprep.subr.bf16.mxu0 0
        %3697 = vmatpush1.bf16.msra.mxu0 0
        %3698 = vmatprep.subr.bf16.mxu0 0
        %3699 = vmatpush1.bf16.msra.mxu0 0
        %3700 = vmatprep.subr.bf16.mxu0 0
        %3701 = vmatpush1.bf16.msra.mxu0 0
        %3702 = vmatprep.subr.bf16.mxu0 0
        %3703 = vmatpush1.bf16.msra.mxu0 0
        %3704 = vmatprep.mubr.bf16.mxu0 %v3670
        %3705 = vmatmul.mubr.bf16.gmra.mrb[0].mxu0 %v3588
        %v3706 = vpop.f32.mrb[0].mxu0
        %v3707 = vadd.f32 %v3613, %v3706
        %v3708 = vpop.f32.mrb[0].mxu0
        %v3709 = vpop.f32.mrb[0].mxu0
        %v3710 = vadd.f32 %v3613, %v3709
        %v3711 = vpop.f32.mrb[0].mxu0
        %3712 = vdwg.mxu0
        %v3713 = vadd.f32 %v3707, %v2851
        %v3714 = vadd.f32 %v3710, %v2854
        %3715 = vst.msk [vmem:[%s595] sm:$0xff] %vm2907, %v3713
        %3716 = vst.msk [vmem:[%s595 + $0x8] sm:$0xff] %vm2907, %v3714
        %s3717 = sand.u32 %s445, 1
        %s3718 = scalar_lea.sflag [#allocation3], %s3717
        %s3719 = sand.u32 %s445, 1
        %s3720 = smul.addr %s3719, 16
        %s3721 = scalar_lea.vmem [#allocation2], %s3720
        // Predicated region
        $region97: #{mobilenetv2_client_forward.1} parent=95 // pred_check
          %p3722 = pneg %p455
        $region98: #{mobilenetv2_client_forward.1} parent=95 // pred_check_branch
          %3724 = sbr.rel (%p3722) target = $region100
        $region99: #{mobilenetv2_client_forward.1} parent=95 // pred_region
          %s3726 = ssub.s32 256, 256
          %3727 = vsyncadd %s3718, %s3726
          %s3728 = smul.addr %s33, 2
          %s3729 = smul.addr %s3728, 128
          %s3730 = scalar_lea.hbm %s19, %s3729
          %s3731 = sshll.u32 %s3721, 4
          %s3732 = int_to_ptr.vmem [resolvable:$true] %s3731
          %3737 = dma.vmem_to_hbm [thread:$0]  %s3732, 256, %s3730, %s3718, 128, 128, 8
        $region100: #{mobilenetv2_client_forward.1} parent=95 // pred_fallthru
          _
      $region96: #{mobilenetv2_client_forward.1} parent=5 // pred_fallthru
        _
      %p3738 = scmp.le.s32.totalorder 2, %s28
      // Predicated region
      $region101: #{mobilenetv2_client_forward.1} parent=5 // pred_check
        %p3739 = pneg %p3738
      $region102: #{mobilenetv2_client_forward.1} parent=5 // pred_check_branch
        %3741 = sbr.rel (%p3739) target = $region104
      $region103: #{mobilenetv2_client_forward.1} parent=5 // pred_region
        %s3742 = ssub.s32 %s28, 2
        // Predicated region
        $region105: #{mobilenetv2_client_forward.1} parent=103 // pred_check
          %p3743 = pneg %p461
        $region106: #{mobilenetv2_client_forward.1} parent=103 // pred_check_branch
          %3745 = sbr.rel (%p3743) target = $region108
        $region107: #{mobilenetv2_client_forward.1} parent=103 // pred_region
          %s3746 = sand.u32 %s446, 1
          %s3747 = scalar_lea.sflag [#allocation3], %s3746
          %s3748 = sand.u32 %s446, 1
          %s3749 = smul.addr %s3748, 16
          %s3750 = scalar_lea.vmem [#allocation2], %s3749
          %3751 = dma.done %s3747, 256
        $region108: #{mobilenetv2_client_forward.1} parent=103 // pred_fallthru
          _
      $region104: #{mobilenetv2_client_forward.1} parent=5 // pred_fallthru
        _
    $region6: #{mobilenetv2_client_forward.1} parent=1 // loop_footer
      %s32 = sadd.s32 1, %s28
    $region7: #{mobilenetv2_client_forward.1} parent=1 // loop_footer_branch
      %27 = sbr.rel target = $region3
    $region8: #{mobilenetv2_client_forward.1} parent=1 // loop_exit
      _
    %3752 = vsyncpa [#allocation3], 1
    %s3753 = scalar_lea.sflag [#allocation3], 1
    %3754 = vsyncpa %s3753, 1

</llo_original>
